<compile_context>
chip_gen: v7x
topology: tpu7x:2x2x1
jax: 0.10.0
libtpu: 0.0.40
codegen_flags: <defaults>
</compile_context>

<pallas_src>
import jax
import jax.numpy as jnp
from jax.experimental import pallas as pl
from jax.experimental.pallas import tpu as pltpu

# ----------------------- hyper-parameters (small synthetic config) -----------
BS, CH, S = 2, 4, 64                 # batch, EEG electrodes (in_channel), samples
KERN_LEN = 16                        # block1 temporal kernel length
F1, D, F2 = 4, 2, 8                  # temporal filters, depth multiplier, pointwise filters
DF1 = D * F1
NB_CLASSES, LATENT = 3, 16

PAD_W1 = KERN_LEN // 2               # Conv2d padding=(1, KERN_LEN//2)
HP1 = CH + 2                         # 6  : H after conv1 (kernel height 1, pad 1)
W1 = S + 2 * PAD_W1 - KERN_LEN + 1   # 65 : W after conv1
H2 = HP1 - CH + 1                    # 3  : H after depthwise (CH,1) conv
WPOOL1 = W1 // 4                     # 16 : AvgPool2d((1,4)), floor
W1U = WPOOL1 * 4                     # 64 : conv1 output columns actually used

SEP_K = 16
SEP_PAD = SEP_K // 2                 # SeparableConv2d scalar padding 8 (H and W)
H3 = H2 + 2 * SEP_PAD                # 19 : depthwise kernel height is 1
W3 = WPOOL1 + 2 * SEP_PAD - SEP_K + 1  # 17
WPOOL2 = W3 // 8                     # 2  : AvgPool2d((1,8)), floor
SEPW = WPOOL2 * 8                    # 16 : block2 conv output columns actually used
FEAT = F2 * H3 * WPOOL2              # 304 flattened features
# TODO(synk): original module hard-codes latent_fc in_features=2090; here it is
# derived (FEAT=304) from the chosen small synthetic shapes.

N1 = H2 * DF1 * W1U                  # 1536 : block1 pre-activation lanes, (h, j, w) order
N2 = H2 * F2 * SEPW                  # 384  : block2 pre-activation lanes, (h, f, w) order
OUT_ROWS, OUT_LANES = 8, 128         # single dense output tile

VMEM = pl.BlockSpec(memory_space=pltpu.MemorySpace.VMEM)


def _elu(x):
    return jnp.where(x > 0, x, jnp.exp(jnp.minimum(x, 0.0)) - 1.0)


# ------------------------------ fused kernel ---------------------------------
def eegnet_kernel(x_ref, wa_ref, c1_ref, k2_ref, b3_ref, wl_ref, bl_ref,
                  wf_ref, bf_ref, out_ref):
    # x_ref : (BS, CH*S)        wa_ref: (CH*S, N1)     c1_ref: (1, N1)
    # k2_ref: (N1, N2)          b3_ref: (1, N2)
    # wl_ref: (N2, LATENT)      bl_ref: (1, LATENT)
    # wf_ref: (LATENT, NB_CLASSES)   bf_ref: (1, NB_CLASSES)
    # out_ref: (8, 128) dense tile; latent rows 0:BS, label rows BS:2*BS

    # ---- block1: conv1 + BN1 + depthwise(CH,1) + BN2 folded -> one K=CH*S dot
    pre1 = jnp.dot(x_ref[...], wa_ref[...],
                   preferred_element_type=jnp.float32) + c1_ref[...]     # (BS, N1)
    e1 = _elu(pre1)                                                      # one ELU pass

    # ---- block2: AvgPool(1,4) + sep depthwise(1,16) + pointwise + BN3 folded
    pre2 = jnp.dot(e1, k2_ref[...],
                   preferred_element_type=jnp.float32) + b3_ref[...]     # (BS, N2)
    e3 = _elu(pre2)

    # ---- AvgPool(1,8) + flatten + latent_fc folded (constant rows in bl_ref)
    lat = jnp.dot(e3, wl_ref[...],
                  preferred_element_type=jnp.float32) + bl_ref[...]      # (BS, LATENT)
    lat = jnp.where(lat > 0, lat, 0.01 * lat)                            # LeakyReLU(0.01)

    # ---- final_fc + Softmax ---------------------------------------------------
    logits = jnp.dot(lat, wf_ref[...],
                     preferred_element_type=jnp.float32) + bf_ref[...]   # (BS, NB_CLASSES)
    m = jnp.max(logits, axis=-1, keepdims=True)
    e = jnp.exp(logits - m)
    probs = e / jnp.sum(e, axis=-1, keepdims=True)                       # exact divide (tolerance)

    # ---- one dense (8,128) output tile ---------------------------------------
    out_ref[...] = jnp.zeros((OUT_ROWS, OUT_LANES), jnp.float32)
    out_ref[0:BS, 0:LATENT] = lat
    out_ref[BS:2 * BS, 0:NB_CLASSES] = probs


# --------------------------------- wrapper -----------------------------------
def eegnet_forward(x, fp):
    # TODO(synk): nn.Dropout2d / nn.Dropout are identity at inference; training-
    # mode dropout is not implemented.
    x2 = x.reshape(BS, CH * S)
    out = pl.pallas_call(
        eegnet_kernel,
        out_shape=jax.ShapeDtypeStruct((OUT_ROWS, OUT_LANES), jnp.float32),
        in_specs=[VMEM] * 9,
        out_specs=VMEM,
    )(x2, fp["wa"], fp["c1row"], fp["k2"], fp["b3row"], fp["wl3"],
      fp["bl_eff"], fp["wf"], fp["bf"])
    latent = out[:BS, :LATENT]
    label = out[BS:2 * BS, :NB_CLASSES]
    return latent, label


# ------------------------ host-side weight folding ---------------------------
def fold_params(p):
    """Fold BatchNorms, zero-padding, pooling and all conv structure into four dense matmuls."""
    w1, s1, b1 = p["w1"], p["s1"], p["b1"]
    wdw1, s2, b2 = p["wdw1"], p["s2"], p["b2"]
    wdw2, wpw = p["wdw2"], p["wpw"]
    s3, b3 = p["s3"], p["b3"]
    wl, bl = p["w_lat"], p["b_lat"]
    f_of_j = jnp.arange(DF1) // D

    # --- stage 1: conv1 Toeplitz (BN1 scale) x depthwise (CH,1) (BN2 scale) ---
    t = jnp.arange(S)[:, None] - jnp.arange(W1U)[None, :] + PAD_W1        # (S, W1U)
    tap = jnp.where((t >= 0) & (t < KERN_LEN),
                    w1[:, jnp.clip(t, 0, KERN_LEN - 1)], 0.0)             # (F1, S, W1U)
    tapj = (tap * s1[:, None, None])[f_of_j]                              # (DF1, S, W1U)
    r = jnp.arange(CH)[None, :] + 1 - jnp.arange(H2)[:, None]             # (H2, CH)
    bmat = jnp.where((r >= 0) & (r < CH),
                     wdw1[:, jnp.clip(r, 0, CH - 1)], 0.0) * s2[:, None, None]  # (DF1, H2, CH)
    # WA[(c,s), (h,j,w)] = bmat[j,h,c] * tapj[j,s,w]
    wa = jnp.einsum("jhc,jsw->cshjw", bmat, tapj).reshape(CH * S, N1)
    # BN1 shift pushed through the depthwise conv + BN2 shift, broadcast over (h, w)
    const2 = s2 * b1[f_of_j] * jnp.sum(wdw1, axis=1) + b2                 # (DF1,)
    c1row = jnp.broadcast_to(const2[None, :, None], (H2, DF1, W1U)).reshape(1, N1)

    # --- stage 2: AvgPool(1,4) + sep. depthwise (1,16) + pointwise + BN3 scale,
    #              block-diagonal over the H2 real rows -----------------------
    pool1 = ((jnp.arange(W1U)[:, None] // 4)
             == jnp.arange(WPOOL1)[None, :]).astype(jnp.float32) / 4.0    # (W1U, WPOOL1)
    tt = jnp.arange(WPOOL1)[:, None] - jnp.arange(SEPW)[None, :] + SEP_PAD
    dwm = jnp.where((tt >= 0) & (tt < SEP_K),
                    wdw2[:, jnp.clip(tt, 0, SEP_K - 1)], 0.0)             # (DF1, WPOOL1, SEPW)
    k2h = jnp.einsum("f,fc,cgw->cgfw", s3, wpw, dwm).reshape(DF1 * WPOOL1, F2 * SEPW)
    k2h = jnp.kron(jnp.eye(DF1, dtype=jnp.float32), pool1) @ k2h          # (DF1*W1U, F2*SEPW)
    k2 = jnp.kron(jnp.eye(H2, dtype=jnp.float32), k2h)                    # (N1, N2)
    b3row = jnp.tile(jnp.repeat(b3, SEPW), H2)[None, :]                   # (1, N2)

    # --- stage 3: AvgPool(1,8) + flatten + latent_fc --------------------------
    # block2 zero H-padding rows are the constant elu(b3[f]) -> fold into the bias
    rows = jnp.arange(FEAT)
    f_of = rows // (H3 * WPOOL2)
    h_of = (rows % (H3 * WPOOL2)) // WPOOL2
    is_real = (h_of >= SEP_PAD) & (h_of < SEP_PAD + H2)
    bl_eff = (bl + jnp.where(is_real, 0.0, _elu(b3)[f_of]) @ wl)[None, :]  # (1, LATENT)
    # real rows: gather latent_fc rows in (h, f, w3) order, fold the /8 pooling
    h_idx = jnp.arange(H2)[:, None, None]
    f_idx = jnp.arange(F2)[None, :, None]
    w_idx = jnp.arange(SEPW)[None, None, :]
    feat_idx = (f_idx * (H3 * WPOOL2) + (h_idx + SEP_PAD) * WPOOL2 + w_idx // 8)  # (H2, F2, SEPW)
    wl3 = wl[feat_idx.reshape(-1)] / 8.0                                  # (N2, LATENT)

    return {"wa": wa, "c1row": c1row, "k2": k2, "b3row": b3row,
            "wl3": wl3, "bl_eff": bl_eff, "wf": p["w_fin"], "bf": p["b_fin"][None, :]}


# ------------------------ plain-JAX reference (module spec) ------------------
def reference_forward(x, p):
    xpad = jnp.pad(x, ((0, 0), (1, 1), (PAD_W1, PAD_W1)))                 # (BS,6,80)
    c1 = jnp.stack([sum(xpad[:, :, t:t + W1] * p["w1"][f, t] for t in range(KERN_LEN))
                    for f in range(F1)], axis=1)                          # (BS,F1,6,65)
    y1 = c1 * p["s1"][None, :, None, None] + p["b1"][None, :, None, None]
    c2 = jnp.stack([sum(y1[:, j // D, r:r + H2, :] * p["wdw1"][j, r] for r in range(CH))
                    for j in range(DF1)], axis=1)                         # (BS,DF1,3,65)
    e2 = _elu(c2 * p["s2"][None, :, None, None] + p["b2"][None, :, None, None])
    p1 = e2[..., :W1U].reshape(BS, DF1, H2, WPOOL1, 4).mean(-1)           # AvgPool (1,4)

    h1p = jnp.pad(p1, ((0, 0), (0, 0), (SEP_PAD, SEP_PAD), (SEP_PAD, SEP_PAD)))
    dw = jnp.stack([sum(h1p[:, c, :, t:t + W3] * p["wdw2"][c, t] for t in range(SEP_K))
                    for c in range(DF1)], axis=1)                         # (BS,DF1,19,17)
    pw = jnp.einsum("fc,bchw->bfhw", p["wpw"], dw)
    e3 = _elu(pw * p["s3"][None, :, None, None] + p["b3"][None, :, None, None])
    p2 = e3[..., :SEPW].reshape(BS, F2, H3, WPOOL2, 8).mean(-1)           # AvgPool (1,8)

    flat = p2.reshape(BS, FEAT)
    lat = flat @ p["w_lat"] + p["b_lat"]
    lat = jnp.where(lat > 0, lat, 0.01 * lat)
    logits = lat @ p["w_fin"] + p["b_fin"]
    return lat, jax.nn.softmax(logits, axis=-1)


# ----------------------------- parameter init --------------------------------
def init_params(key):
    ks = jax.random.split(key, 12)

    def bn(k, c):
        k1, k2_, k3, k4 = jax.random.split(k, 4)
        gamma = 1.0 + 0.1 * jax.random.normal(k1, (c,), jnp.float32)
        beta = 0.1 * jax.random.normal(k2_, (c,), jnp.float32)
        mean = 0.1 * jax.random.normal(k3, (c,), jnp.float32)
        var = 1.0 + 0.2 * jax.random.uniform(k4, (c,), jnp.float32)
        scale = gamma / jnp.sqrt(var + 1e-5)                              # eval-mode BN folded
        return scale, beta - mean * scale

    p = {}
    p["w1"] = jax.random.normal(ks[0], (F1, KERN_LEN), jnp.float32) / KERN_LEN ** 0.5
    p["s1"], p["b1"] = bn(ks[1], F1)
    # ConstraintConv2d / ConstraintLinear weight_max_lim only renormalizes
    # weights during training; forward is a plain (grouped) conv / linear.
    p["wdw1"] = jax.random.normal(ks[2], (DF1, CH), jnp.float32) / CH ** 0.5
    p["s2"], p["b2"] = bn(ks[3], DF1)
    p["wdw2"] = jax.random.normal(ks[4], (DF1, SEP_K), jnp.float32) / SEP_K ** 0.5
    p["wpw"] = jax.random.normal(ks[5], (F2, DF1), jnp.float32) / DF1 ** 0.5
    p["s3"], p["b3"] = bn(ks[6], F2)
    p["w_lat"] = jax.random.normal(ks[7], (FEAT, LATENT), jnp.float32) / FEAT ** 0.5
    p["b_lat"] = 0.1 * jax.random.normal(ks[8], (LATENT,), jnp.float32)
    p["w_fin"] = jax.random.normal(ks[9], (LATENT, NB_CLASSES), jnp.float32) / LATENT ** 0.5
    p["b_fin"] = 0.1 * jax.random.normal(ks[10], (NB_CLASSES,), jnp.float32)
    return p


if __name__ == "__main__":
    key = jax.random.PRNGKey(0)
    pk, xk = jax.random.split(key)
    params = init_params(pk)
    x = jax.random.normal(xk, (BS, CH, S), jnp.float32)   # (batch, electrodes, samples)

    folded = fold_params(params)                          # one-time host-side folding
    latent, label = jax.jit(eegnet_forward)(x, folded)
    jax.block_until_ready((latent, label))

    # numerics check against a straightforward JAX transcription of the module
    ref_lat, ref_lab = reference_forward(x, params)
    assert latent.shape == (BS, LATENT) and label.shape == (BS, NB_CLASSES)
    assert jnp.allclose(latent, ref_lat, atol=5e-4, rtol=5e-4), \
        float(jnp.max(jnp.abs(latent - ref_lat)))
    assert jnp.allclose(label, ref_lab, atol=5e-4, rtol=5e-4)
    print("KERNEL_OK")
</pallas_src>

<mosaic_0001>
module attributes {stable_mosaic.version = 11 : i64} {
  func.func @eegnet_kernel(%arg0: memref<2x256xf32, #tpu.memory_space<vmem>>, %arg1: memref<256x1536xf32, #tpu.memory_space<vmem>>, %arg2: memref<1x1536xf32, #tpu.memory_space<vmem>>, %arg3: memref<1536x384xf32, #tpu.memory_space<vmem>>, %arg4: memref<1x384xf32, #tpu.memory_space<vmem>>, %arg5: memref<384x16xf32, #tpu.memory_space<vmem>>, %arg6: memref<1x16xf32, #tpu.memory_space<vmem>>, %arg7: memref<16x3xf32, #tpu.memory_space<vmem>>, %arg8: memref<1x3xf32, #tpu.memory_space<vmem>>, %arg9: memref<8x128xf32, #tpu.memory_space<vmem>>) attributes {dimension_semantics = [], scalar_prefetch = 0 : i64, scratch_operands = 0 : i64, tpu.core_type = #tpu.core_type<tc>} {
    %c0 = arith.constant 0 : index
    %c0_0 = arith.constant 0 : index
    %0 = vector.load %arg0[%c0, %c0_0] : memref<2x256xf32, #tpu.memory_space<vmem>>, vector<2x256xf32>
    %c0_1 = arith.constant 0 : index
    %c0_2 = arith.constant 0 : index
    %1 = vector.load %arg1[%c0_1, %c0_2] : memref<256x1536xf32, #tpu.memory_space<vmem>>, vector<256x1536xf32>
    %cst = arith.constant dense<0.000000e+00> : vector<2x1536xf32>
    %2 = tpu.matmul %0, %1, %cst {dimension_numbers = #tpu.dot_dimension_numbers<[1], [0], [0], [1], [0, 0, 1, 1], [], []>} : vector<2x256xf32>, vector<256x1536xf32>, vector<2x1536xf32> -> vector<2x1536xf32>
    %c0_3 = arith.constant 0 : index
    %c0_4 = arith.constant 0 : index
    %3 = vector.load %arg2[%c0_3, %c0_4] : memref<1x1536xf32, #tpu.memory_space<vmem>>, vector<1x1536xf32>
    %4 = vector.broadcast %3 : vector<1x1536xf32> to vector<2x1536xf32>
    %5 = arith.addf %2, %4 : vector<2x1536xf32>
    %cst_5 = arith.constant 0.000000e+00 : f32
    %6 = vector.broadcast %cst_5 : f32 to vector<2x1536xf32>
    %7 = arith.cmpf ogt, %5, %6 : vector<2x1536xf32>
    %cst_6 = arith.constant 0.000000e+00 : f32
    %8 = vector.broadcast %cst_6 : f32 to vector<2x1536xf32>
    %9 = arith.minimumf %5, %8 : vector<2x1536xf32>
    %10 = math.exp %9 : vector<2x1536xf32>
    %cst_7 = arith.constant 1.000000e+00 : f32
    %11 = vector.broadcast %cst_7 : f32 to vector<2x1536xf32>
    %12 = arith.subf %10, %11 : vector<2x1536xf32>
    %13 = arith.select %7, %5, %12 : vector<2x1536xi1>, vector<2x1536xf32>
    %c0_8 = arith.constant 0 : index
    %c0_9 = arith.constant 0 : index
    %14 = vector.load %arg3[%c0_8, %c0_9] : memref<1536x384xf32, #tpu.memory_space<vmem>>, vector<1536x384xf32>
    %cst_10 = arith.constant dense<0.000000e+00> : vector<2x384xf32>
    %15 = tpu.matmul %13, %14, %cst_10 {dimension_numbers = #tpu.dot_dimension_numbers<[1], [0], [0], [1], [0, 0, 1, 1], [], []>} : vector<2x1536xf32>, vector<1536x384xf32>, vector<2x384xf32> -> vector<2x384xf32>
    %c0_11 = arith.constant 0 : index
    %c0_12 = arith.constant 0 : index
    %16 = vector.load %arg4[%c0_11, %c0_12] : memref<1x384xf32, #tpu.memory_space<vmem>>, vector<1x384xf32>
    %17 = vector.broadcast %16 : vector<1x384xf32> to vector<2x384xf32>
    %18 = arith.addf %15, %17 : vector<2x384xf32>
    %cst_13 = arith.constant 0.000000e+00 : f32
    %19 = vector.broadcast %cst_13 : f32 to vector<2x384xf32>
    %20 = arith.cmpf ogt, %18, %19 : vector<2x384xf32>
    %cst_14 = arith.constant 0.000000e+00 : f32
    %21 = vector.broadcast %cst_14 : f32 to vector<2x384xf32>
    %22 = arith.minimumf %18, %21 : vector<2x384xf32>
    %23 = math.exp %22 : vector<2x384xf32>
    %cst_15 = arith.constant 1.000000e+00 : f32
    %24 = vector.broadcast %cst_15 : f32 to vector<2x384xf32>
    %25 = arith.subf %23, %24 : vector<2x384xf32>
    %26 = arith.select %20, %18, %25 : vector<2x384xi1>, vector<2x384xf32>
    %c0_16 = arith.constant 0 : index
    %c0_17 = arith.constant 0 : index
    %27 = vector.load %arg5[%c0_16, %c0_17] : memref<384x16xf32, #tpu.memory_space<vmem>>, vector<384x16xf32>
    %cst_18 = arith.constant dense<0.000000e+00> : vector<2x16xf32>
    %28 = tpu.matmul %26, %27, %cst_18 {dimension_numbers = #tpu.dot_dimension_numbers<[1], [0], [0], [1], [0, 0, 1, 1], [], []>} : vector<2x384xf32>, vector<384x16xf32>, vector<2x16xf32> -> vector<2x16xf32>
    %c0_19 = arith.constant 0 : index
    %c0_20 = arith.constant 0 : index
    %29 = vector.load %arg6[%c0_19, %c0_20] : memref<1x16xf32, #tpu.memory_space<vmem>>, vector<1x16xf32>
    %30 = vector.broadcast %29 : vector<1x16xf32> to vector<2x16xf32>
    %31 = arith.addf %28, %30 : vector<2x16xf32>
    %cst_21 = arith.constant 0.000000e+00 : f32
    %32 = vector.broadcast %cst_21 : f32 to vector<2x16xf32>
    %33 = arith.cmpf ogt, %31, %32 : vector<2x16xf32>
    %cst_22 = arith.constant 0.00999999977 : f32
    %34 = vector.broadcast %cst_22 : f32 to vector<2x16xf32>
    %35 = arith.mulf %34, %31 : vector<2x16xf32>
    %36 = arith.select %33, %31, %35 : vector<2x16xi1>, vector<2x16xf32>
    %c0_23 = arith.constant 0 : index
    %c0_24 = arith.constant 0 : index
    %37 = vector.load %arg7[%c0_23, %c0_24] : memref<16x3xf32, #tpu.memory_space<vmem>>, vector<16x3xf32>
    %cst_25 = arith.constant dense<0.000000e+00> : vector<2x3xf32>
    %38 = tpu.matmul %36, %37, %cst_25 {dimension_numbers = #tpu.dot_dimension_numbers<[1], [0], [0], [1], [0, 0, 1, 1], [], []>} : vector<2x16xf32>, vector<16x3xf32>, vector<2x3xf32> -> vector<2x3xf32>
    %c0_26 = arith.constant 0 : index
    %c0_27 = arith.constant 0 : index
    %39 = vector.load %arg8[%c0_26, %c0_27] : memref<1x3xf32, #tpu.memory_space<vmem>>, vector<1x3xf32>
    %40 = vector.broadcast %39 : vector<1x3xf32> to vector<2x3xf32>
    %41 = arith.addf %38, %40 : vector<2x3xf32>
    %cst_28 = arith.constant dense<0xFF800000> : vector<2xf32>
    %42 = vector.multi_reduction <maximumf>, %41, %cst_28 [1] : vector<2x3xf32> to vector<2xf32>
    %43 = vector.shape_cast %42 : vector<2xf32> to vector<2x1xf32>
    %44 = vector.broadcast %43 : vector<2x1xf32> to vector<2x3xf32>
    %45 = arith.subf %41, %44 : vector<2x3xf32>
    %46 = math.exp %45 : vector<2x3xf32>
    %cst_29 = arith.constant dense<0.000000e+00> : vector<2xf32>
    %47 = vector.multi_reduction <add>, %46, %cst_29 [1] : vector<2x3xf32> to vector<2xf32>
    %48 = vector.shape_cast %47 : vector<2xf32> to vector<2x1xf32>
    %49 = vector.broadcast %48 : vector<2x1xf32> to vector<2x3xf32>
    %50 = arith.divf %46, %49 : vector<2x3xf32>
    %cst_30 = arith.constant 0.000000e+00 : f32
    %51 = vector.broadcast %cst_30 : f32 to vector<8x128xf32>
    %c0_31 = arith.constant 0 : index
    %c0_32 = arith.constant 0 : index
    %52 = vector.load %arg9[%c0_31, %c0_32] : memref<8x128xf32, #tpu.memory_space<vmem>>, vector<8x128xf32>
    tpu.vector_store %arg9[%c0_31, %c0_32], %51 {strides = array<i32>} : memref<8x128xf32, #tpu.memory_space<vmem>>, vector<8x128xf32>,
    %c0_33 = arith.constant 0 : index
    %c0_34 = arith.constant 0 : index
    %53 = vector.load %arg9[%c0_33, %c0_34] : memref<8x128xf32, #tpu.memory_space<vmem>>, vector<2x16xf32>
    tpu.vector_store %arg9[%c0_33, %c0_34], %36 {strides = array<i32>} : memref<8x128xf32, #tpu.memory_space<vmem>>, vector<2x16xf32>,
    %c2 = arith.constant 2 : index
    %c0_35 = arith.constant 0 : index
    %54 = vector.load %arg9[%c2, %c0_35] : memref<8x128xf32, #tpu.memory_space<vmem>>, vector<2x3xf32>
    tpu.vector_store %arg9[%c2, %c0_35], %50 {strides = array<i32>} : memref<8x128xf32, #tpu.memory_space<vmem>>, vector<2x3xf32>,
    return
  }
}

</mosaic_0001>

<llo_original>
// kernel: eegnet_forward.1
$region0: #{eegnet_forward.1}
  #allocation0 [shape = 'u32[]', space=smem, size = 0x4, offset = 0x4, fixed_abs, tag = 'smem constant byte address 0x4 - core index']
  #allocation1 [shape = 'u32[144,128]{1,0:T(1,128)}', space=vmem, size = 0x12000, scoped, tag = 'internal scratch']
  %s0 = inlined_call_operand.vmem [shape: f32[2,256], index: 0, kind: input, shape index: {}]
  %s1 = inlined_call_operand.hbm [shape: f32[256,1536], index: 1, kind: input, shape index: {}]
  %s2 = inlined_call_operand.hbm [shape: f32[1,1536], index: 2, kind: input, shape index: {}]
  %s3 = inlined_call_operand.hbm [shape: f32[1536,384], index: 3, kind: input, shape index: {}]
  %s4 = inlined_call_operand.hbm [shape: f32[1,384], index: 4, kind: input, shape index: {}]
  %s5 = inlined_call_operand.vmem [shape: f32[384,16], index: 5, kind: input, shape index: {}]
  %s6 = inlined_call_operand.hbm [shape: f32[1,16], index: 6, kind: input, shape index: {}]
  %s7 = inlined_call_operand.vmem [shape: f32[16,3], index: 7, kind: input, shape index: {}]
  %s8 = inlined_call_operand.hbm [shape: f32[1,3], index: 8, kind: input, shape index: {}]
  %s9 = inlined_call_operand.vmem [shape: f32[8,128], index: 9, kind: output, shape index: {}]
  %s10 = sld [smem:[#allocation0]]
  $region70: #{eegnet_forward.1} parent=0
    _
  %s12 = ssub.s32 1, %s10
  %s13 = scalar_select 0, %s12, %s10
  $region1: #{eegnet_forward.1} parent=0
    #allocation2 [shape = 'u8[1572864]{0}', space=vmem, size = 0x180000, scoped, tag = 'input window, operand 1, single buffered']
    #allocation3 [shape = 's32[1]{0}', space=sflag, size = 0x4, scoped, tag = 'scoped memory for eegnet_forward.1']
    #allocation4 [shape = 'u8[6144]{0}', space=vmem, size = 0x1800, scoped, tag = 'input window, operand 2, single buffered']
    #allocation5 [shape = 's32[1]{0}', space=sflag, size = 0x4, scoped, tag = 'scoped memory for eegnet_forward.1']
    #allocation6 [shape = 'u8[2359296]{0}', space=vmem, size = 0x240000, scoped, tag = 'input window, operand 3, single buffered']
    #allocation7 [shape = 'u8[1536]{0}', space=vmem, size = 0x800, scoped, tag = 'input window, operand 4, single buffered']
    #allocation8 [shape = 's32[1]{0}', space=sflag, size = 0x4, scoped, tag = 'scoped memory for eegnet_forward.1']
    #allocation9 [shape = 'u8[512]{0}', space=vmem, size = 0x400, scoped, tag = 'input window, operand 6, single buffered']
    #allocation10 [shape = 'u8[512]{0}', space=vmem, size = 0x400, scoped, tag = 'input window, operand 8, single buffered']
    #allocation11 [shape = 's32[1]{0}', space=sflag, size = 0x4, scoped, tag = 'scoped memory for eegnet_forward.1']
    %14 = vsyncpa [#allocation3], 0
    %15 = vsyncpa [#allocation5], 0
    %16 = vsyncpa [#allocation8], 0
    %17 = vsyncpa [#allocation11], 0
    // Predicated region
    $region2: #{eegnet_forward.1} parent=1 // pred_check
      _
    $region3: #{eegnet_forward.1} parent=1 // pred_check_branch
      %19 = sbr.rel (0) target = $region5
    $region4: #{eegnet_forward.1} parent=1 // pred_region
      _
    $region5: #{eegnet_forward.1} parent=1 // pred_fallthru
      _
    // Predicated region
    $region6: #{eegnet_forward.1} parent=1 // pred_check
      _
    $region7: #{eegnet_forward.1} parent=1 // pred_check_branch
      %21 = sbr.rel (0) target = $region9
    $region8: #{eegnet_forward.1} parent=1 // pred_region
      %s23 = ssub.s32 49152, 49152
      %24 = vsyncadd [#allocation3], %s23
      %s25 = sshll.u32 [#allocation2], 4
      %s26 = int_to_ptr.vmem [resolvable:$true] %s25
      %31 = dma.hbm_to_vmem [thread:$0]  %s1, 49152, %s26, [#allocation3], 1536, 1536, 96
    $region9: #{eegnet_forward.1} parent=1 // pred_fallthru
      _
    // Predicated region
    $region10: #{eegnet_forward.1} parent=1 // pred_check
      _
    $region11: #{eegnet_forward.1} parent=1 // pred_check_branch
      %33 = sbr.rel (0) target = $region13
    $region12: #{eegnet_forward.1} parent=1 // pred_region
      %s35 = ssub.s32 192, 192
      %36 = vsyncadd [#allocation5], %s35
      %s38 = sshll.u32 [#allocation4], 4
      %s39 = int_to_ptr.vmem [resolvable:$true] %s38
      %41 = dma.hbm_to_vmem [thread:$0]  %s2, 192, %s39, [#allocation5]
    $region13: #{eegnet_forward.1} parent=1 // pred_fallthru
      _
    // Predicated region
    $region14: #{eegnet_forward.1} parent=1 // pred_check
      _
    $region15: #{eegnet_forward.1} parent=1 // pred_check_branch
      %43 = sbr.rel (0) target = $region17
    $region16: #{eegnet_forward.1} parent=1 // pred_region
      %s45 = ssub.s32 73728, 73728
      %46 = vsyncadd [#allocation5], %s45
      %s47 = sshll.u32 [#allocation6], 4
      %s48 = int_to_ptr.vmem [resolvable:$true] %s47
      %53 = dma.hbm_to_vmem [thread:$0]  %s3, 73728, %s48, [#allocation5], 384, 384, 24
    $region17: #{eegnet_forward.1} parent=1 // pred_fallthru
      _
    // Predicated region
    $region18: #{eegnet_forward.1} parent=1 // pred_check
      _
    $region19: #{eegnet_forward.1} parent=1 // pred_check_branch
      %55 = sbr.rel (0) target = $region21
    $region20: #{eegnet_forward.1} parent=1 // pred_region
      %s57 = ssub.s32 48, 48
      %58 = vsyncadd [#allocation8], %s57
      %s60 = sshll.u32 [#allocation7], 4
      %s61 = int_to_ptr.vmem [resolvable:$true] %s60
      %63 = dma.hbm_to_vmem [thread:$0]  %s4, 48, %s61, [#allocation8]
    $region21: #{eegnet_forward.1} parent=1 // pred_fallthru
      _
    // Predicated region
    $region22: #{eegnet_forward.1} parent=1 // pred_check
      _
    $region23: #{eegnet_forward.1} parent=1 // pred_check_branch
      %65 = sbr.rel (0) target = $region25
    $region24: #{eegnet_forward.1} parent=1 // pred_region
      _
    $region25: #{eegnet_forward.1} parent=1 // pred_fallthru
      _
    // Predicated region
    $region26: #{eegnet_forward.1} parent=1 // pred_check
      _
    $region27: #{eegnet_forward.1} parent=1 // pred_check_branch
      %67 = sbr.rel (0) target = $region29
    $region28: #{eegnet_forward.1} parent=1 // pred_region
      %s69 = ssub.s32 16, 16
      %70 = vsyncadd [#allocation8], %s69
      %s72 = sshll.u32 [#allocation9], 4
      %s73 = int_to_ptr.vmem [resolvable:$true] %s72
      %75 = dma.hbm_to_vmem [thread:$0]  %s6, 16, %s73, [#allocation8]
    $region29: #{eegnet_forward.1} parent=1 // pred_fallthru
      _
    // Predicated region
    $region30: #{eegnet_forward.1} parent=1 // pred_check
      _
    $region31: #{eegnet_forward.1} parent=1 // pred_check_branch
      %77 = sbr.rel (0) target = $region33
    $region32: #{eegnet_forward.1} parent=1 // pred_region
      _
    $region33: #{eegnet_forward.1} parent=1 // pred_fallthru
      _
    // Predicated region
    $region34: #{eegnet_forward.1} parent=1 // pred_check
      _
    $region35: #{eegnet_forward.1} parent=1 // pred_check_branch
      %79 = sbr.rel (0) target = $region37
    $region36: #{eegnet_forward.1} parent=1 // pred_region
      %s81 = ssub.s32 16, 16
      %82 = vsyncadd [#allocation11], %s81
      %s84 = sshll.u32 [#allocation10], 4
      %s85 = int_to_ptr.vmem [resolvable:$true] %s84
      %87 = dma.hbm_to_vmem [thread:$0]  %s8, 16, %s85, [#allocation11]
    $region37: #{eegnet_forward.1} parent=1 // pred_fallthru
      _
    // Predicated region
    $region38: #{eegnet_forward.1} parent=1 // pred_check
      _
    $region39: #{eegnet_forward.1} parent=1 // pred_check_branch
      %89 = sbr.rel (0) target = $region41
    $region40: #{eegnet_forward.1} parent=1 // pred_region
      %90 = dma.done [#allocation3], 49152
    $region41: #{eegnet_forward.1} parent=1 // pred_fallthru
      _
    // Predicated region
    $region42: #{eegnet_forward.1} parent=1 // pred_check
      _
    $region43: #{eegnet_forward.1} parent=1 // pred_check_branch
      %92 = sbr.rel (0) target = $region45
    $region44: #{eegnet_forward.1} parent=1 // pred_region
      %93 = dma.done [#allocation5], 192
    $region45: #{eegnet_forward.1} parent=1 // pred_fallthru
      _
    // Predicated region
    $region46: #{eegnet_forward.1} parent=1 // pred_check
      _
    $region47: #{eegnet_forward.1} parent=1 // pred_check_branch
      %95 = sbr.rel (0) target = $region49
    $region48: #{eegnet_forward.1} parent=1 // pred_region
      %96 = dma.done [#allocation5], 73728
    $region49: #{eegnet_forward.1} parent=1 // pred_fallthru
      _
    // Predicated region
    $region50: #{eegnet_forward.1} parent=1 // pred_check
      _
    $region51: #{eegnet_forward.1} parent=1 // pred_check_branch
      %98 = sbr.rel (0) target = $region53
    $region52: #{eegnet_forward.1} parent=1 // pred_region
      %99 = dma.done [#allocation8], 48
    $region53: #{eegnet_forward.1} parent=1 // pred_fallthru
      _
    // Predicated region
    $region54: #{eegnet_forward.1} parent=1 // pred_check
      _
    $region55: #{eegnet_forward.1} parent=1 // pred_check_branch
      %101 = sbr.rel (0) target = $region57
    $region56: #{eegnet_forward.1} parent=1 // pred_region
      %102 = dma.done [#allocation8], 16
    $region57: #{eegnet_forward.1} parent=1 // pred_fallthru
      _
    // Predicated region
    $region58: #{eegnet_forward.1} parent=1 // pred_check
      _
    $region59: #{eegnet_forward.1} parent=1 // pred_check_branch
      %104 = sbr.rel (0) target = $region61
    $region60: #{eegnet_forward.1} parent=1 // pred_region
      %105 = dma.done [#allocation11], 16
    $region61: #{eegnet_forward.1} parent=1 // pred_fallthru
      _
    %v106 = vld [vmem:[%s0] sm:$0xf]
    %v107 = vld [vmem:[#allocation2] sm:$0xff]
    %v108 = vld [vmem:[#allocation2 + $0x8] sm:$0xff]
    %v109 = vld [vmem:[#allocation2 + $0x10] sm:$0xff]
    %v110 = vld [vmem:[#allocation2 + $0x18] sm:$0xff]
    %v111 = vld [vmem:[#allocation2 + $0x20] sm:$0xff]
    %v112 = vld [vmem:[#allocation2 + $0x28] sm:$0xff]
    %v113 = vld [vmem:[#allocation2 + $0x30] sm:$0xff]
    %v114 = vld [vmem:[#allocation2 + $0x38] sm:$0xff]
    %v115 = vld [vmem:[#allocation2 + $0x40] sm:$0xff]
    %v116 = vld [vmem:[#allocation2 + $0x48] sm:$0xff]
    %v117 = vld [vmem:[#allocation2 + $0x50] sm:$0xff]
    %v118 = vld [vmem:[#allocation2 + $0x58] sm:$0xff]
    %v119 = vld [vmem:[#allocation2 + $0x60] sm:$0xff]
    %v120 = vld [vmem:[#allocation2 + $0x68] sm:$0xff]
    %v121 = vld [vmem:[#allocation2 + $0x70] sm:$0xff]
    %v122 = vld [vmem:[#allocation2 + $0x78] sm:$0xff]
    %v123 = vld [vmem:[#allocation2 + $0x80] sm:$0xff]
    %v124 = vld [vmem:[#allocation2 + $0x88] sm:$0xff]
    %v125 = vld [vmem:[#allocation2 + $0x90] sm:$0xff]
    %v126 = vld [vmem:[#allocation2 + $0x98] sm:$0xff]
    %v127 = vld [vmem:[#allocation2 + $0xa0] sm:$0xff]
    %v128 = vld [vmem:[#allocation2 + $0xa8] sm:$0xff]
    %v129 = vld [vmem:[#allocation2 + $0xb0] sm:$0xff]
    %v130 = vld [vmem:[#allocation2 + $0xb8] sm:$0xff]
    %v131 = vld [vmem:[#allocation2 + $0xc0] sm:$0xff]
    %v132 = vld [vmem:[#allocation2 + $0xc8] sm:$0xff]
    %v133 = vld [vmem:[#allocation2 + $0xd0] sm:$0xff]
    %v134 = vld [vmem:[#allocation2 + $0xd8] sm:$0xff]
    %v135 = vld [vmem:[#allocation2 + $0xe0] sm:$0xff]
    %v136 = vld [vmem:[#allocation2 + $0xe8] sm:$0xff]
    %v137 = vld [vmem:[#allocation2 + $0xf0] sm:$0xff]
    %v138 = vld [vmem:[#allocation2 + $0xf8] sm:$0xff]
    %v139 = vld [vmem:[#allocation2 + $0x100] sm:$0xff]
    %v140 = vld [vmem:[#allocation2 + $0x108] sm:$0xff]
    %v141 = vld [vmem:[#allocation2 + $0x110] sm:$0xff]
    %v142 = vld [vmem:[#allocation2 + $0x118] sm:$0xff]
    %v143 = vld [vmem:[#allocation2 + $0x120] sm:$0xff]
    %v144 = vld [vmem:[#allocation2 + $0x128] sm:$0xff]
    %v145 = vld [vmem:[#allocation2 + $0x130] sm:$0xff]
    %v146 = vld [vmem:[#allocation2 + $0x138] sm:$0xff]
    %v147 = vld [vmem:[#allocation2 + $0x140] sm:$0xff]
    %v148 = vld [vmem:[#allocation2 + $0x148] sm:$0xff]
    %v149 = vld [vmem:[#allocation2 + $0x150] sm:$0xff]
    %v150 = vld [vmem:[#allocation2 + $0x158] sm:$0xff]
    %v151 = vld [vmem:[#allocation2 + $0x160] sm:$0xff]
    %v152 = vld [vmem:[#allocation2 + $0x168] sm:$0xff]
    %v153 = vld [vmem:[#allocation2 + $0x170] sm:$0xff]
    %v154 = vld [vmem:[#allocation2 + $0x178] sm:$0xff]
    %v155 = vld [vmem:[#allocation2 + $0x180] sm:$0xff]
    %v156 = vld [vmem:[#allocation2 + $0x188] sm:$0xff]
    %v157 = vld [vmem:[#allocation2 + $0x190] sm:$0xff]
    %v158 = vld [vmem:[#allocation2 + $0x198] sm:$0xff]
    %v159 = vld [vmem:[#allocation2 + $0x1a0] sm:$0xff]
    %v160 = vld [vmem:[#allocation2 + $0x1a8] sm:$0xff]
    %v161 = vld [vmem:[#allocation2 + $0x1b0] sm:$0xff]
    %v162 = vld [vmem:[#allocation2 + $0x1b8] sm:$0xff]
    %v163 = vld [vmem:[#allocation2 + $0x1c0] sm:$0xff]
    %v164 = vld [vmem:[#allocation2 + $0x1c8] sm:$0xff]
    %v165 = vld [vmem:[#allocation2 + $0x1d0] sm:$0xff]
    %v166 = vld [vmem:[#allocation2 + $0x1d8] sm:$0xff]
    %v167 = vld [vmem:[#allocation2 + $0x1e0] sm:$0xff]
    %v168 = vld [vmem:[#allocation2 + $0x1e8] sm:$0xff]
    %v169 = vld [vmem:[#allocation2 + $0x1f0] sm:$0xff]
    %v170 = vld [vmem:[#allocation2 + $0x1f8] sm:$0xff]
    %v171 = vld [vmem:[#allocation2 + $0x200] sm:$0xff]
    %v172 = vld [vmem:[#allocation2 + $0x208] sm:$0xff]
    %v173 = vld [vmem:[#allocation2 + $0x210] sm:$0xff]
    %v174 = vld [vmem:[#allocation2 + $0x218] sm:$0xff]
    %v175 = vld [vmem:[#allocation2 + $0x220] sm:$0xff]
    %v176 = vld [vmem:[#allocation2 + $0x228] sm:$0xff]
    %v177 = vld [vmem:[#allocation2 + $0x230] sm:$0xff]
    %v178 = vld [vmem:[#allocation2 + $0x238] sm:$0xff]
    %v179 = vld [vmem:[#allocation2 + $0x240] sm:$0xff]
    %v180 = vld [vmem:[#allocation2 + $0x248] sm:$0xff]
    %v181 = vld [vmem:[#allocation2 + $0x250] sm:$0xff]
    %v182 = vld [vmem:[#allocation2 + $0x258] sm:$0xff]
    %v183 = vld [vmem:[#allocation2 + $0x260] sm:$0xff]
    %v184 = vld [vmem:[#allocation2 + $0x268] sm:$0xff]
    %v185 = vld [vmem:[#allocation2 + $0x270] sm:$0xff]
    %v186 = vld [vmem:[#allocation2 + $0x278] sm:$0xff]
    %v187 = vld [vmem:[#allocation2 + $0x280] sm:$0xff]
    %v188 = vld [vmem:[#allocation2 + $0x288] sm:$0xff]
    %v189 = vld [vmem:[#allocation2 + $0x290] sm:$0xff]
    %v190 = vld [vmem:[#allocation2 + $0x298] sm:$0xff]
    %v191 = vld [vmem:[#allocation2 + $0x2a0] sm:$0xff]
    %v192 = vld [vmem:[#allocation2 + $0x2a8] sm:$0xff]
    %v193 = vld [vmem:[#allocation2 + $0x2b0] sm:$0xff]
    %v194 = vld [vmem:[#allocation2 + $0x2b8] sm:$0xff]
    %v195 = vld [vmem:[#allocation2 + $0x2c0] sm:$0xff]
    %v196 = vld [vmem:[#allocation2 + $0x2c8] sm:$0xff]
    %v197 = vld [vmem:[#allocation2 + $0x2d0] sm:$0xff]
    %v198 = vld [vmem:[#allocation2 + $0x2d8] sm:$0xff]
    %v199 = vld [vmem:[#allocation2 + $0x2e0] sm:$0xff]
    %v200 = vld [vmem:[#allocation2 + $0x2e8] sm:$0xff]
    %v201 = vld [vmem:[#allocation2 + $0x2f0] sm:$0xff]
    %v202 = vld [vmem:[#allocation2 + $0x2f8] sm:$0xff]
    %v203 = vld [vmem:[#allocation2 + $0x300] sm:$0xff]
    %v204 = vld [vmem:[#allocation2 + $0x308] sm:$0xff]
    %v205 = vld [vmem:[#allocation2 + $0x310] sm:$0xff]
    %v206 = vld [vmem:[#allocation2 + $0x318] sm:$0xff]
    %v207 = vld [vmem:[#allocation2 + $0x320] sm:$0xff]
    %v208 = vld [vmem:[#allocation2 + $0x328] sm:$0xff]
    %v209 = vld [vmem:[#allocation2 + $0x330] sm:$0xff]
    %v210 = vld [vmem:[#allocation2 + $0x338] sm:$0xff]
    %v211 = vld [vmem:[#allocation2 + $0x340] sm:$0xff]
    %v212 = vld [vmem:[#allocation2 + $0x348] sm:$0xff]
    %v213 = vld [vmem:[#allocation2 + $0x350] sm:$0xff]
    %v214 = vld [vmem:[#allocation2 + $0x358] sm:$0xff]
    %v215 = vld [vmem:[#allocation2 + $0x360] sm:$0xff]
    %v216 = vld [vmem:[#allocation2 + $0x368] sm:$0xff]
    %v217 = vld [vmem:[#allocation2 + $0x370] sm:$0xff]
    %v218 = vld [vmem:[#allocation2 + $0x378] sm:$0xff]
    %v219 = vld [vmem:[#allocation2 + $0x380] sm:$0xff]
    %v220 = vld [vmem:[#allocation2 + $0x388] sm:$0xff]
    %v221 = vld [vmem:[#allocation2 + $0x390] sm:$0xff]
    %v222 = vld [vmem:[#allocation2 + $0x398] sm:$0xff]
    %v223 = vld [vmem:[#allocation2 + $0x3a0] sm:$0xff]
    %v224 = vld [vmem:[#allocation2 + $0x3a8] sm:$0xff]
    %v225 = vld [vmem:[#allocation2 + $0x3b0] sm:$0xff]
    %v226 = vld [vmem:[#allocation2 + $0x3b8] sm:$0xff]
    %v227 = vld [vmem:[#allocation2 + $0x3c0] sm:$0xff]
    %v228 = vld [vmem:[#allocation2 + $0x3c8] sm:$0xff]
    %v229 = vld [vmem:[#allocation2 + $0x3d0] sm:$0xff]
    %v230 = vld [vmem:[#allocation2 + $0x3d8] sm:$0xff]
    %v231 = vld [vmem:[#allocation2 + $0x3e0] sm:$0xff]
    %v232 = vld [vmem:[#allocation2 + $0x3e8] sm:$0xff]
    %v233 = vld [vmem:[#allocation2 + $0x3f0] sm:$0xff]
    %v234 = vld [vmem:[#allocation2 + $0x3f8] sm:$0xff]
    %v235 = vld [vmem:[#allocation2 + $0x400] sm:$0xff]
    %v236 = vld [vmem:[#allocation2 + $0x408] sm:$0xff]
    %v237 = vld [vmem:[#allocation2 + $0x410] sm:$0xff]
    %v238 = vld [vmem:[#allocation2 + $0x418] sm:$0xff]
    %v239 = vld [vmem:[#allocation2 + $0x420] sm:$0xff]
    %v240 = vld [vmem:[#allocation2 + $0x428] sm:$0xff]
    %v241 = vld [vmem:[#allocation2 + $0x430] sm:$0xff]
    %v242 = vld [vmem:[#allocation2 + $0x438] sm:$0xff]
    %v243 = vld [vmem:[#allocation2 + $0x440] sm:$0xff]
    %v244 = vld [vmem:[#allocation2 + $0x448] sm:$0xff]
    %v245 = vld [vmem:[#allocation2 + $0x450] sm:$0xff]
    %v246 = vld [vmem:[#allocation2 + $0x458] sm:$0xff]
    %v247 = vld [vmem:[#allocation2 + $0x460] sm:$0xff]
    %v248 = vld [vmem:[#allocation2 + $0x468] sm:$0xff]
    %v249 = vld [vmem:[#allocation2 + $0x470] sm:$0xff]
    %v250 = vld [vmem:[#allocation2 + $0x478] sm:$0xff]
    %v251 = vld [vmem:[#allocation2 + $0x480] sm:$0xff]
    %v252 = vld [vmem:[#allocation2 + $0x488] sm:$0xff]
    %v253 = vld [vmem:[#allocation2 + $0x490] sm:$0xff]
    %v254 = vld [vmem:[#allocation2 + $0x498] sm:$0xff]
    %v255 = vld [vmem:[#allocation2 + $0x4a0] sm:$0xff]
    %v256 = vld [vmem:[#allocation2 + $0x4a8] sm:$0xff]
    %v257 = vld [vmem:[#allocation2 + $0x4b0] sm:$0xff]
    %v258 = vld [vmem:[#allocation2 + $0x4b8] sm:$0xff]
    %v259 = vld [vmem:[#allocation2 + $0x4c0] sm:$0xff]
    %v260 = vld [vmem:[#allocation2 + $0x4c8] sm:$0xff]
    %v261 = vld [vmem:[#allocation2 + $0x4d0] sm:$0xff]
    %v262 = vld [vmem:[#allocation2 + $0x4d8] sm:$0xff]
    %v263 = vld [vmem:[#allocation2 + $0x4e0] sm:$0xff]
    %v264 = vld [vmem:[#allocation2 + $0x4e8] sm:$0xff]
    %v265 = vld [vmem:[#allocation2 + $0x4f0] sm:$0xff]
    %v266 = vld [vmem:[#allocation2 + $0x4f8] sm:$0xff]
    %v267 = vld [vmem:[#allocation2 + $0x500] sm:$0xff]
    %v268 = vld [vmem:[#allocation2 + $0x508] sm:$0xff]
    %v269 = vld [vmem:[#allocation2 + $0x510] sm:$0xff]
    %v270 = vld [vmem:[#allocation2 + $0x518] sm:$0xff]
    %v271 = vld [vmem:[#allocation2 + $0x520] sm:$0xff]
    %v272 = vld [vmem:[#allocation2 + $0x528] sm:$0xff]
    %v273 = vld [vmem:[#allocation2 + $0x530] sm:$0xff]
    %v274 = vld [vmem:[#allocation2 + $0x538] sm:$0xff]
    %v275 = vld [vmem:[#allocation2 + $0x540] sm:$0xff]
    %v276 = vld [vmem:[#allocation2 + $0x548] sm:$0xff]
    %v277 = vld [vmem:[#allocation2 + $0x550] sm:$0xff]
    %v278 = vld [vmem:[#allocation2 + $0x558] sm:$0xff]
    %v279 = vld [vmem:[#allocation2 + $0x560] sm:$0xff]
    %v280 = vld [vmem:[#allocation2 + $0x568] sm:$0xff]
    %v281 = vld [vmem:[#allocation2 + $0x570] sm:$0xff]
    %v282 = vld [vmem:[#allocation2 + $0x578] sm:$0xff]
    %v283 = vld [vmem:[#allocation2 + $0x580] sm:$0xff]
    %v284 = vld [vmem:[#allocation2 + $0x588] sm:$0xff]
    %v285 = vld [vmem:[#allocation2 + $0x590] sm:$0xff]
    %v286 = vld [vmem:[#allocation2 + $0x598] sm:$0xff]
    %v287 = vld [vmem:[#allocation2 + $0x5a0] sm:$0xff]
    %v288 = vld [vmem:[#allocation2 + $0x5a8] sm:$0xff]
    %v289 = vld [vmem:[#allocation2 + $0x5b0] sm:$0xff]
    %v290 = vld [vmem:[#allocation2 + $0x5b8] sm:$0xff]
    %v291 = vld [vmem:[#allocation2 + $0x5c0] sm:$0xff]
    %v292 = vld [vmem:[#allocation2 + $0x5c8] sm:$0xff]
    %v293 = vld [vmem:[#allocation2 + $0x5d0] sm:$0xff]
    %v294 = vld [vmem:[#allocation2 + $0x5d8] sm:$0xff]
    %v295 = vld [vmem:[#allocation2 + $0x5e0] sm:$0xff]
    %v296 = vld [vmem:[#allocation2 + $0x5e8] sm:$0xff]
    %v297 = vld [vmem:[#allocation2 + $0x5f0] sm:$0xff]
    %v298 = vld [vmem:[#allocation2 + $0x5f8] sm:$0xff]
    %v299 = vld [vmem:[#allocation2 + $0x600] sm:$0xff]
    %v300 = vld [vmem:[#allocation2 + $0x608] sm:$0xff]
    %v301 = vld [vmem:[#allocation2 + $0x610] sm:$0xff]
    %v302 = vld [vmem:[#allocation2 + $0x618] sm:$0xff]
    %v303 = vld [vmem:[#allocation2 + $0x620] sm:$0xff]
    %v304 = vld [vmem:[#allocation2 + $0x628] sm:$0xff]
    %v305 = vld [vmem:[#allocation2 + $0x630] sm:$0xff]
    %v306 = vld [vmem:[#allocation2 + $0x638] sm:$0xff]
    %v307 = vld [vmem:[#allocation2 + $0x640] sm:$0xff]
    %v308 = vld [vmem:[#allocation2 + $0x648] sm:$0xff]
    %v309 = vld [vmem:[#allocation2 + $0x650] sm:$0xff]
    %v310 = vld [vmem:[#allocation2 + $0x658] sm:$0xff]
    %v311 = vld [vmem:[#allocation2 + $0x660] sm:$0xff]
    %v312 = vld [vmem:[#allocation2 + $0x668] sm:$0xff]
    %v313 = vld [vmem:[#allocation2 + $0x670] sm:$0xff]
    %v314 = vld [vmem:[#allocation2 + $0x678] sm:$0xff]
    %v315 = vld [vmem:[#allocation2 + $0x680] sm:$0xff]
    %v316 = vld [vmem:[#allocation2 + $0x688] sm:$0xff]
    %v317 = vld [vmem:[#allocation2 + $0x690] sm:$0xff]
    %v318 = vld [vmem:[#allocation2 + $0x698] sm:$0xff]
    %v319 = vld [vmem:[#allocation2 + $0x6a0] sm:$0xff]
    %v320 = vld [vmem:[#allocation2 + $0x6a8] sm:$0xff]
    %v321 = vld [vmem:[#allocation2 + $0x6b0] sm:$0xff]
    %v322 = vld [vmem:[#allocation2 + $0x6b8] sm:$0xff]
    %v323 = vld [vmem:[#allocation2 + $0x6c0] sm:$0xff]
    %v324 = vld [vmem:[#allocation2 + $0x6c8] sm:$0xff]
    %v325 = vld [vmem:[#allocation2 + $0x6d0] sm:$0xff]
    %v326 = vld [vmem:[#allocation2 + $0x6d8] sm:$0xff]
    %v327 = vld [vmem:[#allocation2 + $0x6e0] sm:$0xff]
    %v328 = vld [vmem:[#allocation2 + $0x6e8] sm:$0xff]
    %v329 = vld [vmem:[#allocation2 + $0x6f0] sm:$0xff]
    %v330 = vld [vmem:[#allocation2 + $0x6f8] sm:$0xff]
    %v331 = vld [vmem:[#allocation2 + $0x700] sm:$0xff]
    %v332 = vld [vmem:[#allocation2 + $0x708] sm:$0xff]
    %v333 = vld [vmem:[#allocation2 + $0x710] sm:$0xff]
    %v334 = vld [vmem:[#allocation2 + $0x718] sm:$0xff]
    %v335 = vld [vmem:[#allocation2 + $0x720] sm:$0xff]
    %v336 = vld [vmem:[#allocation2 + $0x728] sm:$0xff]
    %v337 = vld [vmem:[#allocation2 + $0x730] sm:$0xff]
    %v338 = vld [vmem:[#allocation2 + $0x738] sm:$0xff]
    %v339 = vld [vmem:[#allocation2 + $0x740] sm:$0xff]
    %v340 = vld [vmem:[#allocation2 + $0x748] sm:$0xff]
    %v341 = vld [vmem:[#allocation2 + $0x750] sm:$0xff]
    %v342 = vld [vmem:[#allocation2 + $0x758] sm:$0xff]
    %v343 = vld [vmem:[#allocation2 + $0x760] sm:$0xff]
    %v344 = vld [vmem:[#allocation2 + $0x768] sm:$0xff]
    %v345 = vld [vmem:[#allocation2 + $0x770] sm:$0xff]
    %v346 = vld [vmem:[#allocation2 + $0x778] sm:$0xff]
    %v347 = vld [vmem:[#allocation2 + $0x780] sm:$0xff]
    %v348 = vld [vmem:[#allocation2 + $0x788] sm:$0xff]
    %v349 = vld [vmem:[#allocation2 + $0x790] sm:$0xff]
    %v350 = vld [vmem:[#allocation2 + $0x798] sm:$0xff]
    %v351 = vld [vmem:[#allocation2 + $0x7a0] sm:$0xff]
    %v352 = vld [vmem:[#allocation2 + $0x7a8] sm:$0xff]
    %v353 = vld [vmem:[#allocation2 + $0x7b0] sm:$0xff]
    %v354 = vld [vmem:[#allocation2 + $0x7b8] sm:$0xff]
    %v355 = vld [vmem:[#allocation2 + $0x7c0] sm:$0xff]
    %v356 = vld [vmem:[#allocation2 + $0x7c8] sm:$0xff]
    %v357 = vld [vmem:[#allocation2 + $0x7d0] sm:$0xff]
    %v358 = vld [vmem:[#allocation2 + $0x7d8] sm:$0xff]
    %v359 = vld [vmem:[#allocation2 + $0x7e0] sm:$0xff]
    %v360 = vld [vmem:[#allocation2 + $0x7e8] sm:$0xff]
    %v361 = vld [vmem:[#allocation2 + $0x7f0] sm:$0xff]
    %v362 = vld [vmem:[#allocation2 + $0x7f8] sm:$0xff]
    %v363 = vld [vmem:[#allocation2 + $0x800] sm:$0xff]
    %v364 = vld [vmem:[#allocation2 + $0x808] sm:$0xff]
    %v365 = vld [vmem:[#allocation2 + $0x810] sm:$0xff]
    %v366 = vld [vmem:[#allocation2 + $0x818] sm:$0xff]
    %v367 = vld [vmem:[#allocation2 + $0x820] sm:$0xff]
    %v368 = vld [vmem:[#allocation2 + $0x828] sm:$0xff]
    %v369 = vld [vmem:[#allocation2 + $0x830] sm:$0xff]
    %v370 = vld [vmem:[#allocation2 + $0x838] sm:$0xff]
    %v371 = vld [vmem:[#allocation2 + $0x840] sm:$0xff]
    %v372 = vld [vmem:[#allocation2 + $0x848] sm:$0xff]
    %v373 = vld [vmem:[#allocation2 + $0x850] sm:$0xff]
    %v374 = vld [vmem:[#allocation2 + $0x858] sm:$0xff]
    %v375 = vld [vmem:[#allocation2 + $0x860] sm:$0xff]
    %v376 = vld [vmem:[#allocation2 + $0x868] sm:$0xff]
    %v377 = vld [vmem:[#allocation2 + $0x870] sm:$0xff]
    %v378 = vld [vmem:[#allocation2 + $0x878] sm:$0xff]
    %v379 = vld [vmem:[#allocation2 + $0x880] sm:$0xff]
    %v380 = vld [vmem:[#allocation2 + $0x888] sm:$0xff]
    %v381 = vld [vmem:[#allocation2 + $0x890] sm:$0xff]
    %v382 = vld [vmem:[#allocation2 + $0x898] sm:$0xff]
    %v383 = vld [vmem:[#allocation2 + $0x8a0] sm:$0xff]
    %v384 = vld [vmem:[#allocation2 + $0x8a8] sm:$0xff]
    %v385 = vld [vmem:[#allocation2 + $0x8b0] sm:$0xff]
    %v386 = vld [vmem:[#allocation2 + $0x8b8] sm:$0xff]
    %v387 = vld [vmem:[#allocation2 + $0x8c0] sm:$0xff]
    %v388 = vld [vmem:[#allocation2 + $0x8c8] sm:$0xff]
    %v389 = vld [vmem:[#allocation2 + $0x8d0] sm:$0xff]
    %v390 = vld [vmem:[#allocation2 + $0x8d8] sm:$0xff]
    %v391 = vld [vmem:[#allocation2 + $0x8e0] sm:$0xff]
    %v392 = vld [vmem:[#allocation2 + $0x8e8] sm:$0xff]
    %v393 = vld [vmem:[#allocation2 + $0x8f0] sm:$0xff]
    %v394 = vld [vmem:[#allocation2 + $0x8f8] sm:$0xff]
    %v395 = vld [vmem:[#allocation2 + $0x900] sm:$0xff]
    %v396 = vld [vmem:[#allocation2 + $0x908] sm:$0xff]
    %v397 = vld [vmem:[#allocation2 + $0x910] sm:$0xff]
    %v398 = vld [vmem:[#allocation2 + $0x918] sm:$0xff]
    %v399 = vld [vmem:[#allocation2 + $0x920] sm:$0xff]
    %v400 = vld [vmem:[#allocation2 + $0x928] sm:$0xff]
    %v401 = vld [vmem:[#allocation2 + $0x930] sm:$0xff]
    %v402 = vld [vmem:[#allocation2 + $0x938] sm:$0xff]
    %v403 = vld [vmem:[#allocation2 + $0x940] sm:$0xff]
    %v404 = vld [vmem:[#allocation2 + $0x948] sm:$0xff]
    %v405 = vld [vmem:[#allocation2 + $0x950] sm:$0xff]
    %v406 = vld [vmem:[#allocation2 + $0x958] sm:$0xff]
    %v407 = vld [vmem:[#allocation2 + $0x960] sm:$0xff]
    %v408 = vld [vmem:[#allocation2 + $0x968] sm:$0xff]
    %v409 = vld [vmem:[#allocation2 + $0x970] sm:$0xff]
    %v410 = vld [vmem:[#allocation2 + $0x978] sm:$0xff]
    %v411 = vld [vmem:[#allocation2 + $0x980] sm:$0xff]
    %v412 = vld [vmem:[#allocation2 + $0x988] sm:$0xff]
    %v413 = vld [vmem:[#allocation2 + $0x990] sm:$0xff]
    %v414 = vld [vmem:[#allocation2 + $0x998] sm:$0xff]
    %v415 = vld [vmem:[#allocation2 + $0x9a0] sm:$0xff]
    %v416 = vld [vmem:[#allocation2 + $0x9a8] sm:$0xff]
    %v417 = vld [vmem:[#allocation2 + $0x9b0] sm:$0xff]
    %v418 = vld [vmem:[#allocation2 + $0x9b8] sm:$0xff]
    %v419 = vld [vmem:[#allocation2 + $0x9c0] sm:$0xff]
    %v420 = vld [vmem:[#allocation2 + $0x9c8] sm:$0xff]
    %v421 = vld [vmem:[#allocation2 + $0x9d0] sm:$0xff]
    %v422 = vld [vmem:[#allocation2 + $0x9d8] sm:$0xff]
    %v423 = vld [vmem:[#allocation2 + $0x9e0] sm:$0xff]
    %v424 = vld [vmem:[#allocation2 + $0x9e8] sm:$0xff]
    %v425 = vld [vmem:[#allocation2 + $0x9f0] sm:$0xff]
    %v426 = vld [vmem:[#allocation2 + $0x9f8] sm:$0xff]
    %v427 = vld [vmem:[#allocation2 + $0xa00] sm:$0xff]
    %v428 = vld [vmem:[#allocation2 + $0xa08] sm:$0xff]
    %v429 = vld [vmem:[#allocation2 + $0xa10] sm:$0xff]
    %v430 = vld [vmem:[#allocation2 + $0xa18] sm:$0xff]
    %v431 = vld [vmem:[#allocation2 + $0xa20] sm:$0xff]
    %v432 = vld [vmem:[#allocation2 + $0xa28] sm:$0xff]
    %v433 = vld [vmem:[#allocation2 + $0xa30] sm:$0xff]
    %v434 = vld [vmem:[#allocation2 + $0xa38] sm:$0xff]
    %v435 = vld [vmem:[#allocation2 + $0xa40] sm:$0xff]
    %v436 = vld [vmem:[#allocation2 + $0xa48] sm:$0xff]
    %v437 = vld [vmem:[#allocation2 + $0xa50] sm:$0xff]
    %v438 = vld [vmem:[#allocation2 + $0xa58] sm:$0xff]
    %v439 = vld [vmem:[#allocation2 + $0xa60] sm:$0xff]
    %v440 = vld [vmem:[#allocation2 + $0xa68] sm:$0xff]
    %v441 = vld [vmem:[#allocation2 + $0xa70] sm:$0xff]
    %v442 = vld [vmem:[#allocation2 + $0xa78] sm:$0xff]
    %v443 = vld [vmem:[#allocation2 + $0xa80] sm:$0xff]
    %v444 = vld [vmem:[#allocation2 + $0xa88] sm:$0xff]
    %v445 = vld [vmem:[#allocation2 + $0xa90] sm:$0xff]
    %v446 = vld [vmem:[#allocation2 + $0xa98] sm:$0xff]
    %v447 = vld [vmem:[#allocation2 + $0xaa0] sm:$0xff]
    %v448 = vld [vmem:[#allocation2 + $0xaa8] sm:$0xff]
    %v449 = vld [vmem:[#allocation2 + $0xab0] sm:$0xff]
    %v450 = vld [vmem:[#allocation2 + $0xab8] sm:$0xff]
    %v451 = vld [vmem:[#allocation2 + $0xac0] sm:$0xff]
    %v452 = vld [vmem:[#allocation2 + $0xac8] sm:$0xff]
    %v453 = vld [vmem:[#allocation2 + $0xad0] sm:$0xff]
    %v454 = vld [vmem:[#allocation2 + $0xad8] sm:$0xff]
    %v455 = vld [vmem:[#allocation2 + $0xae0] sm:$0xff]
    %v456 = vld [vmem:[#allocation2 + $0xae8] sm:$0xff]
    %v457 = vld [vmem:[#allocation2 + $0xaf0] sm:$0xff]
    %v458 = vld [vmem:[#allocation2 + $0xaf8] sm:$0xff]
    %v459 = vld [vmem:[#allocation2 + $0xb00] sm:$0xff]
    %v460 = vld [vmem:[#allocation2 + $0xb08] sm:$0xff]
    %v461 = vld [vmem:[#allocation2 + $0xb10] sm:$0xff]
    %v462 = vld [vmem:[#allocation2 + $0xb18] sm:$0xff]
    %v463 = vld [vmem:[#allocation2 + $0xb20] sm:$0xff]
    %v464 = vld [vmem:[#allocation2 + $0xb28] sm:$0xff]
    %v465 = vld [vmem:[#allocation2 + $0xb30] sm:$0xff]
    %v466 = vld [vmem:[#allocation2 + $0xb38] sm:$0xff]
    %v467 = vld [vmem:[#allocation2 + $0xb40] sm:$0xff]
    %v468 = vld [vmem:[#allocation2 + $0xb48] sm:$0xff]
    %v469 = vld [vmem:[#allocation2 + $0xb50] sm:$0xff]
    %v470 = vld [vmem:[#allocation2 + $0xb58] sm:$0xff]
    %v471 = vld [vmem:[#allocation2 + $0xb60] sm:$0xff]
    %v472 = vld [vmem:[#allocation2 + $0xb68] sm:$0xff]
    %v473 = vld [vmem:[#allocation2 + $0xb70] sm:$0xff]
    %v474 = vld [vmem:[#allocation2 + $0xb78] sm:$0xff]
    %v475 = vld [vmem:[#allocation2 + $0xb80] sm:$0xff]
    %v476 = vld [vmem:[#allocation2 + $0xb88] sm:$0xff]
    %v477 = vld [vmem:[#allocation2 + $0xb90] sm:$0xff]
    %v478 = vld [vmem:[#allocation2 + $0xb98] sm:$0xff]
    %v479 = vld [vmem:[#allocation2 + $0xba0] sm:$0xff]
    %v480 = vld [vmem:[#allocation2 + $0xba8] sm:$0xff]
    %v481 = vld [vmem:[#allocation2 + $0xbb0] sm:$0xff]
    %v482 = vld [vmem:[#allocation2 + $0xbb8] sm:$0xff]
    %v483 = vld [vmem:[#allocation2 + $0xbc0] sm:$0xff]
    %v484 = vld [vmem:[#allocation2 + $0xbc8] sm:$0xff]
    %v485 = vld [vmem:[#allocation2 + $0xbd0] sm:$0xff]
    %v486 = vld [vmem:[#allocation2 + $0xbd8] sm:$0xff]
    %v487 = vld [vmem:[#allocation2 + $0xbe0] sm:$0xff]
    %v488 = vld [vmem:[#allocation2 + $0xbe8] sm:$0xff]
    %v489 = vld [vmem:[#allocation2 + $0xbf0] sm:$0xff]
    %v490 = vld [vmem:[#allocation2 + $0xbf8] sm:$0xff]
    %v491 = vld [vmem:[#allocation4] sm:$0xff]
    %v492 = vld [vmem:[#allocation4 + $0x8] sm:$0xf]
    %v495 = vlaneseq
    %v496 = vshrl.u32 %v495, 7
    %v497 = vsub.s32 0, %v496
    %v498 = vrot.slane %v491, %v497
    %v499 = vlaneseq
    %v500 = vshrl.u32 %v499, 7
    %v501 = vsub.s32 1, %v500
    %v502 = vrot.slane %v491, %v501
    %v503 = vlaneseq
    %v504 = vshrl.u32 %v503, 7
    %v505 = vsub.s32 2, %v504
    %v506 = vrot.slane %v491, %v505
    %v507 = vlaneseq
    %v508 = vshrl.u32 %v507, 7
    %v509 = vsub.s32 3, %v508
    %v510 = vrot.slane %v491, %v509
    %v511 = vlaneseq
    %v512 = vshrl.u32 %v511, 7
    %v513 = vsub.s32 4, %v512
    %v514 = vrot.slane %v491, %v513
    %v515 = vlaneseq
    %v516 = vshrl.u32 %v515, 7
    %v517 = vsub.s32 5, %v516
    %v518 = vrot.slane %v491, %v517
    %v519 = vlaneseq
    %v520 = vshrl.u32 %v519, 7
    %v521 = vsub.s32 6, %v520
    %v522 = vrot.slane %v491, %v521
    %v523 = vlaneseq
    %v524 = vshrl.u32 %v523, 7
    %v525 = vsub.s32 7, %v524
    %v526 = vrot.slane %v491, %v525
    %v527 = vlaneseq
    %v528 = vshrl.u32 %v527, 7
    %v529 = vsub.s32 0, %v528
    %v530 = vrot.slane %v492, %v529
    %v531 = vlaneseq
    %v532 = vshrl.u32 %v531, 7
    %v533 = vsub.s32 1, %v532
    %v534 = vrot.slane %v492, %v533
    %v535 = vlaneseq
    %v536 = vshrl.u32 %v535, 7
    %v537 = vsub.s32 2, %v536
    %v538 = vrot.slane %v492, %v537
    %v539 = vlaneseq
    %v540 = vshrl.u32 %v539, 7
    %v541 = vsub.s32 3, %v540
    %v542 = vrot.slane %v492, %v541
    %v557 = vunpack.c.l.s4 1983009808
    %v558 = vunpack.c.0.s8 %v557
    %v559 = vlaneseq
    %v560 = vshrl.u32 %v559, 7
    %v561 = vsub.s32 %v558, %v560
    %v562 = vrot.slane %v106, %v561
    %v563 = vcombine.high %v562, %v562
    %566 = vmatprep.subr.mxu0 %v108
    %567 = vmatpush1.msra.mxu0 %v107
    %568 = vmatprep.subr.mxu0 %v120
    %569 = vmatpush1.msra.mxu0 %v119
    %570 = vmatprep.subr.mxu0 %v132
    %571 = vmatpush1.msra.mxu0 %v131
    %572 = vmatprep.subr.mxu0 %v144
    %573 = vmatpush1.msra.mxu0 %v143
    %574 = vmatprep.subr.mxu0 %v156
    %575 = vmatpush1.msra.mxu0 %v155
    %576 = vmatprep.subr.mxu0 %v168
    %577 = vmatpush1.msra.mxu0 %v167
    %578 = vmatprep.subr.mxu0 %v180
    %579 = vmatpush1.msra.mxu0 %v179
    %580 = vmatprep.subr.mxu0 %v192
    %581 = vmatpush1.msra.mxu0 %v191
    %582 = vmatprep.subr.mxu0 %v204
    %583 = vmatpush1.msra.mxu0 %v203
    %584 = vmatprep.subr.mxu0 %v216
    %585 = vmatpush1.msra.mxu0 %v215
    %586 = vmatprep.subr.mxu0 %v228
    %587 = vmatpush1.msra.mxu0 %v227
    %588 = vmatprep.subr.mxu0 %v240
    %589 = vmatpush1.msra.mxu0 %v239
    %590 = vmatprep.subr.mxu0 %v252
    %591 = vmatpush1.msra.mxu0 %v251
    %592 = vmatprep.subr.mxu0 %v264
    %593 = vmatpush1.msra.mxu0 %v263
    %594 = vmatprep.subr.mxu0 %v276
    %595 = vmatpush1.msra.mxu0 %v275
    %596 = vmatprep.subr.mxu0 %v288
    %597 = vmatpush1.msra.mxu0 %v287
    %598 = vmatprep.subr.mxu0 %v300
    %599 = vmatpush1.msra.mxu0 %v299
    %600 = vmatprep.subr.mxu0 %v312
    %601 = vmatpush1.msra.mxu0 %v311
    %602 = vmatprep.subr.mxu0 %v324
    %603 = vmatpush1.msra.mxu0 %v323
    %604 = vmatprep.subr.mxu0 %v336
    %605 = vmatpush1.msra.mxu0 %v335
    %606 = vmatprep.subr.mxu0 %v348
    %607 = vmatpush1.msra.mxu0 %v347
    %608 = vmatprep.subr.mxu0 %v360
    %609 = vmatpush1.msra.mxu0 %v359
    %610 = vmatprep.subr.mxu0 %v372
    %611 = vmatpush1.msra.mxu0 %v371
    %612 = vmatprep.subr.mxu0 %v384
    %613 = vmatpush1.msra.mxu0 %v383
    %614 = vmatprep.subr.mxu0 %v396
    %615 = vmatpush1.msra.mxu0 %v395
    %616 = vmatprep.subr.mxu0 %v408
    %617 = vmatpush1.msra.mxu0 %v407
    %618 = vmatprep.subr.mxu0 %v420
    %619 = vmatpush1.msra.mxu0 %v419
    %620 = vmatprep.subr.mxu0 %v432
    %621 = vmatpush1.msra.mxu0 %v431
    %622 = vmatprep.subr.mxu0 %v444
    %623 = vmatpush1.msra.mxu0 %v443
    %624 = vmatprep.subr.mxu0 %v456
    %625 = vmatpush1.msra.mxu0 %v455
    %626 = vmatprep.subr.mxu0 %v468
    %627 = vmatpush1.msra.mxu0 %v467
    %628 = vmatprep.subr.mxu0 %v480
    %629 = vmatpush1.msra.mxu0 %v479
    %630 = vmatprep.mubr.f32.mxu0 %v563
    %631 = vmatmul.mubr.f32.gmra.mrb[0].mxu0 %v562
    %v632 = vpop.f32.mrb[0].mxu0
    %v633 = vadd.f32 %v498, %v632
    %v634 = vpop.f32.mrb[0].mxu0
    %v635 = vadd.f32 %v502, %v634
    %636 = vdwg.mxu0
    %637 = vmatprep.subr.mxu0 %v110
    %638 = vmatpush1.msra.mxu0 %v109
    %639 = vmatprep.subr.mxu0 %v122
    %640 = vmatpush1.msra.mxu0 %v121
    %641 = vmatprep.subr.mxu0 %v134
    %642 = vmatpush1.msra.mxu0 %v133
    %643 = vmatprep.subr.mxu0 %v146
    %644 = vmatpush1.msra.mxu0 %v145
    %645 = vmatprep.subr.mxu0 %v158
    %646 = vmatpush1.msra.mxu0 %v157
    %647 = vmatprep.subr.mxu0 %v170
    %648 = vmatpush1.msra.mxu0 %v169
    %649 = vmatprep.subr.mxu0 %v182
    %650 = vmatpush1.msra.mxu0 %v181
    %651 = vmatprep.subr.mxu0 %v194
    %652 = vmatpush1.msra.mxu0 %v193
    %653 = vmatprep.subr.mxu0 %v206
    %654 = vmatpush1.msra.mxu0 %v205
    %655 = vmatprep.subr.mxu0 %v218
    %656 = vmatpush1.msra.mxu0 %v217
    %657 = vmatprep.subr.mxu0 %v230
    %658 = vmatpush1.msra.mxu0 %v229
    %659 = vmatprep.subr.mxu0 %v242
    %660 = vmatpush1.msra.mxu0 %v241
    %661 = vmatprep.subr.mxu0 %v254
    %662 = vmatpush1.msra.mxu0 %v253
    %663 = vmatprep.subr.mxu0 %v266
    %664 = vmatpush1.msra.mxu0 %v265
    %665 = vmatprep.subr.mxu0 %v278
    %666 = vmatpush1.msra.mxu0 %v277
    %667 = vmatprep.subr.mxu0 %v290
    %668 = vmatpush1.msra.mxu0 %v289
    %669 = vmatprep.subr.mxu0 %v302
    %670 = vmatpush1.msra.mxu0 %v301
    %671 = vmatprep.subr.mxu0 %v314
    %672 = vmatpush1.msra.mxu0 %v313
    %673 = vmatprep.subr.mxu0 %v326
    %674 = vmatpush1.msra.mxu0 %v325
    %675 = vmatprep.subr.mxu0 %v338
    %676 = vmatpush1.msra.mxu0 %v337
    %677 = vmatprep.subr.mxu0 %v350
    %678 = vmatpush1.msra.mxu0 %v349
    %679 = vmatprep.subr.mxu0 %v362
    %680 = vmatpush1.msra.mxu0 %v361
    %681 = vmatprep.subr.mxu0 %v374
    %682 = vmatpush1.msra.mxu0 %v373
    %683 = vmatprep.subr.mxu0 %v386
    %684 = vmatpush1.msra.mxu0 %v385
    %685 = vmatprep.subr.mxu0 %v398
    %686 = vmatpush1.msra.mxu0 %v397
    %687 = vmatprep.subr.mxu0 %v410
    %688 = vmatpush1.msra.mxu0 %v409
    %689 = vmatprep.subr.mxu0 %v422
    %690 = vmatpush1.msra.mxu0 %v421
    %691 = vmatprep.subr.mxu0 %v434
    %692 = vmatpush1.msra.mxu0 %v433
    %693 = vmatprep.subr.mxu0 %v446
    %694 = vmatpush1.msra.mxu0 %v445
    %695 = vmatprep.subr.mxu0 %v458
    %696 = vmatpush1.msra.mxu0 %v457
    %697 = vmatprep.subr.mxu0 %v470
    %698 = vmatpush1.msra.mxu0 %v469
    %699 = vmatprep.subr.mxu0 %v482
    %700 = vmatpush1.msra.mxu0 %v481
    %701 = vmatprep.mubr.f32.mxu0 %v563
    %702 = vmatmul.mubr.f32.gmra.mrb[0].mxu0 %v562
    %v703 = vpop.f32.mrb[0].mxu0
    %v704 = vadd.f32 %v506, %v703
    %v705 = vpop.f32.mrb[0].mxu0
    %v706 = vadd.f32 %v510, %v705
    %707 = vdwg.mxu0
    %708 = vmatprep.subr.mxu0 %v112
    %709 = vmatpush1.msra.mxu0 %v111
    %710 = vmatprep.subr.mxu0 %v124
    %711 = vmatpush1.msra.mxu0 %v123
    %712 = vmatprep.subr.mxu0 %v136
    %713 = vmatpush1.msra.mxu0 %v135
    %714 = vmatprep.subr.mxu0 %v148
    %715 = vmatpush1.msra.mxu0 %v147
    %716 = vmatprep.subr.mxu0 %v160
    %717 = vmatpush1.msra.mxu0 %v159
    %718 = vmatprep.subr.mxu0 %v172
    %719 = vmatpush1.msra.mxu0 %v171
    %720 = vmatprep.subr.mxu0 %v184
    %721 = vmatpush1.msra.mxu0 %v183
    %722 = vmatprep.subr.mxu0 %v196
    %723 = vmatpush1.msra.mxu0 %v195
    %724 = vmatprep.subr.mxu0 %v208
    %725 = vmatpush1.msra.mxu0 %v207
    %726 = vmatprep.subr.mxu0 %v220
    %727 = vmatpush1.msra.mxu0 %v219
    %728 = vmatprep.subr.mxu0 %v232
    %729 = vmatpush1.msra.mxu0 %v231
    %730 = vmatprep.subr.mxu0 %v244
    %731 = vmatpush1.msra.mxu0 %v243
    %732 = vmatprep.subr.mxu0 %v256
    %733 = vmatpush1.msra.mxu0 %v255
    %734 = vmatprep.subr.mxu0 %v268
    %735 = vmatpush1.msra.mxu0 %v267
    %736 = vmatprep.subr.mxu0 %v280
    %737 = vmatpush1.msra.mxu0 %v279
    %738 = vmatprep.subr.mxu0 %v292
    %739 = vmatpush1.msra.mxu0 %v291
    %740 = vmatprep.subr.mxu0 %v304
    %741 = vmatpush1.msra.mxu0 %v303
    %742 = vmatprep.subr.mxu0 %v316
    %743 = vmatpush1.msra.mxu0 %v315
    %744 = vmatprep.subr.mxu0 %v328
    %745 = vmatpush1.msra.mxu0 %v327
    %746 = vmatprep.subr.mxu0 %v340
    %747 = vmatpush1.msra.mxu0 %v339
    %748 = vmatprep.subr.mxu0 %v352
    %749 = vmatpush1.msra.mxu0 %v351
    %750 = vmatprep.subr.mxu0 %v364
    %751 = vmatpush1.msra.mxu0 %v363
    %752 = vmatprep.subr.mxu0 %v376
    %753 = vmatpush1.msra.mxu0 %v375
    %754 = vmatprep.subr.mxu0 %v388
    %755 = vmatpush1.msra.mxu0 %v387
    %756 = vmatprep.subr.mxu0 %v400
    %757 = vmatpush1.msra.mxu0 %v399
    %758 = vmatprep.subr.mxu0 %v412
    %759 = vmatpush1.msra.mxu0 %v411
    %760 = vmatprep.subr.mxu0 %v424
    %761 = vmatpush1.msra.mxu0 %v423
    %762 = vmatprep.subr.mxu0 %v436
    %763 = vmatpush1.msra.mxu0 %v435
    %764 = vmatprep.subr.mxu0 %v448
    %765 = vmatpush1.msra.mxu0 %v447
    %766 = vmatprep.subr.mxu0 %v460
    %767 = vmatpush1.msra.mxu0 %v459
    %768 = vmatprep.subr.mxu0 %v472
    %769 = vmatpush1.msra.mxu0 %v471
    %770 = vmatprep.subr.mxu0 %v484
    %771 = vmatpush1.msra.mxu0 %v483
    %772 = vmatprep.mubr.f32.mxu0 %v563
    %773 = vmatmul.mubr.f32.gmra.mrb[0].mxu0 %v562
    %v774 = vpop.f32.mrb[0].mxu0
    %v775 = vadd.f32 %v514, %v774
    %v776 = vpop.f32.mrb[0].mxu0
    %v777 = vadd.f32 %v518, %v776
    %778 = vdwg.mxu0
    %779 = vmatprep.subr.mxu0 %v114
    %780 = vmatpush1.msra.mxu0 %v113
    %781 = vmatprep.subr.mxu0 %v126
    %782 = vmatpush1.msra.mxu0 %v125
    %783 = vmatprep.subr.mxu0 %v138
    %784 = vmatpush1.msra.mxu0 %v137
    %785 = vmatprep.subr.mxu0 %v150
    %786 = vmatpush1.msra.mxu0 %v149
    %787 = vmatprep.subr.mxu0 %v162
    %788 = vmatpush1.msra.mxu0 %v161
    %789 = vmatprep.subr.mxu0 %v174
    %790 = vmatpush1.msra.mxu0 %v173
    %791 = vmatprep.subr.mxu0 %v186
    %792 = vmatpush1.msra.mxu0 %v185
    %793 = vmatprep.subr.mxu0 %v198
    %794 = vmatpush1.msra.mxu0 %v197
    %795 = vmatprep.subr.mxu0 %v210
    %796 = vmatpush1.msra.mxu0 %v209
    %797 = vmatprep.subr.mxu0 %v222
    %798 = vmatpush1.msra.mxu0 %v221
    %799 = vmatprep.subr.mxu0 %v234
    %800 = vmatpush1.msra.mxu0 %v233
    %801 = vmatprep.subr.mxu0 %v246
    %802 = vmatpush1.msra.mxu0 %v245
    %803 = vmatprep.subr.mxu0 %v258
    %804 = vmatpush1.msra.mxu0 %v257
    %805 = vmatprep.subr.mxu0 %v270
    %806 = vmatpush1.msra.mxu0 %v269
    %807 = vmatprep.subr.mxu0 %v282
    %808 = vmatpush1.msra.mxu0 %v281
    %809 = vmatprep.subr.mxu0 %v294
    %810 = vmatpush1.msra.mxu0 %v293
    %811 = vmatprep.subr.mxu0 %v306
    %812 = vmatpush1.msra.mxu0 %v305
    %813 = vmatprep.subr.mxu0 %v318
    %814 = vmatpush1.msra.mxu0 %v317
    %815 = vmatprep.subr.mxu0 %v330
    %816 = vmatpush1.msra.mxu0 %v329
    %817 = vmatprep.subr.mxu0 %v342
    %818 = vmatpush1.msra.mxu0 %v341
    %819 = vmatprep.subr.mxu0 %v354
    %820 = vmatpush1.msra.mxu0 %v353
    %821 = vmatprep.subr.mxu0 %v366
    %822 = vmatpush1.msra.mxu0 %v365
    %823 = vmatprep.subr.mxu0 %v378
    %824 = vmatpush1.msra.mxu0 %v377
    %825 = vmatprep.subr.mxu0 %v390
    %826 = vmatpush1.msra.mxu0 %v389
    %827 = vmatprep.subr.mxu0 %v402
    %828 = vmatpush1.msra.mxu0 %v401
    %829 = vmatprep.subr.mxu0 %v414
    %830 = vmatpush1.msra.mxu0 %v413
    %831 = vmatprep.subr.mxu0 %v426
    %832 = vmatpush1.msra.mxu0 %v425
    %833 = vmatprep.subr.mxu0 %v438
    %834 = vmatpush1.msra.mxu0 %v437
    %835 = vmatprep.subr.mxu0 %v450
    %836 = vmatpush1.msra.mxu0 %v449
    %837 = vmatprep.subr.mxu0 %v462
    %838 = vmatpush1.msra.mxu0 %v461
    %839 = vmatprep.subr.mxu0 %v474
    %840 = vmatpush1.msra.mxu0 %v473
    %841 = vmatprep.subr.mxu0 %v486
    %842 = vmatpush1.msra.mxu0 %v485
    %843 = vmatprep.mubr.f32.mxu0 %v563
    %844 = vmatmul.mubr.f32.gmra.mrb[0].mxu0 %v562
    %v845 = vpop.f32.mrb[0].mxu0
    %v846 = vadd.f32 %v522, %v845
    %v847 = vpop.f32.mrb[0].mxu0
    %v848 = vadd.f32 %v526, %v847
    %849 = vdwg.mxu0
    %850 = vmatprep.subr.mxu0 %v116
    %851 = vmatpush1.msra.mxu0 %v115
    %852 = vmatprep.subr.mxu0 %v128
    %853 = vmatpush1.msra.mxu0 %v127
    %854 = vmatprep.subr.mxu0 %v140
    %855 = vmatpush1.msra.mxu0 %v139
    %856 = vmatprep.subr.mxu0 %v152
    %857 = vmatpush1.msra.mxu0 %v151
    %858 = vmatprep.subr.mxu0 %v164
    %859 = vmatpush1.msra.mxu0 %v163
    %860 = vmatprep.subr.mxu0 %v176
    %861 = vmatpush1.msra.mxu0 %v175
    %862 = vmatprep.subr.mxu0 %v188
    %863 = vmatpush1.msra.mxu0 %v187
    %864 = vmatprep.subr.mxu0 %v200
    %865 = vmatpush1.msra.mxu0 %v199
    %866 = vmatprep.subr.mxu0 %v212
    %867 = vmatpush1.msra.mxu0 %v211
    %868 = vmatprep.subr.mxu0 %v224
    %869 = vmatpush1.msra.mxu0 %v223
    %870 = vmatprep.subr.mxu0 %v236
    %871 = vmatpush1.msra.mxu0 %v235
    %872 = vmatprep.subr.mxu0 %v248
    %873 = vmatpush1.msra.mxu0 %v247
    %874 = vmatprep.subr.mxu0 %v260
    %875 = vmatpush1.msra.mxu0 %v259
    %876 = vmatprep.subr.mxu0 %v272
    %877 = vmatpush1.msra.mxu0 %v271
    %878 = vmatprep.subr.mxu0 %v284
    %879 = vmatpush1.msra.mxu0 %v283
    %880 = vmatprep.subr.mxu0 %v296
    %881 = vmatpush1.msra.mxu0 %v295
    %882 = vmatprep.subr.mxu0 %v308
    %883 = vmatpush1.msra.mxu0 %v307
    %884 = vmatprep.subr.mxu0 %v320
    %885 = vmatpush1.msra.mxu0 %v319
    %886 = vmatprep.subr.mxu0 %v332
    %887 = vmatpush1.msra.mxu0 %v331
    %888 = vmatprep.subr.mxu0 %v344
    %889 = vmatpush1.msra.mxu0 %v343
    %890 = vmatprep.subr.mxu0 %v356
    %891 = vmatpush1.msra.mxu0 %v355
    %892 = vmatprep.subr.mxu0 %v368
    %893 = vmatpush1.msra.mxu0 %v367
    %894 = vmatprep.subr.mxu0 %v380
    %895 = vmatpush1.msra.mxu0 %v379
    %896 = vmatprep.subr.mxu0 %v392
    %897 = vmatpush1.msra.mxu0 %v391
    %898 = vmatprep.subr.mxu0 %v404
    %899 = vmatpush1.msra.mxu0 %v403
    %900 = vmatprep.subr.mxu0 %v416
    %901 = vmatpush1.msra.mxu0 %v415
    %902 = vmatprep.subr.mxu0 %v428
    %903 = vmatpush1.msra.mxu0 %v427
    %904 = vmatprep.subr.mxu0 %v440
    %905 = vmatpush1.msra.mxu0 %v439
    %906 = vmatprep.subr.mxu0 %v452
    %907 = vmatpush1.msra.mxu0 %v451
    %908 = vmatprep.subr.mxu0 %v464
    %909 = vmatpush1.msra.mxu0 %v463
    %910 = vmatprep.subr.mxu0 %v476
    %911 = vmatpush1.msra.mxu0 %v475
    %912 = vmatprep.subr.mxu0 %v488
    %913 = vmatpush1.msra.mxu0 %v487
    %914 = vmatprep.mubr.f32.mxu0 %v563
    %915 = vmatmul.mubr.f32.gmra.mrb[0].mxu0 %v562
    %v916 = vpop.f32.mrb[0].mxu0
    %v917 = vadd.f32 %v530, %v916
    %v918 = vpop.f32.mrb[0].mxu0
    %v919 = vadd.f32 %v534, %v918
    %920 = vdwg.mxu0
    %921 = vmatprep.subr.mxu0 %v118
    %922 = vmatpush1.msra.mxu0 %v117
    %923 = vmatprep.subr.mxu0 %v130
    %924 = vmatpush1.msra.mxu0 %v129
    %925 = vmatprep.subr.mxu0 %v142
    %926 = vmatpush1.msra.mxu0 %v141
    %927 = vmatprep.subr.mxu0 %v154
    %928 = vmatpush1.msra.mxu0 %v153
    %929 = vmatprep.subr.mxu0 %v166
    %930 = vmatpush1.msra.mxu0 %v165
    %931 = vmatprep.subr.mxu0 %v178
    %932 = vmatpush1.msra.mxu0 %v177
    %933 = vmatprep.subr.mxu0 %v190
    %934 = vmatpush1.msra.mxu0 %v189
    %935 = vmatprep.subr.mxu0 %v202
    %936 = vmatpush1.msra.mxu0 %v201
    %937 = vmatprep.subr.mxu0 %v214
    %938 = vmatpush1.msra.mxu0 %v213
    %939 = vmatprep.subr.mxu0 %v226
    %940 = vmatpush1.msra.mxu0 %v225
    %941 = vmatprep.subr.mxu0 %v238
    %942 = vmatpush1.msra.mxu0 %v237
    %943 = vmatprep.subr.mxu0 %v250
    %944 = vmatpush1.msra.mxu0 %v249
    %945 = vmatprep.subr.mxu0 %v262
    %946 = vmatpush1.msra.mxu0 %v261
    %947 = vmatprep.subr.mxu0 %v274
    %948 = vmatpush1.msra.mxu0 %v273
    %949 = vmatprep.subr.mxu0 %v286
    %950 = vmatpush1.msra.mxu0 %v285
    %951 = vmatprep.subr.mxu0 %v298
    %952 = vmatpush1.msra.mxu0 %v297
    %953 = vmatprep.subr.mxu0 %v310
    %954 = vmatpush1.msra.mxu0 %v309
    %955 = vmatprep.subr.mxu0 %v322
    %956 = vmatpush1.msra.mxu0 %v321
    %957 = vmatprep.subr.mxu0 %v334
    %958 = vmatpush1.msra.mxu0 %v333
    %959 = vmatprep.subr.mxu0 %v346
    %960 = vmatpush1.msra.mxu0 %v345
    %961 = vmatprep.subr.mxu0 %v358
    %962 = vmatpush1.msra.mxu0 %v357
    %963 = vmatprep.subr.mxu0 %v370
    %964 = vmatpush1.msra.mxu0 %v369
    %965 = vmatprep.subr.mxu0 %v382
    %966 = vmatpush1.msra.mxu0 %v381
    %967 = vmatprep.subr.mxu0 %v394
    %968 = vmatpush1.msra.mxu0 %v393
    %969 = vmatprep.subr.mxu0 %v406
    %970 = vmatpush1.msra.mxu0 %v405
    %971 = vmatprep.subr.mxu0 %v418
    %972 = vmatpush1.msra.mxu0 %v417
    %973 = vmatprep.subr.mxu0 %v430
    %974 = vmatpush1.msra.mxu0 %v429
    %975 = vmatprep.subr.mxu0 %v442
    %976 = vmatpush1.msra.mxu0 %v441
    %977 = vmatprep.subr.mxu0 %v454
    %978 = vmatpush1.msra.mxu0 %v453
    %979 = vmatprep.subr.mxu0 %v466
    %980 = vmatpush1.msra.mxu0 %v465
    %981 = vmatprep.subr.mxu0 %v478
    %982 = vmatpush1.msra.mxu0 %v477
    %983 = vmatprep.subr.mxu0 %v490
    %984 = vmatpush1.msra.mxu0 %v489
    %985 = vmatprep.mubr.f32.mxu0 %v563
    %986 = vmatmul.mubr.f32.gmra.mrb[0].mxu0 %v562
    %v987 = vpop.f32.mrb[0].mxu0
    %v988 = vadd.f32 %v538, %v987
    %v989 = vpop.f32.mrb[0].mxu0
    %v990 = vadd.f32 %v542, %v989
    %991 = vdwg.mxu0
    %vm992 = vcmp.gt.f32.partialorder %v633, 0.0
    %vm993 = vcmp.gt.f32.partialorder %v635, 0.0
    %vm994 = vcmp.gt.f32.partialorder %v704, 0.0
    %vm995 = vcmp.gt.f32.partialorder %v706, 0.0
    %vm996 = vcmp.gt.f32.partialorder %v775, 0.0
    %vm997 = vcmp.gt.f32.partialorder %v777, 0.0
    %vm998 = vcmp.gt.f32.partialorder %v846, 0.0
    %vm999 = vcmp.gt.f32.partialorder %v848, 0.0
    %vm1000 = vcmp.gt.f32.partialorder %v917, 0.0
    %vm1001 = vcmp.gt.f32.partialorder %v919, 0.0
    %vm1002 = vcmp.gt.f32.partialorder %v988, 0.0
    %vm1003 = vcmp.gt.f32.partialorder %v990, 0.0
    %v1004 = vmin.f32 %v633, 0.0
    %v1005 = vmin.f32 %v635, 0.0
    %v1006 = vmin.f32 %v704, 0.0
    %v1007 = vmin.f32 %v706, 0.0
    %v1008 = vmin.f32 %v775, 0.0
    %v1009 = vmin.f32 %v777, 0.0
    %v1010 = vmin.f32 %v846, 0.0
    %v1011 = vmin.f32 %v848, 0.0
    %v1012 = vmin.f32 %v917, 0.0
    %v1013 = vmin.f32 %v919, 0.0
    %v1014 = vmin.f32 %v988, 0.0
    %v1015 = vmin.f32 %v990, 0.0
    %v1016 = vmul.f32 %v1004, 1.442695
    %v1017 = vpow.pop %v1016
    %v1018 = vmul.f32 %v1005, 1.442695
    %v1019 = vpow.pop %v1018
    %v1020 = vmul.f32 %v1006, 1.442695
    %v1021 = vpow.pop %v1020
    %v1022 = vmul.f32 %v1007, 1.442695
    %v1023 = vpow.pop %v1022
    %v1024 = vmul.f32 %v1008, 1.442695
    %v1025 = vpow.pop %v1024
    %v1026 = vmul.f32 %v1009, 1.442695
    %v1027 = vpow.pop %v1026
    %v1028 = vmul.f32 %v1010, 1.442695
    %v1029 = vpow.pop %v1028
    %v1030 = vmul.f32 %v1011, 1.442695
    %v1031 = vpow.pop %v1030
    %v1032 = vmul.f32 %v1012, 1.442695
    %v1033 = vpow.pop %v1032
    %v1034 = vmul.f32 %v1013, 1.442695
    %v1035 = vpow.pop %v1034
    %v1036 = vmul.f32 %v1014, 1.442695
    %v1037 = vpow.pop %v1036
    %v1038 = vmul.f32 %v1015, 1.442695
    %v1039 = vpow.pop %v1038
    %v1040 = vsub.f32 %v1017, 1.0
    %v1041 = vsub.f32 %v1019, 1.0
    %v1042 = vsub.f32 %v1021, 1.0
    %v1043 = vsub.f32 %v1023, 1.0
    %v1044 = vsub.f32 %v1025, 1.0
    %v1045 = vsub.f32 %v1027, 1.0
    %v1046 = vsub.f32 %v1029, 1.0
    %v1047 = vsub.f32 %v1031, 1.0
    %v1048 = vsub.f32 %v1033, 1.0
    %v1049 = vsub.f32 %v1035, 1.0
    %v1050 = vsub.f32 %v1037, 1.0
    %v1051 = vsub.f32 %v1039, 1.0
    %v1052 = vsel %vm992, %v633, %v1040
    %v1053 = vsel %vm993, %v635, %v1041
    %v1054 = vsel %vm994, %v704, %v1042
    %v1055 = vsel %vm995, %v706, %v1043
    %v1056 = vsel %vm996, %v775, %v1044
    %v1057 = vsel %vm997, %v777, %v1045
    %v1058 = vsel %vm998, %v846, %v1046
    %v1059 = vsel %vm999, %v848, %v1047
    %v1060 = vsel %vm1000, %v917, %v1048
    %v1061 = vsel %vm1001, %v919, %v1049
    %v1062 = vsel %vm1002, %v988, %v1050
    %v1063 = vsel %vm1003, %v990, %v1051
    %v1064 = vld [vmem:[#allocation6] sm:$0xff]
    %v1065 = vld [vmem:[#allocation6 + $0x8] sm:$0xff]
    %v1066 = vld [vmem:[#allocation6 + $0x10] sm:$0xff]
    %v1067 = vld [vmem:[#allocation6 + $0x18] sm:$0xff]
    %v1068 = vld [vmem:[#allocation6 + $0x20] sm:$0xff]
    %v1069 = vld [vmem:[#allocation6 + $0x28] sm:$0xff]
    %v1070 = vld [vmem:[#allocation6 + $0x30] sm:$0xff]
    %v1071 = vld [vmem:[#allocation6 + $0x38] sm:$0xff]
    %v1072 = vld [vmem:[#allocation6 + $0x40] sm:$0xff]
    %v1073 = vld [vmem:[#allocation6 + $0x48] sm:$0xff]
    %v1074 = vld [vmem:[#allocation6 + $0x50] sm:$0xff]
    %v1075 = vld [vmem:[#allocation6 + $0x58] sm:$0xff]
    %v1076 = vld [vmem:[#allocation6 + $0x60] sm:$0xff]
    %v1077 = vld [vmem:[#allocation6 + $0x68] sm:$0xff]
    %v1078 = vld [vmem:[#allocation6 + $0x70] sm:$0xff]
    %v1079 = vld [vmem:[#allocation6 + $0x78] sm:$0xff]
    %v1080 = vld [vmem:[#allocation6 + $0x80] sm:$0xff]
    %v1081 = vld [vmem:[#allocation6 + $0x88] sm:$0xff]
    %v1082 = vld [vmem:[#allocation6 + $0x90] sm:$0xff]
    %v1083 = vld [vmem:[#allocation6 + $0x98] sm:$0xff]
    %v1084 = vld [vmem:[#allocation6 + $0xa0] sm:$0xff]
    %v1085 = vld [vmem:[#allocation6 + $0xa8] sm:$0xff]
    %v1086 = vld [vmem:[#allocation6 + $0xb0] sm:$0xff]
    %v1087 = vld [vmem:[#allocation6 + $0xb8] sm:$0xff]
    %v1088 = vld [vmem:[#allocation6 + $0xc0] sm:$0xff]
    %v1089 = vld [vmem:[#allocation6 + $0xc8] sm:$0xff]
    %v1090 = vld [vmem:[#allocation6 + $0xd0] sm:$0xff]
    %v1091 = vld [vmem:[#allocation6 + $0xd8] sm:$0xff]
    %v1092 = vld [vmem:[#allocation6 + $0xe0] sm:$0xff]
    %v1093 = vld [vmem:[#allocation6 + $0xe8] sm:$0xff]
    %v1094 = vld [vmem:[#allocation6 + $0xf0] sm:$0xff]
    %v1095 = vld [vmem:[#allocation6 + $0xf8] sm:$0xff]
    %v1096 = vld [vmem:[#allocation6 + $0x100] sm:$0xff]
    %v1097 = vld [vmem:[#allocation6 + $0x108] sm:$0xff]
    %v1098 = vld [vmem:[#allocation6 + $0x110] sm:$0xff]
    %v1099 = vld [vmem:[#allocation6 + $0x118] sm:$0xff]
    %v1100 = vld [vmem:[#allocation6 + $0x120] sm:$0xff]
    %v1101 = vld [vmem:[#allocation6 + $0x128] sm:$0xff]
    %v1102 = vld [vmem:[#allocation6 + $0x130] sm:$0xff]
    %v1103 = vld [vmem:[#allocation6 + $0x138] sm:$0xff]
    %v1104 = vld [vmem:[#allocation6 + $0x140] sm:$0xff]
    %v1105 = vld [vmem:[#allocation6 + $0x148] sm:$0xff]
    %v1106 = vld [vmem:[#allocation6 + $0x150] sm:$0xff]
    %v1107 = vld [vmem:[#allocation6 + $0x158] sm:$0xff]
    %v1108 = vld [vmem:[#allocation6 + $0x160] sm:$0xff]
    %v1109 = vld [vmem:[#allocation6 + $0x168] sm:$0xff]
    %v1110 = vld [vmem:[#allocation6 + $0x170] sm:$0xff]
    %v1111 = vld [vmem:[#allocation6 + $0x178] sm:$0xff]
    %v1112 = vld [vmem:[#allocation6 + $0x180] sm:$0xff]
    %v1113 = vld [vmem:[#allocation6 + $0x188] sm:$0xff]
    %v1114 = vld [vmem:[#allocation6 + $0x190] sm:$0xff]
    %v1115 = vld [vmem:[#allocation6 + $0x198] sm:$0xff]
    %v1116 = vld [vmem:[#allocation6 + $0x1a0] sm:$0xff]
    %v1117 = vld [vmem:[#allocation6 + $0x1a8] sm:$0xff]
    %v1118 = vld [vmem:[#allocation6 + $0x1b0] sm:$0xff]
    %v1119 = vld [vmem:[#allocation6 + $0x1b8] sm:$0xff]
    %v1120 = vld [vmem:[#allocation6 + $0x1c0] sm:$0xff]
    %v1121 = vld [vmem:[#allocation6 + $0x1c8] sm:$0xff]
    %v1122 = vld [vmem:[#allocation6 + $0x1d0] sm:$0xff]
    %v1123 = vld [vmem:[#allocation6 + $0x1d8] sm:$0xff]
    %v1124 = vld [vmem:[#allocation6 + $0x1e0] sm:$0xff]
    %v1125 = vld [vmem:[#allocation6 + $0x1e8] sm:$0xff]
    %v1126 = vld [vmem:[#allocation6 + $0x1f0] sm:$0xff]
    %v1127 = vld [vmem:[#allocation6 + $0x1f8] sm:$0xff]
    %v1128 = vld [vmem:[#allocation6 + $0x200] sm:$0xff]
    %v1129 = vld [vmem:[#allocation6 + $0x208] sm:$0xff]
    %v1130 = vld [vmem:[#allocation6 + $0x210] sm:$0xff]
    %v1131 = vld [vmem:[#allocation6 + $0x218] sm:$0xff]
    %v1132 = vld [vmem:[#allocation6 + $0x220] sm:$0xff]
    %v1133 = vld [vmem:[#allocation6 + $0x228] sm:$0xff]
    %v1134 = vld [vmem:[#allocation6 + $0x230] sm:$0xff]
    %v1135 = vld [vmem:[#allocation6 + $0x238] sm:$0xff]
    %v1136 = vld [vmem:[#allocation6 + $0x240] sm:$0xff]
    %v1137 = vld [vmem:[#allocation6 + $0x248] sm:$0xff]
    %v1138 = vld [vmem:[#allocation6 + $0x250] sm:$0xff]
    %v1139 = vld [vmem:[#allocation6 + $0x258] sm:$0xff]
    %v1140 = vld [vmem:[#allocation6 + $0x260] sm:$0xff]
    %v1141 = vld [vmem:[#allocation6 + $0x268] sm:$0xff]
    %v1142 = vld [vmem:[#allocation6 + $0x270] sm:$0xff]
    %v1143 = vld [vmem:[#allocation6 + $0x278] sm:$0xff]
    %v1144 = vld [vmem:[#allocation6 + $0x280] sm:$0xff]
    %v1145 = vld [vmem:[#allocation6 + $0x288] sm:$0xff]
    %v1146 = vld [vmem:[#allocation6 + $0x290] sm:$0xff]
    %v1147 = vld [vmem:[#allocation6 + $0x298] sm:$0xff]
    %v1148 = vld [vmem:[#allocation6 + $0x2a0] sm:$0xff]
    %v1149 = vld [vmem:[#allocation6 + $0x2a8] sm:$0xff]
    %v1150 = vld [vmem:[#allocation6 + $0x2b0] sm:$0xff]
    %v1151 = vld [vmem:[#allocation6 + $0x2b8] sm:$0xff]
    %v1152 = vld [vmem:[#allocation6 + $0x2c0] sm:$0xff]
    %v1153 = vld [vmem:[#allocation6 + $0x2c8] sm:$0xff]
    %v1154 = vld [vmem:[#allocation6 + $0x2d0] sm:$0xff]
    %v1155 = vld [vmem:[#allocation6 + $0x2d8] sm:$0xff]
    %v1156 = vld [vmem:[#allocation6 + $0x2e0] sm:$0xff]
    %v1157 = vld [vmem:[#allocation6 + $0x2e8] sm:$0xff]
    %v1158 = vld [vmem:[#allocation6 + $0x2f0] sm:$0xff]
    %v1159 = vld [vmem:[#allocation6 + $0x2f8] sm:$0xff]
    %v1160 = vld [vmem:[#allocation6 + $0x300] sm:$0xff]
    %v1161 = vld [vmem:[#allocation6 + $0x308] sm:$0xff]
    %v1162 = vld [vmem:[#allocation6 + $0x310] sm:$0xff]
    %v1163 = vld [vmem:[#allocation6 + $0x318] sm:$0xff]
    %v1164 = vld [vmem:[#allocation6 + $0x320] sm:$0xff]
    %v1165 = vld [vmem:[#allocation6 + $0x328] sm:$0xff]
    %v1166 = vld [vmem:[#allocation6 + $0x330] sm:$0xff]
    %v1167 = vld [vmem:[#allocation6 + $0x338] sm:$0xff]
    %v1168 = vld [vmem:[#allocation6 + $0x340] sm:$0xff]
    %v1169 = vld [vmem:[#allocation6 + $0x348] sm:$0xff]
    %v1170 = vld [vmem:[#allocation6 + $0x350] sm:$0xff]
    %v1171 = vld [vmem:[#allocation6 + $0x358] sm:$0xff]
    %v1172 = vld [vmem:[#allocation6 + $0x360] sm:$0xff]
    %v1173 = vld [vmem:[#allocation6 + $0x368] sm:$0xff]
    %v1174 = vld [vmem:[#allocation6 + $0x370] sm:$0xff]
    %v1175 = vld [vmem:[#allocation6 + $0x378] sm:$0xff]
    %v1176 = vld [vmem:[#allocation6 + $0x380] sm:$0xff]
    %v1177 = vld [vmem:[#allocation6 + $0x388] sm:$0xff]
    %v1178 = vld [vmem:[#allocation6 + $0x390] sm:$0xff]
    %v1179 = vld [vmem:[#allocation6 + $0x398] sm:$0xff]
    %v1180 = vld [vmem:[#allocation6 + $0x3a0] sm:$0xff]
    %v1181 = vld [vmem:[#allocation6 + $0x3a8] sm:$0xff]
    %v1182 = vld [vmem:[#allocation6 + $0x3b0] sm:$0xff]
    %v1183 = vld [vmem:[#allocation6 + $0x3b8] sm:$0xff]
    %v1184 = vld [vmem:[#allocation6 + $0x3c0] sm:$0xff]
    %v1185 = vld [vmem:[#allocation6 + $0x3c8] sm:$0xff]
    %v1186 = vld [vmem:[#allocation6 + $0x3d0] sm:$0xff]
    %v1187 = vld [vmem:[#allocation6 + $0x3d8] sm:$0xff]
    %v1188 = vld [vmem:[#allocation6 + $0x3e0] sm:$0xff]
    %v1189 = vld [vmem:[#allocation6 + $0x3e8] sm:$0xff]
    %v1190 = vld [vmem:[#allocation6 + $0x3f0] sm:$0xff]
    %v1191 = vld [vmem:[#allocation6 + $0x3f8] sm:$0xff]
    %v1192 = vld [vmem:[#allocation6 + $0x400] sm:$0xff]
    %v1193 = vld [vmem:[#allocation6 + $0x408] sm:$0xff]
    %v1194 = vld [vmem:[#allocation6 + $0x410] sm:$0xff]
    %v1195 = vld [vmem:[#allocation6 + $0x418] sm:$0xff]
    %v1196 = vld [vmem:[#allocation6 + $0x420] sm:$0xff]
    %v1197 = vld [vmem:[#allocation6 + $0x428] sm:$0xff]
    %v1198 = vld [vmem:[#allocation6 + $0x430] sm:$0xff]
    %v1199 = vld [vmem:[#allocation6 + $0x438] sm:$0xff]
    %v1200 = vld [vmem:[#allocation6 + $0x440] sm:$0xff]
    %v1201 = vld [vmem:[#allocation6 + $0x448] sm:$0xff]
    %v1202 = vld [vmem:[#allocation6 + $0x450] sm:$0xff]
    %v1203 = vld [vmem:[#allocation6 + $0x458] sm:$0xff]
    %v1204 = vld [vmem:[#allocation6 + $0x460] sm:$0xff]
    %v1205 = vld [vmem:[#allocation6 + $0x468] sm:$0xff]
    %v1206 = vld [vmem:[#allocation6 + $0x470] sm:$0xff]
    %v1207 = vld [vmem:[#allocation6 + $0x478] sm:$0xff]
    %v1208 = vld [vmem:[#allocation6 + $0x480] sm:$0xff]
    %v1209 = vld [vmem:[#allocation6 + $0x488] sm:$0xff]
    %v1210 = vld [vmem:[#allocation6 + $0x490] sm:$0xff]
    %v1211 = vld [vmem:[#allocation6 + $0x498] sm:$0xff]
    %v1212 = vld [vmem:[#allocation6 + $0x4a0] sm:$0xff]
    %v1213 = vld [vmem:[#allocation6 + $0x4a8] sm:$0xff]
    %v1214 = vld [vmem:[#allocation6 + $0x4b0] sm:$0xff]
    %v1215 = vld [vmem:[#allocation6 + $0x4b8] sm:$0xff]
    %v1216 = vld [vmem:[#allocation6 + $0x4c0] sm:$0xff]
    %v1217 = vld [vmem:[#allocation6 + $0x4c8] sm:$0xff]
    %v1218 = vld [vmem:[#allocation6 + $0x4d0] sm:$0xff]
    %v1219 = vld [vmem:[#allocation6 + $0x4d8] sm:$0xff]
    %v1220 = vld [vmem:[#allocation6 + $0x4e0] sm:$0xff]
    %v1221 = vld [vmem:[#allocation6 + $0x4e8] sm:$0xff]
    %v1222 = vld [vmem:[#allocation6 + $0x4f0] sm:$0xff]
    %v1223 = vld [vmem:[#allocation6 + $0x4f8] sm:$0xff]
    %v1224 = vld [vmem:[#allocation6 + $0x500] sm:$0xff]
    %v1225 = vld [vmem:[#allocation6 + $0x508] sm:$0xff]
    %v1226 = vld [vmem:[#allocation6 + $0x510] sm:$0xff]
    %v1227 = vld [vmem:[#allocation6 + $0x518] sm:$0xff]
    %v1228 = vld [vmem:[#allocation6 + $0x520] sm:$0xff]
    %v1229 = vld [vmem:[#allocation6 + $0x528] sm:$0xff]
    %v1230 = vld [vmem:[#allocation6 + $0x530] sm:$0xff]
    %v1231 = vld [vmem:[#allocation6 + $0x538] sm:$0xff]
    %v1232 = vld [vmem:[#allocation6 + $0x540] sm:$0xff]
    %v1233 = vld [vmem:[#allocation6 + $0x548] sm:$0xff]
    %v1234 = vld [vmem:[#allocation6 + $0x550] sm:$0xff]
    %v1235 = vld [vmem:[#allocation6 + $0x558] sm:$0xff]
    %v1236 = vld [vmem:[#allocation6 + $0x560] sm:$0xff]
    %v1237 = vld [vmem:[#allocation6 + $0x568] sm:$0xff]
    %v1238 = vld [vmem:[#allocation6 + $0x570] sm:$0xff]
    %v1239 = vld [vmem:[#allocation6 + $0x578] sm:$0xff]
    %v1240 = vld [vmem:[#allocation6 + $0x580] sm:$0xff]
    %v1241 = vld [vmem:[#allocation6 + $0x588] sm:$0xff]
    %v1242 = vld [vmem:[#allocation6 + $0x590] sm:$0xff]
    %v1243 = vld [vmem:[#allocation6 + $0x598] sm:$0xff]
    %v1244 = vld [vmem:[#allocation6 + $0x5a0] sm:$0xff]
    %v1245 = vld [vmem:[#allocation6 + $0x5a8] sm:$0xff]
    %v1246 = vld [vmem:[#allocation6 + $0x5b0] sm:$0xff]
    %v1247 = vld [vmem:[#allocation6 + $0x5b8] sm:$0xff]
    %v1248 = vld [vmem:[#allocation6 + $0x5c0] sm:$0xff]
    %v1249 = vld [vmem:[#allocation6 + $0x5c8] sm:$0xff]
    %v1250 = vld [vmem:[#allocation6 + $0x5d0] sm:$0xff]
    %v1251 = vld [vmem:[#allocation6 + $0x5d8] sm:$0xff]
    %v1252 = vld [vmem:[#allocation6 + $0x5e0] sm:$0xff]
    %v1253 = vld [vmem:[#allocation6 + $0x5e8] sm:$0xff]
    %v1254 = vld [vmem:[#allocation6 + $0x5f0] sm:$0xff]
    %v1255 = vld [vmem:[#allocation6 + $0x5f8] sm:$0xff]
    %v1256 = vld [vmem:[#allocation6 + $0x600] sm:$0xff]
    %v1257 = vld [vmem:[#allocation6 + $0x608] sm:$0xff]
    %v1258 = vld [vmem:[#allocation6 + $0x610] sm:$0xff]
    %v1259 = vld [vmem:[#allocation6 + $0x618] sm:$0xff]
    %v1260 = vld [vmem:[#allocation6 + $0x620] sm:$0xff]
    %v1261 = vld [vmem:[#allocation6 + $0x628] sm:$0xff]
    %v1262 = vld [vmem:[#allocation6 + $0x630] sm:$0xff]
    %v1263 = vld [vmem:[#allocation6 + $0x638] sm:$0xff]
    %v1264 = vld [vmem:[#allocation6 + $0x640] sm:$0xff]
    %v1265 = vld [vmem:[#allocation6 + $0x648] sm:$0xff]
    %v1266 = vld [vmem:[#allocation6 + $0x650] sm:$0xff]
    %v1267 = vld [vmem:[#allocation6 + $0x658] sm:$0xff]
    %v1268 = vld [vmem:[#allocation6 + $0x660] sm:$0xff]
    %v1269 = vld [vmem:[#allocation6 + $0x668] sm:$0xff]
    %v1270 = vld [vmem:[#allocation6 + $0x670] sm:$0xff]
    %v1271 = vld [vmem:[#allocation6 + $0x678] sm:$0xff]
    %v1272 = vld [vmem:[#allocation6 + $0x680] sm:$0xff]
    %v1273 = vld [vmem:[#allocation6 + $0x688] sm:$0xff]
    %v1274 = vld [vmem:[#allocation6 + $0x690] sm:$0xff]
    %v1275 = vld [vmem:[#allocation6 + $0x698] sm:$0xff]
    %v1276 = vld [vmem:[#allocation6 + $0x6a0] sm:$0xff]
    %v1277 = vld [vmem:[#allocation6 + $0x6a8] sm:$0xff]
    %v1278 = vld [vmem:[#allocation6 + $0x6b0] sm:$0xff]
    %v1279 = vld [vmem:[#allocation6 + $0x6b8] sm:$0xff]
    %v1280 = vld [vmem:[#allocation6 + $0x6c0] sm:$0xff]
    %v1281 = vld [vmem:[#allocation6 + $0x6c8] sm:$0xff]
    %v1282 = vld [vmem:[#allocation6 + $0x6d0] sm:$0xff]
    %v1283 = vld [vmem:[#allocation6 + $0x6d8] sm:$0xff]
    %v1284 = vld [vmem:[#allocation6 + $0x6e0] sm:$0xff]
    %v1285 = vld [vmem:[#allocation6 + $0x6e8] sm:$0xff]
    %v1286 = vld [vmem:[#allocation6 + $0x6f0] sm:$0xff]
    %v1287 = vld [vmem:[#allocation6 + $0x6f8] sm:$0xff]
    %v1288 = vld [vmem:[#allocation6 + $0x700] sm:$0xff]
    %v1289 = vld [vmem:[#allocation6 + $0x708] sm:$0xff]
    %v1290 = vld [vmem:[#allocation6 + $0x710] sm:$0xff]
    %v1291 = vld [vmem:[#allocation6 + $0x718] sm:$0xff]
    %v1292 = vld [vmem:[#allocation6 + $0x720] sm:$0xff]
    %v1293 = vld [vmem:[#allocation6 + $0x728] sm:$0xff]
    %v1294 = vld [vmem:[#allocation6 + $0x730] sm:$0xff]
    %v1295 = vld [vmem:[#allocation6 + $0x738] sm:$0xff]
    %v1296 = vld [vmem:[#allocation6 + $0x740] sm:$0xff]
    %v1297 = vld [vmem:[#allocation6 + $0x748] sm:$0xff]
    %v1298 = vld [vmem:[#allocation6 + $0x750] sm:$0xff]
    %v1299 = vld [vmem:[#allocation6 + $0x758] sm:$0xff]
    %v1300 = vld [vmem:[#allocation6 + $0x760] sm:$0xff]
    %v1301 = vld [vmem:[#allocation6 + $0x768] sm:$0xff]
    %v1302 = vld [vmem:[#allocation6 + $0x770] sm:$0xff]
    %v1303 = vld [vmem:[#allocation6 + $0x778] sm:$0xff]
    %v1304 = vld [vmem:[#allocation6 + $0x780] sm:$0xff]
    %v1305 = vld [vmem:[#allocation6 + $0x788] sm:$0xff]
    %v1306 = vld [vmem:[#allocation6 + $0x790] sm:$0xff]
    %v1307 = vld [vmem:[#allocation6 + $0x798] sm:$0xff]
    %v1308 = vld [vmem:[#allocation6 + $0x7a0] sm:$0xff]
    %v1309 = vld [vmem:[#allocation6 + $0x7a8] sm:$0xff]
    %v1310 = vld [vmem:[#allocation6 + $0x7b0] sm:$0xff]
    %v1311 = vld [vmem:[#allocation6 + $0x7b8] sm:$0xff]
    %v1312 = vld [vmem:[#allocation6 + $0x7c0] sm:$0xff]
    %v1313 = vld [vmem:[#allocation6 + $0x7c8] sm:$0xff]
    %v1314 = vld [vmem:[#allocation6 + $0x7d0] sm:$0xff]
    %v1315 = vld [vmem:[#allocation6 + $0x7d8] sm:$0xff]
    %v1316 = vld [vmem:[#allocation6 + $0x7e0] sm:$0xff]
    %v1317 = vld [vmem:[#allocation6 + $0x7e8] sm:$0xff]
    %v1318 = vld [vmem:[#allocation6 + $0x7f0] sm:$0xff]
    %v1319 = vld [vmem:[#allocation6 + $0x7f8] sm:$0xff]
    %v1320 = vld [vmem:[#allocation6 + $0x800] sm:$0xff]
    %v1321 = vld [vmem:[#allocation6 + $0x808] sm:$0xff]
    %v1322 = vld [vmem:[#allocation6 + $0x810] sm:$0xff]
    %v1323 = vld [vmem:[#allocation6 + $0x818] sm:$0xff]
    %v1324 = vld [vmem:[#allocation6 + $0x820] sm:$0xff]
    %v1325 = vld [vmem:[#allocation6 + $0x828] sm:$0xff]
    %v1326 = vld [vmem:[#allocation6 + $0x830] sm:$0xff]
    %v1327 = vld [vmem:[#allocation6 + $0x838] sm:$0xff]
    %v1328 = vld [vmem:[#allocation6 + $0x840] sm:$0xff]
    %v1329 = vld [vmem:[#allocation6 + $0x848] sm:$0xff]
    %v1330 = vld [vmem:[#allocation6 + $0x850] sm:$0xff]
    %v1331 = vld [vmem:[#allocation6 + $0x858] sm:$0xff]
    %v1332 = vld [vmem:[#allocation6 + $0x860] sm:$0xff]
    %v1333 = vld [vmem:[#allocation6 + $0x868] sm:$0xff]
    %v1334 = vld [vmem:[#allocation6 + $0x870] sm:$0xff]
    %v1335 = vld [vmem:[#allocation6 + $0x878] sm:$0xff]
    %v1336 = vld [vmem:[#allocation6 + $0x880] sm:$0xff]
    %v1337 = vld [vmem:[#allocation6 + $0x888] sm:$0xff]
    %v1338 = vld [vmem:[#allocation6 + $0x890] sm:$0xff]
    %v1339 = vld [vmem:[#allocation6 + $0x898] sm:$0xff]
    %v1340 = vld [vmem:[#allocation6 + $0x8a0] sm:$0xff]
    %v1341 = vld [vmem:[#allocation6 + $0x8a8] sm:$0xff]
    %v1342 = vld [vmem:[#allocation6 + $0x8b0] sm:$0xff]
    %v1343 = vld [vmem:[#allocation6 + $0x8b8] sm:$0xff]
    %v1344 = vld [vmem:[#allocation6 + $0x8c0] sm:$0xff]
    %v1345 = vld [vmem:[#allocation6 + $0x8c8] sm:$0xff]
    %v1346 = vld [vmem:[#allocation6 + $0x8d0] sm:$0xff]
    %v1347 = vld [vmem:[#allocation6 + $0x8d8] sm:$0xff]
    %v1348 = vld [vmem:[#allocation6 + $0x8e0] sm:$0xff]
    %v1349 = vld [vmem:[#allocation6 + $0x8e8] sm:$0xff]
    %v1350 = vld [vmem:[#allocation6 + $0x8f0] sm:$0xff]
    %v1351 = vld [vmem:[#allocation6 + $0x8f8] sm:$0xff]
    %v1352 = vld [vmem:[#allocation6 + $0x900] sm:$0xff]
    %v1353 = vld [vmem:[#allocation6 + $0x908] sm:$0xff]
    %v1354 = vld [vmem:[#allocation6 + $0x910] sm:$0xff]
    %v1355 = vld [vmem:[#allocation6 + $0x918] sm:$0xff]
    %v1356 = vld [vmem:[#allocation6 + $0x920] sm:$0xff]
    %v1357 = vld [vmem:[#allocation6 + $0x928] sm:$0xff]
    %v1358 = vld [vmem:[#allocation6 + $0x930] sm:$0xff]
    %v1359 = vld [vmem:[#allocation6 + $0x938] sm:$0xff]
    %v1360 = vld [vmem:[#allocation6 + $0x940] sm:$0xff]
    %v1361 = vld [vmem:[#allocation6 + $0x948] sm:$0xff]
    %v1362 = vld [vmem:[#allocation6 + $0x950] sm:$0xff]
    %v1363 = vld [vmem:[#allocation6 + $0x958] sm:$0xff]
    %v1364 = vld [vmem:[#allocation6 + $0x960] sm:$0xff]
    %v1365 = vld [vmem:[#allocation6 + $0x968] sm:$0xff]
    %v1366 = vld [vmem:[#allocation6 + $0x970] sm:$0xff]
    %v1367 = vld [vmem:[#allocation6 + $0x978] sm:$0xff]
    %v1368 = vld [vmem:[#allocation6 + $0x980] sm:$0xff]
    %v1369 = vld [vmem:[#allocation6 + $0x988] sm:$0xff]
    %v1370 = vld [vmem:[#allocation6 + $0x990] sm:$0xff]
    %v1371 = vld [vmem:[#allocation6 + $0x998] sm:$0xff]
    %v1372 = vld [vmem:[#allocation6 + $0x9a0] sm:$0xff]
    %v1373 = vld [vmem:[#allocation6 + $0x9a8] sm:$0xff]
    %v1374 = vld [vmem:[#allocation6 + $0x9b0] sm:$0xff]
    %v1375 = vld [vmem:[#allocation6 + $0x9b8] sm:$0xff]
    %v1376 = vld [vmem:[#allocation6 + $0x9c0] sm:$0xff]
    %v1377 = vld [vmem:[#allocation6 + $0x9c8] sm:$0xff]
    %v1378 = vld [vmem:[#allocation6 + $0x9d0] sm:$0xff]
    %v1379 = vld [vmem:[#allocation6 + $0x9d8] sm:$0xff]
    %v1380 = vld [vmem:[#allocation6 + $0x9e0] sm:$0xff]
    %v1381 = vld [vmem:[#allocation6 + $0x9e8] sm:$0xff]
    %v1382 = vld [vmem:[#allocation6 + $0x9f0] sm:$0xff]
    %v1383 = vld [vmem:[#allocation6 + $0x9f8] sm:$0xff]
    %v1384 = vld [vmem:[#allocation6 + $0xa00] sm:$0xff]
    %v1385 = vld [vmem:[#allocation6 + $0xa08] sm:$0xff]
    %v1386 = vld [vmem:[#allocation6 + $0xa10] sm:$0xff]
    %v1387 = vld [vmem:[#allocation6 + $0xa18] sm:$0xff]
    %v1388 = vld [vmem:[#allocation6 + $0xa20] sm:$0xff]
    %v1389 = vld [vmem:[#allocation6 + $0xa28] sm:$0xff]
    %v1390 = vld [vmem:[#allocation6 + $0xa30] sm:$0xff]
    %v1391 = vld [vmem:[#allocation6 + $0xa38] sm:$0xff]
    %v1392 = vld [vmem:[#allocation6 + $0xa40] sm:$0xff]
    %v1393 = vld [vmem:[#allocation6 + $0xa48] sm:$0xff]
    %v1394 = vld [vmem:[#allocation6 + $0xa50] sm:$0xff]
    %v1395 = vld [vmem:[#allocation6 + $0xa58] sm:$0xff]
    %v1396 = vld [vmem:[#allocation6 + $0xa60] sm:$0xff]
    %v1397 = vld [vmem:[#allocation6 + $0xa68] sm:$0xff]
    %v1398 = vld [vmem:[#allocation6 + $0xa70] sm:$0xff]
    %v1399 = vld [vmem:[#allocation6 + $0xa78] sm:$0xff]
    %v1400 = vld [vmem:[#allocation6 + $0xa80] sm:$0xff]
    %v1401 = vld [vmem:[#allocation6 + $0xa88] sm:$0xff]
    %v1402 = vld [vmem:[#allocation6 + $0xa90] sm:$0xff]
    %v1403 = vld [vmem:[#allocation6 + $0xa98] sm:$0xff]
    %v1404 = vld [vmem:[#allocation6 + $0xaa0] sm:$0xff]
    %v1405 = vld [vmem:[#allocation6 + $0xaa8] sm:$0xff]
    %v1406 = vld [vmem:[#allocation6 + $0xab0] sm:$0xff]
    %v1407 = vld [vmem:[#allocation6 + $0xab8] sm:$0xff]
    %v1408 = vld [vmem:[#allocation6 + $0xac0] sm:$0xff]
    %v1409 = vld [vmem:[#allocation6 + $0xac8] sm:$0xff]
    %v1410 = vld [vmem:[#allocation6 + $0xad0] sm:$0xff]
    %v1411 = vld [vmem:[#allocation6 + $0xad8] sm:$0xff]
    %v1412 = vld [vmem:[#allocation6 + $0xae0] sm:$0xff]
    %v1413 = vld [vmem:[#allocation6 + $0xae8] sm:$0xff]
    %v1414 = vld [vmem:[#allocation6 + $0xaf0] sm:$0xff]
    %v1415 = vld [vmem:[#allocation6 + $0xaf8] sm:$0xff]
    %v1416 = vld [vmem:[#allocation6 + $0xb00] sm:$0xff]
    %v1417 = vld [vmem:[#allocation6 + $0xb08] sm:$0xff]
    %v1418 = vld [vmem:[#allocation6 + $0xb10] sm:$0xff]
    %v1419 = vld [vmem:[#allocation6 + $0xb18] sm:$0xff]
    %v1420 = vld [vmem:[#allocation6 + $0xb20] sm:$0xff]
    %v1421 = vld [vmem:[#allocation6 + $0xb28] sm:$0xff]
    %v1422 = vld [vmem:[#allocation6 + $0xb30] sm:$0xff]
    %v1423 = vld [vmem:[#allocation6 + $0xb38] sm:$0xff]
    %v1424 = vld [vmem:[#allocation6 + $0xb40] sm:$0xff]
    %v1425 = vld [vmem:[#allocation6 + $0xb48] sm:$0xff]
    %v1426 = vld [vmem:[#allocation6 + $0xb50] sm:$0xff]
    %v1427 = vld [vmem:[#allocation6 + $0xb58] sm:$0xff]
    %v1428 = vld [vmem:[#allocation6 + $0xb60] sm:$0xff]
    %v1429 = vld [vmem:[#allocation6 + $0xb68] sm:$0xff]
    %v1430 = vld [vmem:[#allocation6 + $0xb70] sm:$0xff]
    %v1431 = vld [vmem:[#allocation6 + $0xb78] sm:$0xff]
    %v1432 = vld [vmem:[#allocation6 + $0xb80] sm:$0xff]
    %v1433 = vld [vmem:[#allocation6 + $0xb88] sm:$0xff]
    %v1434 = vld [vmem:[#allocation6 + $0xb90] sm:$0xff]
    %v1435 = vld [vmem:[#allocation6 + $0xb98] sm:$0xff]
    %v1436 = vld [vmem:[#allocation6 + $0xba0] sm:$0xff]
    %v1437 = vld [vmem:[#allocation6 + $0xba8] sm:$0xff]
    %v1438 = vld [vmem:[#allocation6 + $0xbb0] sm:$0xff]
    %v1439 = vld [vmem:[#allocation6 + $0xbb8] sm:$0xff]
    %v1440 = vld [vmem:[#allocation6 + $0xbc0] sm:$0xff]
    %v1441 = vld [vmem:[#allocation6 + $0xbc8] sm:$0xff]
    %v1442 = vld [vmem:[#allocation6 + $0xbd0] sm:$0xff]
    %v1443 = vld [vmem:[#allocation6 + $0xbd8] sm:$0xff]
    %v1444 = vld [vmem:[#allocation6 + $0xbe0] sm:$0xff]
    %v1445 = vld [vmem:[#allocation6 + $0xbe8] sm:$0xff]
    %v1446 = vld [vmem:[#allocation6 + $0xbf0] sm:$0xff]
    %v1447 = vld [vmem:[#allocation6 + $0xbf8] sm:$0xff]
    %v1448 = vld [vmem:[#allocation6 + $0xc00] sm:$0xff]
    %v1449 = vld [vmem:[#allocation6 + $0xc08] sm:$0xff]
    %v1450 = vld [vmem:[#allocation6 + $0xc10] sm:$0xff]
    %v1451 = vld [vmem:[#allocation6 + $0xc18] sm:$0xff]
    %v1452 = vld [vmem:[#allocation6 + $0xc20] sm:$0xff]
    %v1453 = vld [vmem:[#allocation6 + $0xc28] sm:$0xff]
    %v1454 = vld [vmem:[#allocation6 + $0xc30] sm:$0xff]
    %v1455 = vld [vmem:[#allocation6 + $0xc38] sm:$0xff]
    %v1456 = vld [vmem:[#allocation6 + $0xc40] sm:$0xff]
    %v1457 = vld [vmem:[#allocation6 + $0xc48] sm:$0xff]
    %v1458 = vld [vmem:[#allocation6 + $0xc50] sm:$0xff]
    %v1459 = vld [vmem:[#allocation6 + $0xc58] sm:$0xff]
    %v1460 = vld [vmem:[#allocation6 + $0xc60] sm:$0xff]
    %v1461 = vld [vmem:[#allocation6 + $0xc68] sm:$0xff]
    %v1462 = vld [vmem:[#allocation6 + $0xc70] sm:$0xff]
    %v1463 = vld [vmem:[#allocation6 + $0xc78] sm:$0xff]
    %v1464 = vld [vmem:[#allocation6 + $0xc80] sm:$0xff]
    %v1465 = vld [vmem:[#allocation6 + $0xc88] sm:$0xff]
    %v1466 = vld [vmem:[#allocation6 + $0xc90] sm:$0xff]
    %v1467 = vld [vmem:[#allocation6 + $0xc98] sm:$0xff]
    %v1468 = vld [vmem:[#allocation6 + $0xca0] sm:$0xff]
    %v1469 = vld [vmem:[#allocation6 + $0xca8] sm:$0xff]
    %v1470 = vld [vmem:[#allocation6 + $0xcb0] sm:$0xff]
    %v1471 = vld [vmem:[#allocation6 + $0xcb8] sm:$0xff]
    %v1472 = vld [vmem:[#allocation6 + $0xcc0] sm:$0xff]
    %v1473 = vld [vmem:[#allocation6 + $0xcc8] sm:$0xff]
    %v1474 = vld [vmem:[#allocation6 + $0xcd0] sm:$0xff]
    %v1475 = vld [vmem:[#allocation6 + $0xcd8] sm:$0xff]
    %v1476 = vld [vmem:[#allocation6 + $0xce0] sm:$0xff]
    %v1477 = vld [vmem:[#allocation6 + $0xce8] sm:$0xff]
    %v1478 = vld [vmem:[#allocation6 + $0xcf0] sm:$0xff]
    %v1479 = vld [vmem:[#allocation6 + $0xcf8] sm:$0xff]
    %v1480 = vld [vmem:[#allocation6 + $0xd00] sm:$0xff]
    %v1481 = vld [vmem:[#allocation6 + $0xd08] sm:$0xff]
    %v1482 = vld [vmem:[#allocation6 + $0xd10] sm:$0xff]
    %v1483 = vld [vmem:[#allocation6 + $0xd18] sm:$0xff]
    %v1484 = vld [vmem:[#allocation6 + $0xd20] sm:$0xff]
    %v1485 = vld [vmem:[#allocation6 + $0xd28] sm:$0xff]
    %v1486 = vld [vmem:[#allocation6 + $0xd30] sm:$0xff]
    %v1487 = vld [vmem:[#allocation6 + $0xd38] sm:$0xff]
    %v1488 = vld [vmem:[#allocation6 + $0xd40] sm:$0xff]
    %v1489 = vld [vmem:[#allocation6 + $0xd48] sm:$0xff]
    %v1490 = vld [vmem:[#allocation6 + $0xd50] sm:$0xff]
    %v1491 = vld [vmem:[#allocation6 + $0xd58] sm:$0xff]
    %v1492 = vld [vmem:[#allocation6 + $0xd60] sm:$0xff]
    %v1493 = vld [vmem:[#allocation6 + $0xd68] sm:$0xff]
    %v1494 = vld [vmem:[#allocation6 + $0xd70] sm:$0xff]
    %v1495 = vld [vmem:[#allocation6 + $0xd78] sm:$0xff]
    %v1496 = vld [vmem:[#allocation6 + $0xd80] sm:$0xff]
    %v1497 = vld [vmem:[#allocation6 + $0xd88] sm:$0xff]
    %v1498 = vld [vmem:[#allocation6 + $0xd90] sm:$0xff]
    %v1499 = vld [vmem:[#allocation6 + $0xd98] sm:$0xff]
    %v1500 = vld [vmem:[#allocation6 + $0xda0] sm:$0xff]
    %v1501 = vld [vmem:[#allocation6 + $0xda8] sm:$0xff]
    %v1502 = vld [vmem:[#allocation6 + $0xdb0] sm:$0xff]
    %v1503 = vld [vmem:[#allocation6 + $0xdb8] sm:$0xff]
    %v1504 = vld [vmem:[#allocation6 + $0xdc0] sm:$0xff]
    %v1505 = vld [vmem:[#allocation6 + $0xdc8] sm:$0xff]
    %v1506 = vld [vmem:[#allocation6 + $0xdd0] sm:$0xff]
    %v1507 = vld [vmem:[#allocation6 + $0xdd8] sm:$0xff]
    %v1508 = vld [vmem:[#allocation6 + $0xde0] sm:$0xff]
    %v1509 = vld [vmem:[#allocation6 + $0xde8] sm:$0xff]
    %v1510 = vld [vmem:[#allocation6 + $0xdf0] sm:$0xff]
    %v1511 = vld [vmem:[#allocation6 + $0xdf8] sm:$0xff]
    %v1512 = vld [vmem:[#allocation6 + $0xe00] sm:$0xff]
    %v1513 = vld [vmem:[#allocation6 + $0xe08] sm:$0xff]
    %v1514 = vld [vmem:[#allocation6 + $0xe10] sm:$0xff]
    %v1515 = vld [vmem:[#allocation6 + $0xe18] sm:$0xff]
    %v1516 = vld [vmem:[#allocation6 + $0xe20] sm:$0xff]
    %v1517 = vld [vmem:[#allocation6 + $0xe28] sm:$0xff]
    %v1518 = vld [vmem:[#allocation6 + $0xe30] sm:$0xff]
    %v1519 = vld [vmem:[#allocation6 + $0xe38] sm:$0xff]
    %v1520 = vld [vmem:[#allocation6 + $0xe40] sm:$0xff]
    %v1521 = vld [vmem:[#allocation6 + $0xe48] sm:$0xff]
    %v1522 = vld [vmem:[#allocation6 + $0xe50] sm:$0xff]
    %v1523 = vld [vmem:[#allocation6 + $0xe58] sm:$0xff]
    %v1524 = vld [vmem:[#allocation6 + $0xe60] sm:$0xff]
    %v1525 = vld [vmem:[#allocation6 + $0xe68] sm:$0xff]
    %v1526 = vld [vmem:[#allocation6 + $0xe70] sm:$0xff]
    %v1527 = vld [vmem:[#allocation6 + $0xe78] sm:$0xff]
    %v1528 = vld [vmem:[#allocation6 + $0xe80] sm:$0xff]
    %v1529 = vld [vmem:[#allocation6 + $0xe88] sm:$0xff]
    %v1530 = vld [vmem:[#allocation6 + $0xe90] sm:$0xff]
    %v1531 = vld [vmem:[#allocation6 + $0xe98] sm:$0xff]
    %v1532 = vld [vmem:[#allocation6 + $0xea0] sm:$0xff]
    %v1533 = vld [vmem:[#allocation6 + $0xea8] sm:$0xff]
    %v1534 = vld [vmem:[#allocation6 + $0xeb0] sm:$0xff]
    %v1535 = vld [vmem:[#allocation6 + $0xeb8] sm:$0xff]
    %v1536 = vld [vmem:[#allocation6 + $0xec0] sm:$0xff]
    %v1537 = vld [vmem:[#allocation6 + $0xec8] sm:$0xff]
    %v1538 = vld [vmem:[#allocation6 + $0xed0] sm:$0xff]
    %v1539 = vld [vmem:[#allocation6 + $0xed8] sm:$0xff]
    %v1540 = vld [vmem:[#allocation6 + $0xee0] sm:$0xff]
    %v1541 = vld [vmem:[#allocation6 + $0xee8] sm:$0xff]
    %v1542 = vld [vmem:[#allocation6 + $0xef0] sm:$0xff]
    %v1543 = vld [vmem:[#allocation6 + $0xef8] sm:$0xff]
    %v1544 = vld [vmem:[#allocation6 + $0xf00] sm:$0xff]
    %v1545 = vld [vmem:[#allocation6 + $0xf08] sm:$0xff]
    %v1546 = vld [vmem:[#allocation6 + $0xf10] sm:$0xff]
    %v1547 = vld [vmem:[#allocation6 + $0xf18] sm:$0xff]
    %v1548 = vld [vmem:[#allocation6 + $0xf20] sm:$0xff]
    %v1549 = vld [vmem:[#allocation6 + $0xf28] sm:$0xff]
    %v1550 = vld [vmem:[#allocation6 + $0xf30] sm:$0xff]
    %v1551 = vld [vmem:[#allocation6 + $0xf38] sm:$0xff]
    %v1552 = vld [vmem:[#allocation6 + $0xf40] sm:$0xff]
    %v1553 = vld [vmem:[#allocation6 + $0xf48] sm:$0xff]
    %v1554 = vld [vmem:[#allocation6 + $0xf50] sm:$0xff]
    %v1555 = vld [vmem:[#allocation6 + $0xf58] sm:$0xff]
    %v1556 = vld [vmem:[#allocation6 + $0xf60] sm:$0xff]
    %v1557 = vld [vmem:[#allocation6 + $0xf68] sm:$0xff]
    %v1558 = vld [vmem:[#allocation6 + $0xf70] sm:$0xff]
    %v1559 = vld [vmem:[#allocation6 + $0xf78] sm:$0xff]
    %v1560 = vld [vmem:[#allocation6 + $0xf80] sm:$0xff]
    %v1561 = vld [vmem:[#allocation6 + $0xf88] sm:$0xff]
    %v1562 = vld [vmem:[#allocation6 + $0xf90] sm:$0xff]
    %v1563 = vld [vmem:[#allocation6 + $0xf98] sm:$0xff]
    %v1564 = vld [vmem:[#allocation6 + $0xfa0] sm:$0xff]
    %v1565 = vld [vmem:[#allocation6 + $0xfa8] sm:$0xff]
    %v1566 = vld [vmem:[#allocation6 + $0xfb0] sm:$0xff]
    %v1567 = vld [vmem:[#allocation6 + $0xfb8] sm:$0xff]
    %v1568 = vld [vmem:[#allocation6 + $0xfc0] sm:$0xff]
    %v1569 = vld [vmem:[#allocation6 + $0xfc8] sm:$0xff]
    %v1570 = vld [vmem:[#allocation6 + $0xfd0] sm:$0xff]
    %v1571 = vld [vmem:[#allocation6 + $0xfd8] sm:$0xff]
    %v1572 = vld [vmem:[#allocation6 + $0xfe0] sm:$0xff]
    %v1573 = vld [vmem:[#allocation6 + $0xfe8] sm:$0xff]
    %v1574 = vld [vmem:[#allocation6 + $0xff0] sm:$0xff]
    %v1575 = vld [vmem:[#allocation6 + $0xff8] sm:$0xff]
    %v1576 = vld [vmem:[#allocation6 + $0x1000] sm:$0xff]
    %v1577 = vld [vmem:[#allocation6 + $0x1008] sm:$0xff]
    %v1578 = vld [vmem:[#allocation6 + $0x1010] sm:$0xff]
    %v1579 = vld [vmem:[#allocation6 + $0x1018] sm:$0xff]
    %v1580 = vld [vmem:[#allocation6 + $0x1020] sm:$0xff]
    %v1581 = vld [vmem:[#allocation6 + $0x1028] sm:$0xff]
    %v1582 = vld [vmem:[#allocation6 + $0x1030] sm:$0xff]
    %v1583 = vld [vmem:[#allocation6 + $0x1038] sm:$0xff]
    %v1584 = vld [vmem:[#allocation6 + $0x1040] sm:$0xff]
    %v1585 = vld [vmem:[#allocation6 + $0x1048] sm:$0xff]
    %v1586 = vld [vmem:[#allocation6 + $0x1050] sm:$0xff]
    %v1587 = vld [vmem:[#allocation6 + $0x1058] sm:$0xff]
    %v1588 = vld [vmem:[#allocation6 + $0x1060] sm:$0xff]
    %v1589 = vld [vmem:[#allocation6 + $0x1068] sm:$0xff]
    %v1590 = vld [vmem:[#allocation6 + $0x1070] sm:$0xff]
    %v1591 = vld [vmem:[#allocation6 + $0x1078] sm:$0xff]
    %v1592 = vld [vmem:[#allocation6 + $0x1080] sm:$0xff]
    %v1593 = vld [vmem:[#allocation6 + $0x1088] sm:$0xff]
    %v1594 = vld [vmem:[#allocation6 + $0x1090] sm:$0xff]
    %v1595 = vld [vmem:[#allocation6 + $0x1098] sm:$0xff]
    %v1596 = vld [vmem:[#allocation6 + $0x10a0] sm:$0xff]
    %v1597 = vld [vmem:[#allocation6 + $0x10a8] sm:$0xff]
    %v1598 = vld [vmem:[#allocation6 + $0x10b0] sm:$0xff]
    %v1599 = vld [vmem:[#allocation6 + $0x10b8] sm:$0xff]
    %v1600 = vld [vmem:[#allocation6 + $0x10c0] sm:$0xff]
    %v1601 = vld [vmem:[#allocation6 + $0x10c8] sm:$0xff]
    %v1602 = vld [vmem:[#allocation6 + $0x10d0] sm:$0xff]
    %v1603 = vld [vmem:[#allocation6 + $0x10d8] sm:$0xff]
    %v1604 = vld [vmem:[#allocation6 + $0x10e0] sm:$0xff]
    %v1605 = vld [vmem:[#allocation6 + $0x10e8] sm:$0xff]
    %v1606 = vld [vmem:[#allocation6 + $0x10f0] sm:$0xff]
    %v1607 = vld [vmem:[#allocation6 + $0x10f8] sm:$0xff]
    %v1608 = vld [vmem:[#allocation6 + $0x1100] sm:$0xff]
    %v1609 = vld [vmem:[#allocation6 + $0x1108] sm:$0xff]
    %v1610 = vld [vmem:[#allocation6 + $0x1110] sm:$0xff]
    %v1611 = vld [vmem:[#allocation6 + $0x1118] sm:$0xff]
    %v1612 = vld [vmem:[#allocation6 + $0x1120] sm:$0xff]
    %v1613 = vld [vmem:[#allocation6 + $0x1128] sm:$0xff]
    %v1614 = vld [vmem:[#allocation6 + $0x1130] sm:$0xff]
    %v1615 = vld [vmem:[#allocation6 + $0x1138] sm:$0xff]
    %v1616 = vld [vmem:[#allocation6 + $0x1140] sm:$0xff]
    %v1617 = vld [vmem:[#allocation6 + $0x1148] sm:$0xff]
    %v1618 = vld [vmem:[#allocation6 + $0x1150] sm:$0xff]
    %v1619 = vld [vmem:[#allocation6 + $0x1158] sm:$0xff]
    %v1620 = vld [vmem:[#allocation6 + $0x1160] sm:$0xff]
    %v1621 = vld [vmem:[#allocation6 + $0x1168] sm:$0xff]
    %v1622 = vld [vmem:[#allocation6 + $0x1170] sm:$0xff]
    %v1623 = vld [vmem:[#allocation6 + $0x1178] sm:$0xff]
    %v1624 = vld [vmem:[#allocation6 + $0x1180] sm:$0xff]
    %v1625 = vld [vmem:[#allocation6 + $0x1188] sm:$0xff]
    %v1626 = vld [vmem:[#allocation6 + $0x1190] sm:$0xff]
    %v1627 = vld [vmem:[#allocation6 + $0x1198] sm:$0xff]
    %v1628 = vld [vmem:[#allocation6 + $0x11a0] sm:$0xff]
    %v1629 = vld [vmem:[#allocation6 + $0x11a8] sm:$0xff]
    %v1630 = vld [vmem:[#allocation6 + $0x11b0] sm:$0xff]
    %v1631 = vld [vmem:[#allocation6 + $0x11b8] sm:$0xff]
    %v1632 = vld [vmem:[#allocation6 + $0x11c0] sm:$0xff]
    %v1633 = vld [vmem:[#allocation6 + $0x11c8] sm:$0xff]
    %v1634 = vld [vmem:[#allocation6 + $0x11d0] sm:$0xff]
    %v1635 = vld [vmem:[#allocation6 + $0x11d8] sm:$0xff]
    %v1636 = vld [vmem:[#allocation6 + $0x11e0] sm:$0xff]
    %v1637 = vld [vmem:[#allocation6 + $0x11e8] sm:$0xff]
    %v1638 = vld [vmem:[#allocation6 + $0x11f0] sm:$0xff]
    %v1639 = vld [vmem:[#allocation6 + $0x11f8] sm:$0xff]
    %v1640 = vld [vmem:[#allocation7] sm:$0x7]
    %v1642 = vlaneseq
    %v1643 = vshrl.u32 %v1642, 7
    %v1644 = vsub.s32 0, %v1643
    %v1645 = vrot.slane %v1640, %v1644
    %v1646 = vlaneseq
    %v1647 = vshrl.u32 %v1646, 7
    %v1648 = vsub.s32 1, %v1647
    %v1649 = vrot.slane %v1640, %v1648
    %v1650 = vlaneseq
    %v1651 = vshrl.u32 %v1650, 7
    %v1652 = vsub.s32 2, %v1651
    %v1653 = vrot.slane %v1640, %v1652
    %1657 = vmatprep.subr.mxu0 %v1065
    %1658 = vmatpush1.msra.mxu0 %v1064
    %1659 = vmatprep.subr.mxu0 %v1068
    %1660 = vmatpush1.msra.mxu0 %v1067
    %1661 = vmatprep.subr.mxu0 %v1071
    %1662 = vmatpush1.msra.mxu0 %v1070
    %1663 = vmatprep.subr.mxu0 %v1074
    %1664 = vmatpush1.msra.mxu0 %v1073
    %1665 = vmatprep.subr.mxu0 %v1077
    %1666 = vmatpush1.msra.mxu0 %v1076
    %1667 = vmatprep.subr.mxu0 %v1080
    %1668 = vmatpush1.msra.mxu0 %v1079
    %1669 = vmatprep.subr.mxu0 %v1083
    %1670 = vmatpush1.msra.mxu0 %v1082
    %1671 = vmatprep.subr.mxu0 %v1086
    %1672 = vmatpush1.msra.mxu0 %v1085
    %1673 = vmatprep.subr.mxu0 %v1089
    %1674 = vmatpush1.msra.mxu0 %v1088
    %1675 = vmatprep.subr.mxu0 %v1092
    %1676 = vmatpush1.msra.mxu0 %v1091
    %1677 = vmatprep.subr.mxu0 %v1095
    %1678 = vmatpush1.msra.mxu0 %v1094
    %1679 = vmatprep.subr.mxu0 %v1098
    %1680 = vmatpush1.msra.mxu0 %v1097
    %1681 = vmatprep.subr.mxu0 %v1101
    %1682 = vmatpush1.msra.mxu0 %v1100
    %1683 = vmatprep.subr.mxu0 %v1104
    %1684 = vmatpush1.msra.mxu0 %v1103
    %1685 = vmatprep.subr.mxu0 %v1107
    %1686 = vmatpush1.msra.mxu0 %v1106
    %1687 = vmatprep.subr.mxu0 %v1110
    %1688 = vmatpush1.msra.mxu0 %v1109
    %1689 = vmatprep.subr.mxu0 %v1113
    %1690 = vmatpush1.msra.mxu0 %v1112
    %1691 = vmatprep.subr.mxu0 %v1116
    %1692 = vmatpush1.msra.mxu0 %v1115
    %1693 = vmatprep.subr.mxu0 %v1119
    %1694 = vmatpush1.msra.mxu0 %v1118
    %1695 = vmatprep.subr.mxu0 %v1122
    %1696 = vmatpush1.msra.mxu0 %v1121
    %1697 = vmatprep.subr.mxu0 %v1125
    %1698 = vmatpush1.msra.mxu0 %v1124
    %1699 = vmatprep.subr.mxu0 %v1128
    %1700 = vmatpush1.msra.mxu0 %v1127
    %1701 = vmatprep.subr.mxu0 %v1131
    %1702 = vmatpush1.msra.mxu0 %v1130
    %1703 = vmatprep.subr.mxu0 %v1134
    %1704 = vmatpush1.msra.mxu0 %v1133
    %1705 = vmatprep.subr.mxu0 %v1137
    %1706 = vmatpush1.msra.mxu0 %v1136
    %1707 = vmatprep.subr.mxu0 %v1140
    %1708 = vmatpush1.msra.mxu0 %v1139
    %1709 = vmatprep.subr.mxu0 %v1143
    %1710 = vmatpush1.msra.mxu0 %v1142
    %1711 = vmatprep.subr.mxu0 %v1146
    %1712 = vmatpush1.msra.mxu0 %v1145
    %1713 = vmatprep.subr.mxu0 %v1149
    %1714 = vmatpush1.msra.mxu0 %v1148
    %1715 = vmatprep.subr.mxu0 %v1152
    %1716 = vmatpush1.msra.mxu0 %v1151
    %1717 = vmatprep.subr.mxu0 %v1155
    %1718 = vmatpush1.msra.mxu0 %v1154
    %1719 = vmatprep.subr.mxu0 %v1158
    %1720 = vmatpush1.msra.mxu0 %v1157
    %1721 = vmatprep.mubr.f32.mxu0 %v1053
    %1722 = vmatmul.mubr.f32.gmra.mrb[0].mxu0 %v1052
    %v1723 = vpop.f32.mrb[0].mxu0
    %v1724 = vadd.f32 %v1645, %v1723
    %v1725 = vpop.f32.mrb[0].mxu0
    %v1726 = vadd.f32 %v1649, %v1725
    %1727 = vdwg.mxu0
    %1728 = vmatprep.subr.mxu0 %v1161
    %1729 = vmatpush1.msra.mxu0 %v1160
    %1730 = vmatprep.subr.mxu0 %v1164
    %1731 = vmatpush1.msra.mxu0 %v1163
    %1732 = vmatprep.subr.mxu0 %v1167
    %1733 = vmatpush1.msra.mxu0 %v1166
    %1734 = vmatprep.subr.mxu0 %v1170
    %1735 = vmatpush1.msra.mxu0 %v1169
    %1736 = vmatprep.subr.mxu0 %v1173
    %1737 = vmatpush1.msra.mxu0 %v1172
    %1738 = vmatprep.subr.mxu0 %v1176
    %1739 = vmatpush1.msra.mxu0 %v1175
    %1740 = vmatprep.subr.mxu0 %v1179
    %1741 = vmatpush1.msra.mxu0 %v1178
    %1742 = vmatprep.subr.mxu0 %v1182
    %1743 = vmatpush1.msra.mxu0 %v1181
    %1744 = vmatprep.subr.mxu0 %v1185
    %1745 = vmatpush1.msra.mxu0 %v1184
    %1746 = vmatprep.subr.mxu0 %v1188
    %1747 = vmatpush1.msra.mxu0 %v1187
    %1748 = vmatprep.subr.mxu0 %v1191
    %1749 = vmatpush1.msra.mxu0 %v1190
    %1750 = vmatprep.subr.mxu0 %v1194
    %1751 = vmatpush1.msra.mxu0 %v1193
    %1752 = vmatprep.subr.mxu0 %v1197
    %1753 = vmatpush1.msra.mxu0 %v1196
    %1754 = vmatprep.subr.mxu0 %v1200
    %1755 = vmatpush1.msra.mxu0 %v1199
    %1756 = vmatprep.subr.mxu0 %v1203
    %1757 = vmatpush1.msra.mxu0 %v1202
    %1758 = vmatprep.subr.mxu0 %v1206
    %1759 = vmatpush1.msra.mxu0 %v1205
    %1760 = vmatprep.subr.mxu0 %v1209
    %1761 = vmatpush1.msra.mxu0 %v1208
    %1762 = vmatprep.subr.mxu0 %v1212
    %1763 = vmatpush1.msra.mxu0 %v1211
    %1764 = vmatprep.subr.mxu0 %v1215
    %1765 = vmatpush1.msra.mxu0 %v1214
    %1766 = vmatprep.subr.mxu0 %v1218
    %1767 = vmatpush1.msra.mxu0 %v1217
    %1768 = vmatprep.subr.mxu0 %v1221
    %1769 = vmatpush1.msra.mxu0 %v1220
    %1770 = vmatprep.subr.mxu0 %v1224
    %1771 = vmatpush1.msra.mxu0 %v1223
    %1772 = vmatprep.subr.mxu0 %v1227
    %1773 = vmatpush1.msra.mxu0 %v1226
    %1774 = vmatprep.subr.mxu0 %v1230
    %1775 = vmatpush1.msra.mxu0 %v1229
    %1776 = vmatprep.subr.mxu0 %v1233
    %1777 = vmatpush1.msra.mxu0 %v1232
    %1778 = vmatprep.subr.mxu0 %v1236
    %1779 = vmatpush1.msra.mxu0 %v1235
    %1780 = vmatprep.subr.mxu0 %v1239
    %1781 = vmatpush1.msra.mxu0 %v1238
    %1782 = vmatprep.subr.mxu0 %v1242
    %1783 = vmatpush1.msra.mxu0 %v1241
    %1784 = vmatprep.subr.mxu0 %v1245
    %1785 = vmatpush1.msra.mxu0 %v1244
    %1786 = vmatprep.subr.mxu0 %v1248
    %1787 = vmatpush1.msra.mxu0 %v1247
    %1788 = vmatprep.subr.mxu0 %v1251
    %1789 = vmatpush1.msra.mxu0 %v1250
    %1790 = vmatprep.subr.mxu0 %v1254
    %1791 = vmatpush1.msra.mxu0 %v1253
    %1792 = vmatprep.mubr.f32.mxu0 %v1055
    %1793 = vmatmul.mubr.f32.gmra.mrb[0].mxu0 %v1054
    %v1794 = vpop.f32.mrb[0].mxu0
    %v1795 = vadd.f32 %v1724, %v1794
    %v1796 = vpop.f32.mrb[0].mxu0
    %v1797 = vadd.f32 %v1726, %v1796
    %1798 = vdwg.mxu0
    %1799 = vmatprep.subr.mxu0 %v1257
    %1800 = vmatpush1.msra.mxu0 %v1256
    %1801 = vmatprep.subr.mxu0 %v1260
    %1802 = vmatpush1.msra.mxu0 %v1259
    %1803 = vmatprep.subr.mxu0 %v1263
    %1804 = vmatpush1.msra.mxu0 %v1262
    %1805 = vmatprep.subr.mxu0 %v1266
    %1806 = vmatpush1.msra.mxu0 %v1265
    %1807 = vmatprep.subr.mxu0 %v1269
    %1808 = vmatpush1.msra.mxu0 %v1268
    %1809 = vmatprep.subr.mxu0 %v1272
    %1810 = vmatpush1.msra.mxu0 %v1271
    %1811 = vmatprep.subr.mxu0 %v1275
    %1812 = vmatpush1.msra.mxu0 %v1274
    %1813 = vmatprep.subr.mxu0 %v1278
    %1814 = vmatpush1.msra.mxu0 %v1277
    %1815 = vmatprep.subr.mxu0 %v1281
    %1816 = vmatpush1.msra.mxu0 %v1280
    %1817 = vmatprep.subr.mxu0 %v1284
    %1818 = vmatpush1.msra.mxu0 %v1283
    %1819 = vmatprep.subr.mxu0 %v1287
    %1820 = vmatpush1.msra.mxu0 %v1286
    %1821 = vmatprep.subr.mxu0 %v1290
    %1822 = vmatpush1.msra.mxu0 %v1289
    %1823 = vmatprep.subr.mxu0 %v1293
    %1824 = vmatpush1.msra.mxu0 %v1292
    %1825 = vmatprep.subr.mxu0 %v1296
    %1826 = vmatpush1.msra.mxu0 %v1295
    %1827 = vmatprep.subr.mxu0 %v1299
    %1828 = vmatpush1.msra.mxu0 %v1298
    %1829 = vmatprep.subr.mxu0 %v1302
    %1830 = vmatpush1.msra.mxu0 %v1301
    %1831 = vmatprep.subr.mxu0 %v1305
    %1832 = vmatpush1.msra.mxu0 %v1304
    %1833 = vmatprep.subr.mxu0 %v1308
    %1834 = vmatpush1.msra.mxu0 %v1307
    %1835 = vmatprep.subr.mxu0 %v1311
    %1836 = vmatpush1.msra.mxu0 %v1310
    %1837 = vmatprep.subr.mxu0 %v1314
    %1838 = vmatpush1.msra.mxu0 %v1313
    %1839 = vmatprep.subr.mxu0 %v1317
    %1840 = vmatpush1.msra.mxu0 %v1316
    %1841 = vmatprep.subr.mxu0 %v1320
    %1842 = vmatpush1.msra.mxu0 %v1319
    %1843 = vmatprep.subr.mxu0 %v1323
    %1844 = vmatpush1.msra.mxu0 %v1322
    %1845 = vmatprep.subr.mxu0 %v1326
    %1846 = vmatpush1.msra.mxu0 %v1325
    %1847 = vmatprep.subr.mxu0 %v1329
    %1848 = vmatpush1.msra.mxu0 %v1328
    %1849 = vmatprep.subr.mxu0 %v1332
    %1850 = vmatpush1.msra.mxu0 %v1331
    %1851 = vmatprep.subr.mxu0 %v1335
    %1852 = vmatpush1.msra.mxu0 %v1334
    %1853 = vmatprep.subr.mxu0 %v1338
    %1854 = vmatpush1.msra.mxu0 %v1337
    %1855 = vmatprep.subr.mxu0 %v1341
    %1856 = vmatpush1.msra.mxu0 %v1340
    %1857 = vmatprep.subr.mxu0 %v1344
    %1858 = vmatpush1.msra.mxu0 %v1343
    %1859 = vmatprep.subr.mxu0 %v1347
    %1860 = vmatpush1.msra.mxu0 %v1346
    %1861 = vmatprep.subr.mxu0 %v1350
    %1862 = vmatpush1.msra.mxu0 %v1349
    %1863 = vmatprep.mubr.f32.mxu0 %v1057
    %1864 = vmatmul.mubr.f32.gmra.mrb[0].mxu0 %v1056
    %v1865 = vpop.f32.mrb[0].mxu0
    %v1866 = vadd.f32 %v1795, %v1865
    %v1867 = vpop.f32.mrb[0].mxu0
    %v1868 = vadd.f32 %v1797, %v1867
    %1869 = vdwg.mxu0
    %1870 = vmatprep.subr.mxu0 %v1353
    %1871 = vmatpush1.msra.mxu0 %v1352
    %1872 = vmatprep.subr.mxu0 %v1356
    %1873 = vmatpush1.msra.mxu0 %v1355
    %1874 = vmatprep.subr.mxu0 %v1359
    %1875 = vmatpush1.msra.mxu0 %v1358
    %1876 = vmatprep.subr.mxu0 %v1362
    %1877 = vmatpush1.msra.mxu0 %v1361
    %1878 = vmatprep.subr.mxu0 %v1365
    %1879 = vmatpush1.msra.mxu0 %v1364
    %1880 = vmatprep.subr.mxu0 %v1368
    %1881 = vmatpush1.msra.mxu0 %v1367
    %1882 = vmatprep.subr.mxu0 %v1371
    %1883 = vmatpush1.msra.mxu0 %v1370
    %1884 = vmatprep.subr.mxu0 %v1374
    %1885 = vmatpush1.msra.mxu0 %v1373
    %1886 = vmatprep.subr.mxu0 %v1377
    %1887 = vmatpush1.msra.mxu0 %v1376
    %1888 = vmatprep.subr.mxu0 %v1380
    %1889 = vmatpush1.msra.mxu0 %v1379
    %1890 = vmatprep.subr.mxu0 %v1383
    %1891 = vmatpush1.msra.mxu0 %v1382
    %1892 = vmatprep.subr.mxu0 %v1386
    %1893 = vmatpush1.msra.mxu0 %v1385
    %1894 = vmatprep.subr.mxu0 %v1389
    %1895 = vmatpush1.msra.mxu0 %v1388
    %1896 = vmatprep.subr.mxu0 %v1392
    %1897 = vmatpush1.msra.mxu0 %v1391
    %1898 = vmatprep.subr.mxu0 %v1395
    %1899 = vmatpush1.msra.mxu0 %v1394
    %1900 = vmatprep.subr.mxu0 %v1398
    %1901 = vmatpush1.msra.mxu0 %v1397
    %1902 = vmatprep.subr.mxu0 %v1401
    %1903 = vmatpush1.msra.mxu0 %v1400
    %1904 = vmatprep.subr.mxu0 %v1404
    %1905 = vmatpush1.msra.mxu0 %v1403
    %1906 = vmatprep.subr.mxu0 %v1407
    %1907 = vmatpush1.msra.mxu0 %v1406
    %1908 = vmatprep.subr.mxu0 %v1410
    %1909 = vmatpush1.msra.mxu0 %v1409
    %1910 = vmatprep.subr.mxu0 %v1413
    %1911 = vmatpush1.msra.mxu0 %v1412
    %1912 = vmatprep.subr.mxu0 %v1416
    %1913 = vmatpush1.msra.mxu0 %v1415
    %1914 = vmatprep.subr.mxu0 %v1419
    %1915 = vmatpush1.msra.mxu0 %v1418
    %1916 = vmatprep.subr.mxu0 %v1422
    %1917 = vmatpush1.msra.mxu0 %v1421
    %1918 = vmatprep.subr.mxu0 %v1425
    %1919 = vmatpush1.msra.mxu0 %v1424
    %1920 = vmatprep.subr.mxu0 %v1428
    %1921 = vmatpush1.msra.mxu0 %v1427
    %1922 = vmatprep.subr.mxu0 %v1431
    %1923 = vmatpush1.msra.mxu0 %v1430
    %1924 = vmatprep.subr.mxu0 %v1434
    %1925 = vmatpush1.msra.mxu0 %v1433
    %1926 = vmatprep.subr.mxu0 %v1437
    %1927 = vmatpush1.msra.mxu0 %v1436
    %1928 = vmatprep.subr.mxu0 %v1440
    %1929 = vmatpush1.msra.mxu0 %v1439
    %1930 = vmatprep.subr.mxu0 %v1443
    %1931 = vmatpush1.msra.mxu0 %v1442
    %1932 = vmatprep.subr.mxu0 %v1446
    %1933 = vmatpush1.msra.mxu0 %v1445
    %1934 = vmatprep.mubr.f32.mxu0 %v1059
    %1935 = vmatmul.mubr.f32.gmra.mrb[0].mxu0 %v1058
    %v1936 = vpop.f32.mrb[0].mxu0
    %v1937 = vadd.f32 %v1866, %v1936
    %v1938 = vpop.f32.mrb[0].mxu0
    %v1939 = vadd.f32 %v1868, %v1938
    %1940 = vdwg.mxu0
    %1941 = vmatprep.subr.mxu0 %v1449
    %1942 = vmatpush1.msra.mxu0 %v1448
    %1943 = vmatprep.subr.mxu0 %v1452
    %1944 = vmatpush1.msra.mxu0 %v1451
    %1945 = vmatprep.subr.mxu0 %v1455
    %1946 = vmatpush1.msra.mxu0 %v1454
    %1947 = vmatprep.subr.mxu0 %v1458
    %1948 = vmatpush1.msra.mxu0 %v1457
    %1949 = vmatprep.subr.mxu0 %v1461
    %1950 = vmatpush1.msra.mxu0 %v1460
    %1951 = vmatprep.subr.mxu0 %v1464
    %1952 = vmatpush1.msra.mxu0 %v1463
    %1953 = vmatprep.subr.mxu0 %v1467
    %1954 = vmatpush1.msra.mxu0 %v1466
    %1955 = vmatprep.subr.mxu0 %v1470
    %1956 = vmatpush1.msra.mxu0 %v1469
    %1957 = vmatprep.subr.mxu0 %v1473
    %1958 = vmatpush1.msra.mxu0 %v1472
    %1959 = vmatprep.subr.mxu0 %v1476
    %1960 = vmatpush1.msra.mxu0 %v1475
    %1961 = vmatprep.subr.mxu0 %v1479
    %1962 = vmatpush1.msra.mxu0 %v1478
    %1963 = vmatprep.subr.mxu0 %v1482
    %1964 = vmatpush1.msra.mxu0 %v1481
    %1965 = vmatprep.subr.mxu0 %v1485
    %1966 = vmatpush1.msra.mxu0 %v1484
    %1967 = vmatprep.subr.mxu0 %v1488
    %1968 = vmatpush1.msra.mxu0 %v1487
    %1969 = vmatprep.subr.mxu0 %v1491
    %1970 = vmatpush1.msra.mxu0 %v1490
    %1971 = vmatprep.subr.mxu0 %v1494
    %1972 = vmatpush1.msra.mxu0 %v1493
    %1973 = vmatprep.subr.mxu0 %v1497
    %1974 = vmatpush1.msra.mxu0 %v1496
    %1975 = vmatprep.subr.mxu0 %v1500
    %1976 = vmatpush1.msra.mxu0 %v1499
    %1977 = vmatprep.subr.mxu0 %v1503
    %1978 = vmatpush1.msra.mxu0 %v1502
    %1979 = vmatprep.subr.mxu0 %v1506
    %1980 = vmatpush1.msra.mxu0 %v1505
    %1981 = vmatprep.subr.mxu0 %v1509
    %1982 = vmatpush1.msra.mxu0 %v1508
    %1983 = vmatprep.subr.mxu0 %v1512
    %1984 = vmatpush1.msra.mxu0 %v1511
    %1985 = vmatprep.subr.mxu0 %v1515
    %1986 = vmatpush1.msra.mxu0 %v1514
    %1987 = vmatprep.subr.mxu0 %v1518
    %1988 = vmatpush1.msra.mxu0 %v1517
    %1989 = vmatprep.subr.mxu0 %v1521
    %1990 = vmatpush1.msra.mxu0 %v1520
    %1991 = vmatprep.subr.mxu0 %v1524
    %1992 = vmatpush1.msra.mxu0 %v1523
    %1993 = vmatprep.subr.mxu0 %v1527
    %1994 = vmatpush1.msra.mxu0 %v1526
    %1995 = vmatprep.subr.mxu0 %v1530
    %1996 = vmatpush1.msra.mxu0 %v1529
    %1997 = vmatprep.subr.mxu0 %v1533
    %1998 = vmatpush1.msra.mxu0 %v1532
    %1999 = vmatprep.subr.mxu0 %v1536
    %2000 = vmatpush1.msra.mxu0 %v1535
    %2001 = vmatprep.subr.mxu0 %v1539
    %2002 = vmatpush1.msra.mxu0 %v1538
    %2003 = vmatprep.subr.mxu0 %v1542
    %2004 = vmatpush1.msra.mxu0 %v1541
    %2005 = vmatprep.mubr.f32.mxu0 %v1061
    %2006 = vmatmul.mubr.f32.gmra.mrb[0].mxu0 %v1060
    %v2007 = vpop.f32.mrb[0].mxu0
    %v2008 = vadd.f32 %v1937, %v2007
    %v2009 = vpop.f32.mrb[0].mxu0
    %v2010 = vadd.f32 %v1939, %v2009
    %2011 = vdwg.mxu0
    %2012 = vmatprep.subr.mxu0 %v1545
    %2013 = vmatpush1.msra.mxu0 %v1544
    %2014 = vmatprep.subr.mxu0 %v1548
    %2015 = vmatpush1.msra.mxu0 %v1547
    %2016 = vmatprep.subr.mxu0 %v1551
    %2017 = vmatpush1.msra.mxu0 %v1550
    %2018 = vmatprep.subr.mxu0 %v1554
    %2019 = vmatpush1.msra.mxu0 %v1553
    %2020 = vmatprep.subr.mxu0 %v1557
    %2021 = vmatpush1.msra.mxu0 %v1556
    %2022 = vmatprep.subr.mxu0 %v1560
    %2023 = vmatpush1.msra.mxu0 %v1559
    %2024 = vmatprep.subr.mxu0 %v1563
    %2025 = vmatpush1.msra.mxu0 %v1562
    %2026 = vmatprep.subr.mxu0 %v1566
    %2027 = vmatpush1.msra.mxu0 %v1565
    %2028 = vmatprep.subr.mxu0 %v1569
    %2029 = vmatpush1.msra.mxu0 %v1568
    %2030 = vmatprep.subr.mxu0 %v1572
    %2031 = vmatpush1.msra.mxu0 %v1571
    %2032 = vmatprep.subr.mxu0 %v1575
    %2033 = vmatpush1.msra.mxu0 %v1574
    %2034 = vmatprep.subr.mxu0 %v1578
    %2035 = vmatpush1.msra.mxu0 %v1577
    %2036 = vmatprep.subr.mxu0 %v1581
    %2037 = vmatpush1.msra.mxu0 %v1580
    %2038 = vmatprep.subr.mxu0 %v1584
    %2039 = vmatpush1.msra.mxu0 %v1583
    %2040 = vmatprep.subr.mxu0 %v1587
    %2041 = vmatpush1.msra.mxu0 %v1586
    %2042 = vmatprep.subr.mxu0 %v1590
    %2043 = vmatpush1.msra.mxu0 %v1589
    %2044 = vmatprep.subr.mxu0 %v1593
    %2045 = vmatpush1.msra.mxu0 %v1592
    %2046 = vmatprep.subr.mxu0 %v1596
    %2047 = vmatpush1.msra.mxu0 %v1595
    %2048 = vmatprep.subr.mxu0 %v1599
    %2049 = vmatpush1.msra.mxu0 %v1598
    %2050 = vmatprep.subr.mxu0 %v1602
    %2051 = vmatpush1.msra.mxu0 %v1601
    %2052 = vmatprep.subr.mxu0 %v1605
    %2053 = vmatpush1.msra.mxu0 %v1604
    %2054 = vmatprep.subr.mxu0 %v1608
    %2055 = vmatpush1.msra.mxu0 %v1607
    %2056 = vmatprep.subr.mxu0 %v1611
    %2057 = vmatpush1.msra.mxu0 %v1610
    %2058 = vmatprep.subr.mxu0 %v1614
    %2059 = vmatpush1.msra.mxu0 %v1613
    %2060 = vmatprep.subr.mxu0 %v1617
    %2061 = vmatpush1.msra.mxu0 %v1616
    %2062 = vmatprep.subr.mxu0 %v1620
    %2063 = vmatpush1.msra.mxu0 %v1619
    %2064 = vmatprep.subr.mxu0 %v1623
    %2065 = vmatpush1.msra.mxu0 %v1622
    %2066 = vmatprep.subr.mxu0 %v1626
    %2067 = vmatpush1.msra.mxu0 %v1625
    %2068 = vmatprep.subr.mxu0 %v1629
    %2069 = vmatpush1.msra.mxu0 %v1628
    %2070 = vmatprep.subr.mxu0 %v1632
    %2071 = vmatpush1.msra.mxu0 %v1631
    %2072 = vmatprep.subr.mxu0 %v1635
    %2073 = vmatpush1.msra.mxu0 %v1634
    %2074 = vmatprep.subr.mxu0 %v1638
    %2075 = vmatpush1.msra.mxu0 %v1637
    %2076 = vmatprep.mubr.f32.mxu0 %v1063
    %2077 = vmatmul.mubr.f32.gmra.mrb[0].mxu0 %v1062
    %v2078 = vpop.f32.mrb[0].mxu0
    %v2079 = vadd.f32 %v2008, %v2078
    %v2080 = vpop.f32.mrb[0].mxu0
    %v2081 = vadd.f32 %v2010, %v2080
    %2082 = vdwg.mxu0
    %2083 = vmatprep.subr.mxu0 0.0
    %2084 = vmatpush1.msra.mxu0 %v1066
    %2085 = vmatprep.subr.mxu0 0.0
    %2086 = vmatpush1.msra.mxu0 %v1069
    %2087 = vmatprep.subr.mxu0 0.0
    %2088 = vmatpush1.msra.mxu0 %v1072
    %2089 = vmatprep.subr.mxu0 0.0
    %2090 = vmatpush1.msra.mxu0 %v1075
    %2091 = vmatprep.subr.mxu0 0.0
    %2092 = vmatpush1.msra.mxu0 %v1078
    %2093 = vmatprep.subr.mxu0 0.0
    %2094 = vmatpush1.msra.mxu0 %v1081
    %2095 = vmatprep.subr.mxu0 0.0
    %2096 = vmatpush1.msra.mxu0 %v1084
    %2097 = vmatprep.subr.mxu0 0.0
    %2098 = vmatpush1.msra.mxu0 %v1087
    %2099 = vmatprep.subr.mxu0 0.0
    %2100 = vmatpush1.msra.mxu0 %v1090
    %2101 = vmatprep.subr.mxu0 0.0
    %2102 = vmatpush1.msra.mxu0 %v1093
    %2103 = vmatprep.subr.mxu0 0.0
    %2104 = vmatpush1.msra.mxu0 %v1096
    %2105 = vmatprep.subr.mxu0 0.0
    %2106 = vmatpush1.msra.mxu0 %v1099
    %2107 = vmatprep.subr.mxu0 0.0
    %2108 = vmatpush1.msra.mxu0 %v1102
    %2109 = vmatprep.subr.mxu0 0.0
    %2110 = vmatpush1.msra.mxu0 %v1105
    %2111 = vmatprep.subr.mxu0 0.0
    %2112 = vmatpush1.msra.mxu0 %v1108
    %2113 = vmatprep.subr.mxu0 0.0
    %2114 = vmatpush1.msra.mxu0 %v1111
    %2115 = vmatprep.subr.mxu0 0.0
    %2116 = vmatpush1.msra.mxu0 %v1114
    %2117 = vmatprep.subr.mxu0 0.0
    %2118 = vmatpush1.msra.mxu0 %v1117
    %2119 = vmatprep.subr.mxu0 0.0
    %2120 = vmatpush1.msra.mxu0 %v1120
    %2121 = vmatprep.subr.mxu0 0.0
    %2122 = vmatpush1.msra.mxu0 %v1123
    %2123 = vmatprep.subr.mxu0 0.0
    %2124 = vmatpush1.msra.mxu0 %v1126
    %2125 = vmatprep.subr.mxu0 0.0
    %2126 = vmatpush1.msra.mxu0 %v1129
    %2127 = vmatprep.subr.mxu0 0.0
    %2128 = vmatpush1.msra.mxu0 %v1132
    %2129 = vmatprep.subr.mxu0 0.0
    %2130 = vmatpush1.msra.mxu0 %v1135
    %2131 = vmatprep.subr.mxu0 0.0
    %2132 = vmatpush1.msra.mxu0 %v1138
    %2133 = vmatprep.subr.mxu0 0.0
    %2134 = vmatpush1.msra.mxu0 %v1141
    %2135 = vmatprep.subr.mxu0 0.0
    %2136 = vmatpush1.msra.mxu0 %v1144
    %2137 = vmatprep.subr.mxu0 0.0
    %2138 = vmatpush1.msra.mxu0 %v1147
    %2139 = vmatprep.subr.mxu0 0.0
    %2140 = vmatpush1.msra.mxu0 %v1150
    %2141 = vmatprep.subr.mxu0 0.0
    %2142 = vmatpush1.msra.mxu0 %v1153
    %2143 = vmatprep.subr.mxu0 0.0
    %2144 = vmatpush1.msra.mxu0 %v1156
    %2145 = vmatprep.subr.mxu0 0.0
    %2146 = vmatpush1.msra.mxu0 %v1159
    %2147 = vmatprep.mubr.f32.mxu0 %v1053
    %2148 = vmatmul.mubr.f32.gmra.mrb[0].mxu0 %v1052
    %v2149 = vpop.f32.mrb[0].mxu0
    %v2150 = vadd.f32 %v1653, %v2149
    %v2151 = vpop.f32.mrb[0].mxu0
    %2152 = vdwg.mxu0
    %2153 = vmatprep.subr.mxu0 0.0
    %2154 = vmatpush1.msra.mxu0 %v1162
    %2155 = vmatprep.subr.mxu0 0.0
    %2156 = vmatpush1.msra.mxu0 %v1165
    %2157 = vmatprep.subr.mxu0 0.0
    %2158 = vmatpush1.msra.mxu0 %v1168
    %2159 = vmatprep.subr.mxu0 0.0
    %2160 = vmatpush1.msra.mxu0 %v1171
    %2161 = vmatprep.subr.mxu0 0.0
    %2162 = vmatpush1.msra.mxu0 %v1174
    %2163 = vmatprep.subr.mxu0 0.0
    %2164 = vmatpush1.msra.mxu0 %v1177
    %2165 = vmatprep.subr.mxu0 0.0
    %2166 = vmatpush1.msra.mxu0 %v1180
    %2167 = vmatprep.subr.mxu0 0.0
    %2168 = vmatpush1.msra.mxu0 %v1183
    %2169 = vmatprep.subr.mxu0 0.0
    %2170 = vmatpush1.msra.mxu0 %v1186
    %2171 = vmatprep.subr.mxu0 0.0
    %2172 = vmatpush1.msra.mxu0 %v1189
    %2173 = vmatprep.subr.mxu0 0.0
    %2174 = vmatpush1.msra.mxu0 %v1192
    %2175 = vmatprep.subr.mxu0 0.0
    %2176 = vmatpush1.msra.mxu0 %v1195
    %2177 = vmatprep.subr.mxu0 0.0
    %2178 = vmatpush1.msra.mxu0 %v1198
    %2179 = vmatprep.subr.mxu0 0.0
    %2180 = vmatpush1.msra.mxu0 %v1201
    %2181 = vmatprep.subr.mxu0 0.0
    %2182 = vmatpush1.msra.mxu0 %v1204
    %2183 = vmatprep.subr.mxu0 0.0
    %2184 = vmatpush1.msra.mxu0 %v1207
    %2185 = vmatprep.subr.mxu0 0.0
    %2186 = vmatpush1.msra.mxu0 %v1210
    %2187 = vmatprep.subr.mxu0 0.0
    %2188 = vmatpush1.msra.mxu0 %v1213
    %2189 = vmatprep.subr.mxu0 0.0
    %2190 = vmatpush1.msra.mxu0 %v1216
    %2191 = vmatprep.subr.mxu0 0.0
    %2192 = vmatpush1.msra.mxu0 %v1219
    %2193 = vmatprep.subr.mxu0 0.0
    %2194 = vmatpush1.msra.mxu0 %v1222
    %2195 = vmatprep.subr.mxu0 0.0
    %2196 = vmatpush1.msra.mxu0 %v1225
    %2197 = vmatprep.subr.mxu0 0.0
    %2198 = vmatpush1.msra.mxu0 %v1228
    %2199 = vmatprep.subr.mxu0 0.0
    %2200 = vmatpush1.msra.mxu0 %v1231
    %2201 = vmatprep.subr.mxu0 0.0
    %2202 = vmatpush1.msra.mxu0 %v1234
    %2203 = vmatprep.subr.mxu0 0.0
    %2204 = vmatpush1.msra.mxu0 %v1237
    %2205 = vmatprep.subr.mxu0 0.0
    %2206 = vmatpush1.msra.mxu0 %v1240
    %2207 = vmatprep.subr.mxu0 0.0
    %2208 = vmatpush1.msra.mxu0 %v1243
    %2209 = vmatprep.subr.mxu0 0.0
    %2210 = vmatpush1.msra.mxu0 %v1246
    %2211 = vmatprep.subr.mxu0 0.0
    %2212 = vmatpush1.msra.mxu0 %v1249
    %2213 = vmatprep.subr.mxu0 0.0
    %2214 = vmatpush1.msra.mxu0 %v1252
    %2215 = vmatprep.subr.mxu0 0.0
    %2216 = vmatpush1.msra.mxu0 %v1255
    %2217 = vmatprep.mubr.f32.mxu0 %v1055
    %2218 = vmatmul.mubr.f32.gmra.mrb[0].mxu0 %v1054
    %v2219 = vpop.f32.mrb[0].mxu0
    %v2220 = vadd.f32 %v2150, %v2219
    %v2221 = vpop.f32.mrb[0].mxu0
    %2222 = vdwg.mxu0
    %2223 = vmatprep.subr.mxu0 0.0
    %2224 = vmatpush1.msra.mxu0 %v1258
    %2225 = vmatprep.subr.mxu0 0.0
    %2226 = vmatpush1.msra.mxu0 %v1261
    %2227 = vmatprep.subr.mxu0 0.0
    %2228 = vmatpush1.msra.mxu0 %v1264
    %2229 = vmatprep.subr.mxu0 0.0
    %2230 = vmatpush1.msra.mxu0 %v1267
    %2231 = vmatprep.subr.mxu0 0.0
    %2232 = vmatpush1.msra.mxu0 %v1270
    %2233 = vmatprep.subr.mxu0 0.0
    %2234 = vmatpush1.msra.mxu0 %v1273
    %2235 = vmatprep.subr.mxu0 0.0
    %2236 = vmatpush1.msra.mxu0 %v1276
    %2237 = vmatprep.subr.mxu0 0.0
    %2238 = vmatpush1.msra.mxu0 %v1279
    %2239 = vmatprep.subr.mxu0 0.0
    %2240 = vmatpush1.msra.mxu0 %v1282
    %2241 = vmatprep.subr.mxu0 0.0
    %2242 = vmatpush1.msra.mxu0 %v1285
    %2243 = vmatprep.subr.mxu0 0.0
    %2244 = vmatpush1.msra.mxu0 %v1288
    %2245 = vmatprep.subr.mxu0 0.0
    %2246 = vmatpush1.msra.mxu0 %v1291
    %2247 = vmatprep.subr.mxu0 0.0
    %2248 = vmatpush1.msra.mxu0 %v1294
    %2249 = vmatprep.subr.mxu0 0.0
    %2250 = vmatpush1.msra.mxu0 %v1297
    %2251 = vmatprep.subr.mxu0 0.0
    %2252 = vmatpush1.msra.mxu0 %v1300
    %2253 = vmatprep.subr.mxu0 0.0
    %2254 = vmatpush1.msra.mxu0 %v1303
    %2255 = vmatprep.subr.mxu0 0.0
    %2256 = vmatpush1.msra.mxu0 %v1306
    %2257 = vmatprep.subr.mxu0 0.0
    %2258 = vmatpush1.msra.mxu0 %v1309
    %2259 = vmatprep.subr.mxu0 0.0
    %2260 = vmatpush1.msra.mxu0 %v1312
    %2261 = vmatprep.subr.mxu0 0.0
    %2262 = vmatpush1.msra.mxu0 %v1315
    %2263 = vmatprep.subr.mxu0 0.0
    %2264 = vmatpush1.msra.mxu0 %v1318
    %2265 = vmatprep.subr.mxu0 0.0
    %2266 = vmatpush1.msra.mxu0 %v1321
    %2267 = vmatprep.subr.mxu0 0.0
    %2268 = vmatpush1.msra.mxu0 %v1324
    %2269 = vmatprep.subr.mxu0 0.0
    %2270 = vmatpush1.msra.mxu0 %v1327
    %2271 = vmatprep.subr.mxu0 0.0
    %2272 = vmatpush1.msra.mxu0 %v1330
    %2273 = vmatprep.subr.mxu0 0.0
    %2274 = vmatpush1.msra.mxu0 %v1333
    %2275 = vmatprep.subr.mxu0 0.0
    %2276 = vmatpush1.msra.mxu0 %v1336
    %2277 = vmatprep.subr.mxu0 0.0
    %2278 = vmatpush1.msra.mxu0 %v1339
    %2279 = vmatprep.subr.mxu0 0.0
    %2280 = vmatpush1.msra.mxu0 %v1342
    %2281 = vmatprep.subr.mxu0 0.0
    %2282 = vmatpush1.msra.mxu0 %v1345
    %2283 = vmatprep.subr.mxu0 0.0
    %2284 = vmatpush1.msra.mxu0 %v1348
    %2285 = vmatprep.subr.mxu0 0.0
    %2286 = vmatpush1.msra.mxu0 %v1351
    %2287 = vmatprep.mubr.f32.mxu0 %v1057
    %2288 = vmatmul.mubr.f32.gmra.mrb[0].mxu0 %v1056
    %v2289 = vpop.f32.mrb[0].mxu0
    %v2290 = vadd.f32 %v2220, %v2289
    %v2291 = vpop.f32.mrb[0].mxu0
    %2292 = vdwg.mxu0
    %2293 = vmatprep.subr.mxu0 0.0
    %2294 = vmatpush1.msra.mxu0 %v1354
    %2295 = vmatprep.subr.mxu0 0.0
    %2296 = vmatpush1.msra.mxu0 %v1357
    %2297 = vmatprep.subr.mxu0 0.0
    %2298 = vmatpush1.msra.mxu0 %v1360
    %2299 = vmatprep.subr.mxu0 0.0
    %2300 = vmatpush1.msra.mxu0 %v1363
    %2301 = vmatprep.subr.mxu0 0.0
    %2302 = vmatpush1.msra.mxu0 %v1366
    %2303 = vmatprep.subr.mxu0 0.0
    %2304 = vmatpush1.msra.mxu0 %v1369
    %2305 = vmatprep.subr.mxu0 0.0
    %2306 = vmatpush1.msra.mxu0 %v1372
    %2307 = vmatprep.subr.mxu0 0.0
    %2308 = vmatpush1.msra.mxu0 %v1375
    %2309 = vmatprep.subr.mxu0 0.0
    %2310 = vmatpush1.msra.mxu0 %v1378
    %2311 = vmatprep.subr.mxu0 0.0
    %2312 = vmatpush1.msra.mxu0 %v1381
    %2313 = vmatprep.subr.mxu0 0.0
    %2314 = vmatpush1.msra.mxu0 %v1384
    %2315 = vmatprep.subr.mxu0 0.0
    %2316 = vmatpush1.msra.mxu0 %v1387
    %2317 = vmatprep.subr.mxu0 0.0
    %2318 = vmatpush1.msra.mxu0 %v1390
    %2319 = vmatprep.subr.mxu0 0.0
    %2320 = vmatpush1.msra.mxu0 %v1393
    %2321 = vmatprep.subr.mxu0 0.0
    %2322 = vmatpush1.msra.mxu0 %v1396
    %2323 = vmatprep.subr.mxu0 0.0
    %2324 = vmatpush1.msra.mxu0 %v1399
    %2325 = vmatprep.subr.mxu0 0.0
    %2326 = vmatpush1.msra.mxu0 %v1402
    %2327 = vmatprep.subr.mxu0 0.0
    %2328 = vmatpush1.msra.mxu0 %v1405
    %2329 = vmatprep.subr.mxu0 0.0
    %2330 = vmatpush1.msra.mxu0 %v1408
    %2331 = vmatprep.subr.mxu0 0.0
    %2332 = vmatpush1.msra.mxu0 %v1411
    %2333 = vmatprep.subr.mxu0 0.0
    %2334 = vmatpush1.msra.mxu0 %v1414
    %2335 = vmatprep.subr.mxu0 0.0
    %2336 = vmatpush1.msra.mxu0 %v1417
    %2337 = vmatprep.subr.mxu0 0.0
    %2338 = vmatpush1.msra.mxu0 %v1420
    %2339 = vmatprep.subr.mxu0 0.0
    %2340 = vmatpush1.msra.mxu0 %v1423
    %2341 = vmatprep.subr.mxu0 0.0
    %2342 = vmatpush1.msra.mxu0 %v1426
    %2343 = vmatprep.subr.mxu0 0.0
    %2344 = vmatpush1.msra.mxu0 %v1429
    %2345 = vmatprep.subr.mxu0 0.0
    %2346 = vmatpush1.msra.mxu0 %v1432
    %2347 = vmatprep.subr.mxu0 0.0
    %2348 = vmatpush1.msra.mxu0 %v1435
    %2349 = vmatprep.subr.mxu0 0.0
    %2350 = vmatpush1.msra.mxu0 %v1438
    %2351 = vmatprep.subr.mxu0 0.0
    %2352 = vmatpush1.msra.mxu0 %v1441
    %2353 = vmatprep.subr.mxu0 0.0
    %2354 = vmatpush1.msra.mxu0 %v1444
    %2355 = vmatprep.subr.mxu0 0.0
    %2356 = vmatpush1.msra.mxu0 %v1447
    %2357 = vmatprep.mubr.f32.mxu0 %v1059
    %2358 = vmatmul.mubr.f32.gmra.mrb[0].mxu0 %v1058
    %v2359 = vpop.f32.mrb[0].mxu0
    %v2360 = vadd.f32 %v2290, %v2359
    %v2361 = vpop.f32.mrb[0].mxu0
    %2362 = vdwg.mxu0
    %2363 = vmatprep.subr.mxu0 0.0
    %2364 = vmatpush1.msra.mxu0 %v1450
    %2365 = vmatprep.subr.mxu0 0.0
    %2366 = vmatpush1.msra.mxu0 %v1453
    %2367 = vmatprep.subr.mxu0 0.0
    %2368 = vmatpush1.msra.mxu0 %v1456
    %2369 = vmatprep.subr.mxu0 0.0
    %2370 = vmatpush1.msra.mxu0 %v1459
    %2371 = vmatprep.subr.mxu0 0.0
    %2372 = vmatpush1.msra.mxu0 %v1462
    %2373 = vmatprep.subr.mxu0 0.0
    %2374 = vmatpush1.msra.mxu0 %v1465
    %2375 = vmatprep.subr.mxu0 0.0
    %2376 = vmatpush1.msra.mxu0 %v1468
    %2377 = vmatprep.subr.mxu0 0.0
    %2378 = vmatpush1.msra.mxu0 %v1471
    %2379 = vmatprep.subr.mxu0 0.0
    %2380 = vmatpush1.msra.mxu0 %v1474
    %2381 = vmatprep.subr.mxu0 0.0
    %2382 = vmatpush1.msra.mxu0 %v1477
    %2383 = vmatprep.subr.mxu0 0.0
    %2384 = vmatpush1.msra.mxu0 %v1480
    %2385 = vmatprep.subr.mxu0 0.0
    %2386 = vmatpush1.msra.mxu0 %v1483
    %2387 = vmatprep.subr.mxu0 0.0
    %2388 = vmatpush1.msra.mxu0 %v1486
    %2389 = vmatprep.subr.mxu0 0.0
    %2390 = vmatpush1.msra.mxu0 %v1489
    %2391 = vmatprep.subr.mxu0 0.0
    %2392 = vmatpush1.msra.mxu0 %v1492
    %2393 = vmatprep.subr.mxu0 0.0
    %2394 = vmatpush1.msra.mxu0 %v1495
    %2395 = vmatprep.subr.mxu0 0.0
    %2396 = vmatpush1.msra.mxu0 %v1498
    %2397 = vmatprep.subr.mxu0 0.0
    %2398 = vmatpush1.msra.mxu0 %v1501
    %2399 = vmatprep.subr.mxu0 0.0
    %2400 = vmatpush1.msra.mxu0 %v1504
    %2401 = vmatprep.subr.mxu0 0.0
    %2402 = vmatpush1.msra.mxu0 %v1507
    %2403 = vmatprep.subr.mxu0 0.0
    %2404 = vmatpush1.msra.mxu0 %v1510
    %2405 = vmatprep.subr.mxu0 0.0
    %2406 = vmatpush1.msra.mxu0 %v1513
    %2407 = vmatprep.subr.mxu0 0.0
    %2408 = vmatpush1.msra.mxu0 %v1516
    %2409 = vmatprep.subr.mxu0 0.0
    %2410 = vmatpush1.msra.mxu0 %v1519
    %2411 = vmatprep.subr.mxu0 0.0
    %2412 = vmatpush1.msra.mxu0 %v1522
    %2413 = vmatprep.subr.mxu0 0.0
    %2414 = vmatpush1.msra.mxu0 %v1525
    %2415 = vmatprep.subr.mxu0 0.0
    %2416 = vmatpush1.msra.mxu0 %v1528
    %2417 = vmatprep.subr.mxu0 0.0
    %2418 = vmatpush1.msra.mxu0 %v1531
    %2419 = vmatprep.subr.mxu0 0.0
    %2420 = vmatpush1.msra.mxu0 %v1534
    %2421 = vmatprep.subr.mxu0 0.0
    %2422 = vmatpush1.msra.mxu0 %v1537
    %2423 = vmatprep.subr.mxu0 0.0
    %2424 = vmatpush1.msra.mxu0 %v1540
    %2425 = vmatprep.subr.mxu0 0.0
    %2426 = vmatpush1.msra.mxu0 %v1543
    %2427 = vmatprep.mubr.f32.mxu0 %v1061
    %2428 = vmatmul.mubr.f32.gmra.mrb[0].mxu0 %v1060
    %v2429 = vpop.f32.mrb[0].mxu0
    %v2430 = vadd.f32 %v2360, %v2429
    %v2431 = vpop.f32.mrb[0].mxu0
    %2432 = vdwg.mxu0
    %2433 = vmatprep.subr.mxu0 0.0
    %2434 = vmatpush1.msra.mxu0 %v1546
    %2435 = vmatprep.subr.mxu0 0.0
    %2436 = vmatpush1.msra.mxu0 %v1549
    %2437 = vmatprep.subr.mxu0 0.0
    %2438 = vmatpush1.msra.mxu0 %v1552
    %2439 = vmatprep.subr.mxu0 0.0
    %2440 = vmatpush1.msra.mxu0 %v1555
    %2441 = vmatprep.subr.mxu0 0.0
    %2442 = vmatpush1.msra.mxu0 %v1558
    %2443 = vmatprep.subr.mxu0 0.0
    %2444 = vmatpush1.msra.mxu0 %v1561
    %2445 = vmatprep.subr.mxu0 0.0
    %2446 = vmatpush1.msra.mxu0 %v1564
    %2447 = vmatprep.subr.mxu0 0.0
    %2448 = vmatpush1.msra.mxu0 %v1567
    %2449 = vmatprep.subr.mxu0 0.0
    %2450 = vmatpush1.msra.mxu0 %v1570
    %2451 = vmatprep.subr.mxu0 0.0
    %2452 = vmatpush1.msra.mxu0 %v1573
    %2453 = vmatprep.subr.mxu0 0.0
    %2454 = vmatpush1.msra.mxu0 %v1576
    %2455 = vmatprep.subr.mxu0 0.0
    %2456 = vmatpush1.msra.mxu0 %v1579
    %2457 = vmatprep.subr.mxu0 0.0
    %2458 = vmatpush1.msra.mxu0 %v1582
    %2459 = vmatprep.subr.mxu0 0.0
    %2460 = vmatpush1.msra.mxu0 %v1585
    %2461 = vmatprep.subr.mxu0 0.0
    %2462 = vmatpush1.msra.mxu0 %v1588
    %2463 = vmatprep.subr.mxu0 0.0
    %2464 = vmatpush1.msra.mxu0 %v1591
    %2465 = vmatprep.subr.mxu0 0.0
    %2466 = vmatpush1.msra.mxu0 %v1594
    %2467 = vmatprep.subr.mxu0 0.0
    %2468 = vmatpush1.msra.mxu0 %v1597
    %2469 = vmatprep.subr.mxu0 0.0
    %2470 = vmatpush1.msra.mxu0 %v1600
    %2471 = vmatprep.subr.mxu0 0.0
    %2472 = vmatpush1.msra.mxu0 %v1603
    %2473 = vmatprep.subr.mxu0 0.0
    %2474 = vmatpush1.msra.mxu0 %v1606
    %2475 = vmatprep.subr.mxu0 0.0
    %2476 = vmatpush1.msra.mxu0 %v1609
    %2477 = vmatprep.subr.mxu0 0.0
    %2478 = vmatpush1.msra.mxu0 %v1612
    %2479 = vmatprep.subr.mxu0 0.0
    %2480 = vmatpush1.msra.mxu0 %v1615
    %2481 = vmatprep.subr.mxu0 0.0
    %2482 = vmatpush1.msra.mxu0 %v1618
    %2483 = vmatprep.subr.mxu0 0.0
    %2484 = vmatpush1.msra.mxu0 %v1621
    %2485 = vmatprep.subr.mxu0 0.0
    %2486 = vmatpush1.msra.mxu0 %v1624
    %2487 = vmatprep.subr.mxu0 0.0
    %2488 = vmatpush1.msra.mxu0 %v1627
    %2489 = vmatprep.subr.mxu0 0.0
    %2490 = vmatpush1.msra.mxu0 %v1630
    %2491 = vmatprep.subr.mxu0 0.0
    %2492 = vmatpush1.msra.mxu0 %v1633
    %2493 = vmatprep.subr.mxu0 0.0
    %2494 = vmatpush1.msra.mxu0 %v1636
    %2495 = vmatprep.subr.mxu0 0.0
    %2496 = vmatpush1.msra.mxu0 %v1639
    %2497 = vmatprep.mubr.f32.mxu0 %v1063
    %2498 = vmatmul.mubr.f32.gmra.mrb[0].mxu0 %v1062
    %v2499 = vpop.f32.mrb[0].mxu0
    %v2500 = vadd.f32 %v2430, %v2499
    %v2501 = vpop.f32.mrb[0].mxu0
    %2502 = vdwg.mxu0
    %vm2503 = vcmp.gt.f32.partialorder %v2079, 0.0
    %vm2504 = vcmp.gt.f32.partialorder %v2081, 0.0
    %vm2505 = vcmp.gt.f32.partialorder %v2500, 0.0
    %v2506 = vmin.f32 %v2079, 0.0
    %v2507 = vmin.f32 %v2081, 0.0
    %v2508 = vmin.f32 %v2500, 0.0
    %v2509 = vmul.f32 %v2506, 1.442695
    %v2510 = vpow.pop %v2509
    %v2511 = vmul.f32 %v2507, 1.442695
    %v2512 = vpow.pop %v2511
    %v2513 = vmul.f32 %v2508, 1.442695
    %v2514 = vpow.pop %v2513
    %v2515 = vsub.f32 %v2510, 1.0
    %v2516 = vsub.f32 %v2512, 1.0
    %v2517 = vsub.f32 %v2514, 1.0
    %v2518 = vsel %vm2503, %v2079, %v2515
    %v2519 = vsel %vm2504, %v2081, %v2516
    %v2520 = vsel %vm2505, %v2500, %v2517
    %v2521 = vld [vmem:[%s5] sm:$0xff]
    %v2522 = vld [vmem:[%s5 + $0x8] sm:$0xff]
    %v2523 = vld [vmem:[%s5 + $0x10] sm:$0xff]
    %v2524 = vld [vmem:[%s5 + $0x18] sm:$0xff]
    %v2525 = vld [vmem:[%s5 + $0x20] sm:$0xff]
    %v2526 = vld [vmem:[%s5 + $0x28] sm:$0xff]
    %v2527 = vld [vmem:[%s5 + $0x30] sm:$0xff]
    %v2528 = vld [vmem:[%s5 + $0x38] sm:$0xff]
    %v2529 = vld [vmem:[%s5 + $0x40] sm:$0xff]
    %v2530 = vld [vmem:[%s5 + $0x48] sm:$0xff]
    %v2531 = vld [vmem:[%s5 + $0x50] sm:$0xff]
    %v2532 = vld [vmem:[%s5 + $0x58] sm:$0xff]
    %v2533 = vld [vmem:[%s5 + $0x60] sm:$0xff]
    %v2534 = vld [vmem:[%s5 + $0x68] sm:$0xff]
    %v2535 = vld [vmem:[%s5 + $0x70] sm:$0xff]
    %v2536 = vld [vmem:[%s5 + $0x78] sm:$0xff]
    %v2537 = vld [vmem:[%s5 + $0x80] sm:$0xff]
    %v2538 = vld [vmem:[%s5 + $0x88] sm:$0xff]
    %v2539 = vld [vmem:[%s5 + $0x90] sm:$0xff]
    %v2540 = vld [vmem:[%s5 + $0x98] sm:$0xff]
    %v2541 = vld [vmem:[%s5 + $0xa0] sm:$0xff]
    %v2542 = vld [vmem:[%s5 + $0xa8] sm:$0xff]
    %v2543 = vld [vmem:[%s5 + $0xb0] sm:$0xff]
    %v2544 = vld [vmem:[%s5 + $0xb8] sm:$0xff]
    %v2545 = vld [vmem:[%s5 + $0xc0] sm:$0xff]
    %v2546 = vld [vmem:[%s5 + $0xc8] sm:$0xff]
    %v2547 = vld [vmem:[%s5 + $0xd0] sm:$0xff]
    %v2548 = vld [vmem:[%s5 + $0xd8] sm:$0xff]
    %v2549 = vld [vmem:[%s5 + $0xe0] sm:$0xff]
    %v2550 = vld [vmem:[%s5 + $0xe8] sm:$0xff]
    %v2551 = vld [vmem:[%s5 + $0xf0] sm:$0xff]
    %v2552 = vld [vmem:[%s5 + $0xf8] sm:$0xff]
    %v2553 = vld [vmem:[%s5 + $0x100] sm:$0xff]
    %v2554 = vld [vmem:[%s5 + $0x108] sm:$0xff]
    %v2555 = vld [vmem:[%s5 + $0x110] sm:$0xff]
    %v2556 = vld [vmem:[%s5 + $0x118] sm:$0xff]
    %v2557 = vld [vmem:[%s5 + $0x120] sm:$0xff]
    %v2558 = vld [vmem:[%s5 + $0x128] sm:$0xff]
    %v2559 = vld [vmem:[%s5 + $0x130] sm:$0xff]
    %v2560 = vld [vmem:[%s5 + $0x138] sm:$0xff]
    %v2561 = vld [vmem:[%s5 + $0x140] sm:$0xff]
    %v2562 = vld [vmem:[%s5 + $0x148] sm:$0xff]
    %v2563 = vld [vmem:[%s5 + $0x150] sm:$0xff]
    %v2564 = vld [vmem:[%s5 + $0x158] sm:$0xff]
    %v2565 = vld [vmem:[%s5 + $0x160] sm:$0xff]
    %v2566 = vld [vmem:[%s5 + $0x168] sm:$0xff]
    %v2567 = vld [vmem:[%s5 + $0x170] sm:$0xff]
    %v2568 = vld [vmem:[%s5 + $0x178] sm:$0xff]
    %v2569 = vld [vmem:[#allocation9] sm:$0x1]
    %v2571 = vlaneseq
    %v2572 = vshrl.u32 %v2571, 7
    %v2573 = vsub.s32 0, %v2572
    %v2574 = vrot.slane %v2569, %v2573
    %2576 = vmatprep.subr.mxu0 0.0
    %2577 = vmatpush1.msra.mxu0 %v2521
    %2578 = vmatprep.subr.mxu0 0.0
    %2579 = vmatpush1.msra.mxu0 %v2522
    %2580 = vmatprep.subr.mxu0 0.0
    %2581 = vmatpush1.msra.mxu0 %v2523
    %2582 = vmatprep.subr.mxu0 0.0
    %2583 = vmatpush1.msra.mxu0 %v2524
    %2584 = vmatprep.subr.mxu0 0.0
    %2585 = vmatpush1.msra.mxu0 %v2525
    %2586 = vmatprep.subr.mxu0 0.0
    %2587 = vmatpush1.msra.mxu0 %v2526
    %2588 = vmatprep.subr.mxu0 0.0
    %2589 = vmatpush1.msra.mxu0 %v2527
    %2590 = vmatprep.subr.mxu0 0.0
    %2591 = vmatpush1.msra.mxu0 %v2528
    %2592 = vmatprep.subr.mxu0 0.0
    %2593 = vmatpush1.msra.mxu0 %v2529
    %2594 = vmatprep.subr.mxu0 0.0
    %2595 = vmatpush1.msra.mxu0 %v2530
    %2596 = vmatprep.subr.mxu0 0.0
    %2597 = vmatpush1.msra.mxu0 %v2531
    %2598 = vmatprep.subr.mxu0 0.0
    %2599 = vmatpush1.msra.mxu0 %v2532
    %2600 = vmatprep.subr.mxu0 0.0
    %2601 = vmatpush1.msra.mxu0 %v2533
    %2602 = vmatprep.subr.mxu0 0.0
    %2603 = vmatpush1.msra.mxu0 %v2534
    %2604 = vmatprep.subr.mxu0 0.0
    %2605 = vmatpush1.msra.mxu0 %v2535
    %2606 = vmatprep.subr.mxu0 0.0
    %2607 = vmatpush1.msra.mxu0 %v2536
    %2608 = vmatprep.subr.mxu0 0.0
    %2609 = vmatpush1.msra.mxu0 %v2537
    %2610 = vmatprep.subr.mxu0 0.0
    %2611 = vmatpush1.msra.mxu0 %v2538
    %2612 = vmatprep.subr.mxu0 0.0
    %2613 = vmatpush1.msra.mxu0 %v2539
    %2614 = vmatprep.subr.mxu0 0.0
    %2615 = vmatpush1.msra.mxu0 %v2540
    %2616 = vmatprep.subr.mxu0 0.0
    %2617 = vmatpush1.msra.mxu0 %v2541
    %2618 = vmatprep.subr.mxu0 0.0
    %2619 = vmatpush1.msra.mxu0 %v2542
    %2620 = vmatprep.subr.mxu0 0.0
    %2621 = vmatpush1.msra.mxu0 %v2543
    %2622 = vmatprep.subr.mxu0 0.0
    %2623 = vmatpush1.msra.mxu0 %v2544
    %2624 = vmatprep.subr.mxu0 0.0
    %2625 = vmatpush1.msra.mxu0 %v2545
    %2626 = vmatprep.subr.mxu0 0.0
    %2627 = vmatpush1.msra.mxu0 %v2546
    %2628 = vmatprep.subr.mxu0 0.0
    %2629 = vmatpush1.msra.mxu0 %v2547
    %2630 = vmatprep.subr.mxu0 0.0
    %2631 = vmatpush1.msra.mxu0 %v2548
    %2632 = vmatprep.subr.mxu0 0.0
    %2633 = vmatpush1.msra.mxu0 %v2549
    %2634 = vmatprep.subr.mxu0 0.0
    %2635 = vmatpush1.msra.mxu0 %v2550
    %2636 = vmatprep.subr.mxu0 0.0
    %2637 = vmatpush1.msra.mxu0 %v2551
    %2638 = vmatprep.subr.mxu0 0.0
    %2639 = vmatpush1.msra.mxu0 %v2552
    %2640 = vmatprep.mubr.f32.mxu0 %v2519
    %2641 = vmatmul.mubr.f32.gmra.mrb[0].mxu0 %v2518
    %v2642 = vpop.f32.mrb[0].mxu0
    %v2643 = vadd.f32 %v2574, %v2642
    %v2644 = vpop.f32.mrb[0].mxu0
    %2645 = vdwg.mxu0
    %2646 = vmatprep.subr.mxu0 0.0
    %2647 = vmatpush1.msra.mxu0 %v2553
    %2648 = vmatprep.subr.mxu0 0.0
    %2649 = vmatpush1.msra.mxu0 %v2554
    %2650 = vmatprep.subr.mxu0 0.0
    %2651 = vmatpush1.msra.mxu0 %v2555
    %2652 = vmatprep.subr.mxu0 0.0
    %2653 = vmatpush1.msra.mxu0 %v2556
    %2654 = vmatprep.subr.mxu0 0.0
    %2655 = vmatpush1.msra.mxu0 %v2557
    %2656 = vmatprep.subr.mxu0 0.0
    %2657 = vmatpush1.msra.mxu0 %v2558
    %2658 = vmatprep.subr.mxu0 0.0
    %2659 = vmatpush1.msra.mxu0 %v2559
    %2660 = vmatprep.subr.mxu0 0.0
    %2661 = vmatpush1.msra.mxu0 %v2560
    %2662 = vmatprep.subr.mxu0 0.0
    %2663 = vmatpush1.msra.mxu0 %v2561
    %2664 = vmatprep.subr.mxu0 0.0
    %2665 = vmatpush1.msra.mxu0 %v2562
    %2666 = vmatprep.subr.mxu0 0.0
    %2667 = vmatpush1.msra.mxu0 %v2563
    %2668 = vmatprep.subr.mxu0 0.0
    %2669 = vmatpush1.msra.mxu0 %v2564
    %2670 = vmatprep.subr.mxu0 0.0
    %2671 = vmatpush1.msra.mxu0 %v2565
    %2672 = vmatprep.subr.mxu0 0.0
    %2673 = vmatpush1.msra.mxu0 %v2566
    %2674 = vmatprep.subr.mxu0 0.0
    %2675 = vmatpush1.msra.mxu0 %v2567
    %2676 = vmatprep.subr.mxu0 0.0
    %2677 = vmatpush1.msra.mxu0 %v2568
    %2678 = vmatprep.subr.mxu0 0.0
    %2679 = vmatpush1.msra.mxu0 0.0
    %2680 = vmatprep.subr.mxu0 0.0
    %2681 = vmatpush1.msra.mxu0 0.0
    %2682 = vmatprep.subr.mxu0 0.0
    %2683 = vmatpush1.msra.mxu0 0.0
    %2684 = vmatprep.subr.mxu0 0.0
    %2685 = vmatpush1.msra.mxu0 0.0
    %2686 = vmatprep.subr.mxu0 0.0
    %2687 = vmatpush1.msra.mxu0 0.0
    %2688 = vmatprep.subr.mxu0 0.0
    %2689 = vmatpush1.msra.mxu0 0.0
    %2690 = vmatprep.subr.mxu0 0.0
    %2691 = vmatpush1.msra.mxu0 0.0
    %2692 = vmatprep.subr.mxu0 0.0
    %2693 = vmatpush1.msra.mxu0 0.0
    %2694 = vmatprep.subr.mxu0 0.0
    %2695 = vmatpush1.msra.mxu0 0.0
    %2696 = vmatprep.subr.mxu0 0.0
    %2697 = vmatpush1.msra.mxu0 0.0
    %2698 = vmatprep.subr.mxu0 0.0
    %2699 = vmatpush1.msra.mxu0 0.0
    %2700 = vmatprep.subr.mxu0 0.0
    %2701 = vmatpush1.msra.mxu0 0.0
    %2702 = vmatprep.subr.mxu0 0.0
    %2703 = vmatpush1.msra.mxu0 0.0
    %2704 = vmatprep.subr.mxu0 0.0
    %2705 = vmatpush1.msra.mxu0 0.0
    %2706 = vmatprep.subr.mxu0 0.0
    %2707 = vmatpush1.msra.mxu0 0.0
    %2708 = vmatprep.subr.mxu0 0.0
    %2709 = vmatpush1.msra.mxu0 0.0
    %2710 = vmatprep.mubr.f32.mxu0 0.0
    %2711 = vmatmul.mubr.f32.gmra.mrb[0].mxu0 %v2520
    %v2712 = vpop.f32.mrb[0].mxu0
    %v2713 = vadd.f32 %v2643, %v2712
    %v2714 = vpop.f32.mrb[0].mxu0
    %2715 = vdwg.mxu0
    %vm2716 = vcmp.gt.f32.partialorder %v2713, 0.0
    %v2717 = vmul.f32 %v2713, 0.01
    %v2718 = vsel %vm2716, %v2713, %v2717
    %v2719 = vld [vmem:[%s7] sm:$0xff]
    %v2720 = vld [vmem:[%s7 + $0x8] sm:$0xff]
    %v2721 = vld [vmem:[#allocation10] sm:$0x1]
    %v2723 = vlaneseq
    %v2724 = vshrl.u32 %v2723, 7
    %v2725 = vsub.s32 0, %v2724
    %v2726 = vrot.slane %v2721, %v2725
    %vm2728 = vcmask 130048
    %v2730 = vsel %vm2728, %v2718, 0
    %2732 = vmatprep.subr.mxu0 0.0
    %2733 = vmatpush1.msra.mxu0 %v2719
    %2734 = vmatprep.subr.mxu0 0.0
    %2735 = vmatpush1.msra.mxu0 %v2720
    %2736 = vmatprep.subr.mxu0 0.0
    %2737 = vmatpush1.msra.mxu0 0.0
    %2738 = vmatprep.subr.mxu0 0.0
    %2739 = vmatpush1.msra.mxu0 0.0
    %2740 = vmatprep.subr.mxu0 0.0
    %2741 = vmatpush1.msra.mxu0 0.0
    %2742 = vmatprep.subr.mxu0 0.0
    %2743 = vmatpush1.msra.mxu0 0.0
    %2744 = vmatprep.subr.mxu0 0.0
    %2745 = vmatpush1.msra.mxu0 0.0
    %2746 = vmatprep.subr.mxu0 0.0
    %2747 = vmatpush1.msra.mxu0 0.0
    %2748 = vmatprep.subr.mxu0 0.0
    %2749 = vmatpush1.msra.mxu0 0.0
    %2750 = vmatprep.subr.mxu0 0.0
    %2751 = vmatpush1.msra.mxu0 0.0
    %2752 = vmatprep.subr.mxu0 0.0
    %2753 = vmatpush1.msra.mxu0 0.0
    %2754 = vmatprep.subr.mxu0 0.0
    %2755 = vmatpush1.msra.mxu0 0.0
    %2756 = vmatprep.subr.mxu0 0.0
    %2757 = vmatpush1.msra.mxu0 0.0
    %2758 = vmatprep.subr.mxu0 0.0
    %2759 = vmatpush1.msra.mxu0 0.0
    %2760 = vmatprep.subr.mxu0 0.0
    %2761 = vmatpush1.msra.mxu0 0.0
    %2762 = vmatprep.subr.mxu0 0.0
    %2763 = vmatpush1.msra.mxu0 0.0
    %2764 = vmatprep.subr.mxu0 0.0
    %2765 = vmatpush1.msra.mxu0 0.0
    %2766 = vmatprep.subr.mxu0 0.0
    %2767 = vmatpush1.msra.mxu0 0.0
    %2768 = vmatprep.subr.mxu0 0.0
    %2769 = vmatpush1.msra.mxu0 0.0
    %2770 = vmatprep.subr.mxu0 0.0
    %2771 = vmatpush1.msra.mxu0 0.0
    %2772 = vmatprep.subr.mxu0 0.0
    %2773 = vmatpush1.msra.mxu0 0.0
    %2774 = vmatprep.subr.mxu0 0.0
    %2775 = vmatpush1.msra.mxu0 0.0
    %2776 = vmatprep.subr.mxu0 0.0
    %2777 = vmatpush1.msra.mxu0 0.0
    %2778 = vmatprep.subr.mxu0 0.0
    %2779 = vmatpush1.msra.mxu0 0.0
    %2780 = vmatprep.subr.mxu0 0.0
    %2781 = vmatpush1.msra.mxu0 0.0
    %2782 = vmatprep.subr.mxu0 0.0
    %2783 = vmatpush1.msra.mxu0 0.0
    %2784 = vmatprep.subr.mxu0 0.0
    %2785 = vmatpush1.msra.mxu0 0.0
    %2786 = vmatprep.subr.mxu0 0.0
    %2787 = vmatpush1.msra.mxu0 0.0
    %2788 = vmatprep.subr.mxu0 0.0
    %2789 = vmatpush1.msra.mxu0 0.0
    %2790 = vmatprep.subr.mxu0 0.0
    %2791 = vmatpush1.msra.mxu0 0.0
    %2792 = vmatprep.subr.mxu0 0.0
    %2793 = vmatpush1.msra.mxu0 0.0
    %2794 = vmatprep.subr.mxu0 0.0
    %2795 = vmatpush1.msra.mxu0 0.0
    %2796 = vmatprep.mubr.f32.mxu0 0.0
    %2797 = vmatmul.mubr.f32.gmra.mrb[0].mxu0 %v2730
    %v2798 = vpop.f32.mrb[0].mxu0
    %v2799 = vadd.f32 %v2726, %v2798
    %v2800 = vpop.f32.mrb[0].mxu0
    %2801 = vdwg.mxu0
    %vm2802 = vcmask 17408
    %v2803 = vsel %vm2802, %v2799, -inf
    %2804 = vmax.xlane.f32.xlu0 %v2803
    %v2805 = vpop.xlane.xlu0 %2804
    %v2806 = vsub.f32 %v2799, %v2805
    %v2807 = vmul.f32 %v2806, 1.442695
    %v2808 = vpow.pop %v2807
    %v2809 = vsel %vm2802, %v2808, 0.0
    %2810 = vadd.xlane.f32.xlu0 %v2809
    %v2811 = vpop.xlane.xlu0 %2810
    %v2812 = vrcp.pop %v2811
    %v2813 = vmul.f32 %v2808, %v2812
    %2814 = vst [vmem:[%s9] sm:$0xff] 0.0
    %vm2815 = vcmask 123904
    %2816 = vst.msk [vmem:[%s9] sm:$0x3] %vm2815, %v2718
    %2817 = vst.msk [vmem:[%s9 + $0x2] sm:$0x3] %vm2802, %v2813
    // Predicated region
    $region62: #{eegnet_forward.1} parent=1 // pred_check
      _
    $region63: #{eegnet_forward.1} parent=1 // pred_check_branch
      %2819 = sbr.rel (0) target = $region65
    $region64: #{eegnet_forward.1} parent=1 // pred_region
      _
    $region65: #{eegnet_forward.1} parent=1 // pred_fallthru
      _
    // Predicated region
    $region66: #{eegnet_forward.1} parent=1 // pred_check
      _
    $region67: #{eegnet_forward.1} parent=1 // pred_check_branch
      %2821 = sbr.rel (0) target = $region69
    $region68: #{eegnet_forward.1} parent=1 // pred_region
      _
    $region69: #{eegnet_forward.1} parent=1 // pred_fallthru
      _
    %2822 = vsyncpa [#allocation3], 1
    %2823 = vsyncpa [#allocation5], 1
    %2824 = vsyncpa [#allocation8], 1
    %2825 = vsyncpa [#allocation11], 1

</llo_original>
